<compile_context>
chip_gen: v5e
topology: v5e:2x2
jax: 0.10.0
libtpu: 0.0.40
codegen_flags: <defaults>
</compile_context>

<pallas_src>
import jax
import jax.numpy as jnp
from jax.experimental import pallas as pl
from jax.experimental.pallas import tpu as pltpu

NUM_NODES = 111                                  # nodes per graph (hardcoded in module)
NUM_GRAPHS = 2
HIDDEN = 3 * (NUM_NODES + 64 + 32 + 16)          # 669 = BatchNorm / FC1 input width
NUM_FEATURES = HIDDEN - (64 + 32 + 16)           # 557 so that cat(aggregated) == 669
BN_EPS = 1e-5

# ---- padded (8,128)-aligned sizes used by the fused kernel -----------------
N_P = 256                      # nodes      222 -> 256
F_P = 640                      # features   557 -> 640
H_P = 128                      # GCN widths 64/32/16 -> 128
B_P = 8                        # graphs     2 -> 8
AGG_P = F_P + 3 * H_P          # 1024       (true concat width 669)
OUT_P = 128                    # FC lanes   64 / 1 -> 128


# ----------------------------- fused Pallas kernel --------------------------

def fused_gcn_kernel(a_ref, x_ref, w1_ref, b1_ref, w2_ref, b2_ref, w3_ref, b3_ref,
                     pool_ref, scale_ref, shift_ref,
                     fc1w_ref, fc1b_ref, fc2w_ref, fc2b_ref, o_ref):
    a_bf = a_ref[...]                      # bf16 [N_P, N_P] normalized adjacency
    x_f32 = x_ref[...]                     # f32  [N_P, F_P]
    pool = pool_ref[...]                   # f32  [B_P, N_P] mean-pool matrix

    def gcn(h_in_bf, w_ref, b_ref):
        # relu( A_hat @ (H @ W) + b ), bf16 MXU inputs, f32 accumulation
        t = jnp.dot(h_in_bf, w_ref[...], preferred_element_type=jnp.float32)
        t = jnp.dot(a_bf, t.astype(jnp.bfloat16), preferred_element_type=jnp.float32)
        return jnp.maximum(t + b_ref[...], 0.0)          # f32 [N_P, H_P]

    h1 = gcn(x_f32.astype(jnp.bfloat16), w1_ref, b1_ref)      # conv1 + relu
    ph1 = jnp.dot(pool, h1, preferred_element_type=jnp.float32)
    h2 = gcn(h1.astype(jnp.bfloat16), w2_ref, b2_ref)          # conv2 + relu
    ph2 = jnp.dot(pool, h2, preferred_element_type=jnp.float32)
    h3 = gcn(h2.astype(jnp.bfloat16), w3_ref, b3_ref)          # conv3 + relu
    ph3 = jnp.dot(pool, h3, preferred_element_type=jnp.float32)
    px = jnp.dot(pool, x_f32, preferred_element_type=jnp.float32)

    # padded concat: segments sit at 128-aligned lane offsets 0/640/768/896
    agg = jnp.concatenate([px, ph1, ph2, ph3], axis=1)         # f32 [B_P, AGG_P]

    # eval-mode BatchNorm (folded) -> FC1 -> relu -> FC2 -> sigmoid
    z = agg * scale_ref[...] + shift_ref[...]
    z = jnp.dot(z.astype(jnp.bfloat16), fc1w_ref[...],
                preferred_element_type=jnp.float32) + fc1b_ref[...]
    z = jnp.maximum(z, 0.0)
    z = jnp.dot(z.astype(jnp.bfloat16), fc2w_ref[...],
                preferred_element_type=jnp.float32) + fc2b_ref[...]
    o_ref[...] = 0.5 * (jnp.tanh(0.5 * z) + 1.0)               # sigmoid via EUP tanh


def _full_spec(shape):
    n = len(shape)
    return pl.BlockSpec(shape, lambda i: (0,) * n)


def fused_forward(a_p, x_p, w1, b1, w2, b2, w3, b3,
                  pool_p, scale_p, shift_p, fc1w, fc1b, fc2w, fc2b):
    args = (a_p, x_p, w1, b1, w2, b2, w3, b3,
            pool_p, scale_p, shift_p, fc1w, fc1b, fc2w, fc2b)
    out_shape = (B_P, OUT_P)
    return pl.pallas_call(
        fused_gcn_kernel,
        out_shape=jax.ShapeDtypeStruct(out_shape, jnp.float32),
        grid=(1,),
        in_specs=[_full_spec(a.shape) for a in args],
        out_specs=_full_spec(out_shape),
        compiler_params=pltpu.CompilerParams(dimension_semantics=("arbitrary",)),
    )(*args)


# ------------------------------- glue (JAX) ---------------------------------
# One-time topology / parameter setup (no clean Pallas equivalent for the
# data-dependent scatter; deliberately kept outside the hot path).

def pad_to(x, shape):
    return jnp.pad(x, [(0, t - s) for s, t in zip(x.shape, shape)])


def build_gcn_adj(edge_index, num_nodes):
    """Dense D^{-1/2}(A + I)D^{-1/2}, A[dst, src] (PyG source_to_target flow)."""
    src, dst = edge_index[0], edge_index[1]
    a = jnp.zeros((num_nodes, num_nodes), jnp.float32).at[dst, src].add(1.0)
    a = a + jnp.eye(num_nodes, dtype=jnp.float32)            # add self loops
    deg = a.sum(axis=1)
    dinv = jnp.where(deg > 0.0, jax.lax.rsqrt(deg), 0.0)
    return dinv[:, None] * a * dinv[None, :]


def pooling_matrix(batch, num_graphs):
    onehot = (batch[None, :] == jnp.arange(num_graphs)[:, None]).astype(jnp.float32)
    counts = jnp.maximum(onehot.sum(axis=1, keepdims=True), 1.0)
    return onehot / counts                                   # mean aggregation


def xavier_uniform(key, fan_in, fan_out):
    bound = (6.0 / (fan_in + fan_out)) ** 0.5
    return jax.random.uniform(key, (fan_in, fan_out), jnp.float32, -bound, bound)


def init_params(key):
    ks = jax.random.split(key, 5)
    return {
        "w1": xavier_uniform(ks[0], NUM_FEATURES, 64), "b1": jnp.zeros((1, 64), jnp.float32),
        "w2": xavier_uniform(ks[1], 64, 32),           "b2": jnp.zeros((1, 32), jnp.float32),
        "w3": xavier_uniform(ks[2], 32, 16),           "b3": jnp.zeros((1, 16), jnp.float32),
        "fc1_w": xavier_uniform(ks[3], HIDDEN, 64),    "fc1_b": jnp.zeros((1, 64), jnp.float32),
        "fc2_w": xavier_uniform(ks[4], 64, 1),         "fc2_b": jnp.zeros((1, 1), jnp.float32),
        "bn_gamma": jnp.ones((HIDDEN,), jnp.float32),
        "bn_beta": jnp.zeros((HIDDEN,), jnp.float32),
        "bn_mean": jnp.zeros((HIDDEN,), jnp.float32),
        "bn_var": jnp.ones((HIDDEN,), jnp.float32),
    }


def prepare_static(params, edge_index, batch, num_nodes_total):
    """Pad / pre-cast everything that depends only on params & graph topology."""
    a_p = pad_to(build_gcn_adj(edge_index, num_nodes_total), (N_P, N_P)).astype(jnp.bfloat16)
    pool_p = pad_to(pooling_matrix(batch, NUM_GRAPHS), (B_P, N_P))

    # fold eval-mode BatchNorm into scale/shift
    scale = params["bn_gamma"] / jnp.sqrt(params["bn_var"] + BN_EPS)
    shift = params["bn_beta"] - params["bn_mean"] * scale

    # re-scatter the 669-wide BN vectors and FC1 rows into the padded, 128-aligned
    # aggregate layout: [x: 0..556] [h1: 640..703] [h2: 768..799] [h3: 896..911]
    seg_src = ((0, NUM_FEATURES), (NUM_FEATURES, 64),
               (NUM_FEATURES + 64, 32), (NUM_FEATURES + 96, 16))
    seg_dst = (0, F_P, F_P + H_P, F_P + 2 * H_P)
    scale_p = jnp.zeros((1, AGG_P), jnp.float32)
    shift_p = jnp.zeros((1, AGG_P), jnp.float32)
    fc1w_p = jnp.zeros((AGG_P, OUT_P), jnp.float32)
    for (s0, w), d0 in zip(seg_src, seg_dst):
        scale_p = scale_p.at[0, d0:d0 + w].set(scale[s0:s0 + w])
        shift_p = shift_p.at[0, d0:d0 + w].set(shift[s0:s0 + w])
        fc1w_p = fc1w_p.at[d0:d0 + w, :64].set(params["fc1_w"][s0:s0 + w, :])

    return {
        "a": a_p,
        "pool": pool_p,
        "scale": scale_p,
        "shift": shift_p,
        "w1": pad_to(params["w1"], (F_P, H_P)).astype(jnp.bfloat16),
        "b1": pad_to(params["b1"], (1, H_P)),
        "w2": pad_to(params["w2"], (H_P, H_P)).astype(jnp.bfloat16),
        "b2": pad_to(params["b2"], (1, H_P)),
        "w3": pad_to(params["w3"], (H_P, H_P)).astype(jnp.bfloat16),
        "b3": pad_to(params["b3"], (1, H_P)),
        "fc1_w": fc1w_p.astype(jnp.bfloat16),
        "fc1_b": pad_to(params["fc1_b"], (1, OUT_P)),
        "fc2_w": pad_to(params["fc2_w"], (H_P, OUT_P)).astype(jnp.bfloat16),
        "fc2_b": pad_to(params["fc2_b"], (1, OUT_P)),
    }


def gcn_model_forward(static, x):
    x_p = pad_to(x, (N_P, F_P))                              # zero-pad node features
    out_p = fused_forward(
        static["a"], x_p,
        static["w1"], static["b1"], static["w2"], static["b2"],
        static["w3"], static["b3"],
        static["pool"], static["scale"], static["shift"],
        static["fc1_w"], static["fc1_b"], static["fc2_w"], static["fc2_b"])
    return out_p[:NUM_GRAPHS, :1]                            # drop padded rows / lanes


# ---------------------------------- main ------------------------------------

if __name__ == "__main__":
    key = jax.random.PRNGKey(0)
    k_param, k_x, k_e = jax.random.split(key, 3)

    n_total = NUM_GRAPHS * NUM_NODES                         # 222 nodes
    x = jax.random.normal(k_x, (n_total, NUM_FEATURES), jnp.float32)

    # random undirected edges (deterministic)
    n_edges = 400
    ks, kd = jax.random.split(k_e)
    src = jax.random.randint(ks, (n_edges,), 0, n_total)
    dst = jax.random.randint(kd, (n_edges,), 0, n_total)
    edge_index = jnp.stack([jnp.concatenate([src, dst]),
                            jnp.concatenate([dst, src])], axis=0).astype(jnp.int32)

    batch = jnp.repeat(jnp.arange(NUM_GRAPHS, dtype=jnp.int32), NUM_NODES)

    params = init_params(k_param)

    # one-time setup (graph topology + parameters are static across forwards)
    static = jax.tree_util.tree_map(jax.block_until_ready,
                                    prepare_static(params, edge_index, batch, n_total))

    forward = jax.jit(gcn_model_forward)
    out = forward(static, x)
    out = jax.block_until_ready(out)

    assert out.shape == (NUM_GRAPHS, 1)
    assert bool(jnp.all((out >= 0.0) & (out <= 1.0)))
    print("KERNEL_OK")
</pallas_src>

<mosaic_0001>
module attributes {stable_mosaic.version = 11 : i64} {
  func.func @fused_gcn_kernel(%arg0: i32, %arg1: memref<256x256xbf16, #tpu.memory_space<vmem>>, %arg2: memref<256x640xf32, #tpu.memory_space<vmem>>, %arg3: memref<640x128xbf16, #tpu.memory_space<vmem>>, %arg4: memref<1x128xf32, #tpu.memory_space<vmem>>, %arg5: memref<128x128xbf16, #tpu.memory_space<vmem>>, %arg6: memref<1x128xf32, #tpu.memory_space<vmem>>, %arg7: memref<128x128xbf16, #tpu.memory_space<vmem>>, %arg8: memref<1x128xf32, #tpu.memory_space<vmem>>, %arg9: memref<8x256xf32, #tpu.memory_space<vmem>>, %arg10: memref<1x1024xf32, #tpu.memory_space<vmem>>, %arg11: memref<1x1024xf32, #tpu.memory_space<vmem>>, %arg12: memref<1024x128xbf16, #tpu.memory_space<vmem>>, %arg13: memref<1x128xf32, #tpu.memory_space<vmem>>, %arg14: memref<128x128xbf16, #tpu.memory_space<vmem>>, %arg15: memref<1x128xf32, #tpu.memory_space<vmem>>, %arg16: memref<8x128xf32, #tpu.memory_space<vmem>>) attributes {dimension_semantics = [#tpu.dimension_semantics<arbitrary>], iteration_bounds = array<i64: 1>, scalar_prefetch = 0 : i64, scratch_operands = 0 : i64, tpu.core_type = #tpu.core_type<tc>, window_params = [{pipeline_mode = #tpu.pipeline_mode<synchronous>, transform_indices = @transform_0, window_bounds = array<i64: 256, 256>}, {pipeline_mode = #tpu.pipeline_mode<synchronous>, transform_indices = @transform_1, window_bounds = array<i64: 256, 640>}, {pipeline_mode = #tpu.pipeline_mode<synchronous>, transform_indices = @transform_2, window_bounds = array<i64: 640, 128>}, {pipeline_mode = #tpu.pipeline_mode<synchronous>, transform_indices = @transform_3, window_bounds = array<i64: 1, 128>}, {pipeline_mode = #tpu.pipeline_mode<synchronous>, transform_indices = @transform_4, window_bounds = array<i64: 128, 128>}, {pipeline_mode = #tpu.pipeline_mode<synchronous>, transform_indices = @transform_5, window_bounds = array<i64: 1, 128>}, {pipeline_mode = #tpu.pipeline_mode<synchronous>, transform_indices = @transform_6, window_bounds = array<i64: 128, 128>}, {pipeline_mode = #tpu.pipeline_mode<synchronous>, transform_indices = @transform_7, window_bounds = array<i64: 1, 128>}, {pipeline_mode = #tpu.pipeline_mode<synchronous>, transform_indices = @transform_8, window_bounds = array<i64: 8, 256>}, {pipeline_mode = #tpu.pipeline_mode<synchronous>, transform_indices = @transform_9, window_bounds = array<i64: 1, 1024>}, {pipeline_mode = #tpu.pipeline_mode<synchronous>, transform_indices = @transform_10, window_bounds = array<i64: 1, 1024>}, {pipeline_mode = #tpu.pipeline_mode<synchronous>, transform_indices = @transform_11, window_bounds = array<i64: 1024, 128>}, {pipeline_mode = #tpu.pipeline_mode<synchronous>, transform_indices = @transform_12, window_bounds = array<i64: 1, 128>}, {pipeline_mode = #tpu.pipeline_mode<synchronous>, transform_indices = @transform_13, window_bounds = array<i64: 128, 128>}, {pipeline_mode = #tpu.pipeline_mode<synchronous>, transform_indices = @transform_14, window_bounds = array<i64: 1, 128>}, {pipeline_mode = #tpu.pipeline_mode<synchronous>, transform_indices = @transform_15, window_bounds = array<i64: 8, 128>}]} {
    %c0 = arith.constant 0 : index
    %c0_0 = arith.constant 0 : index
    %0 = vector.load %arg1[%c0, %c0_0] : memref<256x256xbf16, #tpu.memory_space<vmem>>, vector<256x256xbf16>
    %c0_1 = arith.constant 0 : index
    %c0_2 = arith.constant 0 : index
    %1 = vector.load %arg2[%c0_1, %c0_2] : memref<256x640xf32, #tpu.memory_space<vmem>>, vector<256x640xf32>
    %c0_3 = arith.constant 0 : index
    %c0_4 = arith.constant 0 : index
    %2 = vector.load %arg9[%c0_3, %c0_4] : memref<8x256xf32, #tpu.memory_space<vmem>>, vector<8x256xf32>
    %3 = arith.truncf %1 : vector<256x640xf32> to vector<256x640xbf16>
    %c0_5 = arith.constant 0 : index
    %c0_6 = arith.constant 0 : index
    %4 = vector.load %arg3[%c0_5, %c0_6] : memref<640x128xbf16, #tpu.memory_space<vmem>>, vector<640x128xbf16>
    %cst = arith.constant dense<0.000000e+00> : vector<256x128xf32>
    %5 = tpu.matmul %3, %4, %cst {dimension_numbers = #tpu.dot_dimension_numbers<[1], [0], [0], [1], [0, 0, 1, 1], [], []>} : vector<256x640xbf16>, vector<640x128xbf16>, vector<256x128xf32> -> vector<256x128xf32>
    %6 = arith.truncf %5 : vector<256x128xf32> to vector<256x128xbf16>
    %cst_7 = arith.constant dense<0.000000e+00> : vector<256x128xf32>
    %7 = tpu.matmul %0, %6, %cst_7 {dimension_numbers = #tpu.dot_dimension_numbers<[1], [0], [0], [1], [0, 0, 1, 1], [], []>} : vector<256x256xbf16>, vector<256x128xbf16>, vector<256x128xf32> -> vector<256x128xf32>
    %c0_8 = arith.constant 0 : index
    %c0_9 = arith.constant 0 : index
    %8 = vector.load %arg4[%c0_8, %c0_9] : memref<1x128xf32, #tpu.memory_space<vmem>>, vector<1x128xf32>
    %9 = vector.broadcast %8 : vector<1x128xf32> to vector<256x128xf32>
    %10 = arith.addf %7, %9 : vector<256x128xf32>
    %cst_10 = arith.constant 0.000000e+00 : f32
    %11 = vector.broadcast %cst_10 : f32 to vector<256x128xf32>
    %12 = arith.maximumf %10, %11 : vector<256x128xf32>
    %cst_11 = arith.constant dense<0.000000e+00> : vector<8x128xf32>
    %13 = tpu.matmul %2, %12, %cst_11 {dimension_numbers = #tpu.dot_dimension_numbers<[1], [0], [0], [1], [0, 0, 1, 1], [], []>} : vector<8x256xf32>, vector<256x128xf32>, vector<8x128xf32> -> vector<8x128xf32>
    %14 = arith.truncf %12 : vector<256x128xf32> to vector<256x128xbf16>
    %c0_12 = arith.constant 0 : index
    %c0_13 = arith.constant 0 : index
    %15 = vector.load %arg5[%c0_12, %c0_13] : memref<128x128xbf16, #tpu.memory_space<vmem>>, vector<128x128xbf16>
    %cst_14 = arith.constant dense<0.000000e+00> : vector<256x128xf32>
    %16 = tpu.matmul %14, %15, %cst_14 {dimension_numbers = #tpu.dot_dimension_numbers<[1], [0], [0], [1], [0, 0, 1, 1], [], []>} : vector<256x128xbf16>, vector<128x128xbf16>, vector<256x128xf32> -> vector<256x128xf32>
    %17 = arith.truncf %16 : vector<256x128xf32> to vector<256x128xbf16>
    %cst_15 = arith.constant dense<0.000000e+00> : vector<256x128xf32>
    %18 = tpu.matmul %0, %17, %cst_15 {dimension_numbers = #tpu.dot_dimension_numbers<[1], [0], [0], [1], [0, 0, 1, 1], [], []>} : vector<256x256xbf16>, vector<256x128xbf16>, vector<256x128xf32> -> vector<256x128xf32>
    %c0_16 = arith.constant 0 : index
    %c0_17 = arith.constant 0 : index
    %19 = vector.load %arg6[%c0_16, %c0_17] : memref<1x128xf32, #tpu.memory_space<vmem>>, vector<1x128xf32>
    %20 = vector.broadcast %19 : vector<1x128xf32> to vector<256x128xf32>
    %21 = arith.addf %18, %20 : vector<256x128xf32>
    %cst_18 = arith.constant 0.000000e+00 : f32
    %22 = vector.broadcast %cst_18 : f32 to vector<256x128xf32>
    %23 = arith.maximumf %21, %22 : vector<256x128xf32>
    %cst_19 = arith.constant dense<0.000000e+00> : vector<8x128xf32>
    %24 = tpu.matmul %2, %23, %cst_19 {dimension_numbers = #tpu.dot_dimension_numbers<[1], [0], [0], [1], [0, 0, 1, 1], [], []>} : vector<8x256xf32>, vector<256x128xf32>, vector<8x128xf32> -> vector<8x128xf32>
    %25 = arith.truncf %23 : vector<256x128xf32> to vector<256x128xbf16>
    %c0_20 = arith.constant 0 : index
    %c0_21 = arith.constant 0 : index
    %26 = vector.load %arg7[%c0_20, %c0_21] : memref<128x128xbf16, #tpu.memory_space<vmem>>, vector<128x128xbf16>
    %cst_22 = arith.constant dense<0.000000e+00> : vector<256x128xf32>
    %27 = tpu.matmul %25, %26, %cst_22 {dimension_numbers = #tpu.dot_dimension_numbers<[1], [0], [0], [1], [0, 0, 1, 1], [], []>} : vector<256x128xbf16>, vector<128x128xbf16>, vector<256x128xf32> -> vector<256x128xf32>
    %28 = arith.truncf %27 : vector<256x128xf32> to vector<256x128xbf16>
    %cst_23 = arith.constant dense<0.000000e+00> : vector<256x128xf32>
    %29 = tpu.matmul %0, %28, %cst_23 {dimension_numbers = #tpu.dot_dimension_numbers<[1], [0], [0], [1], [0, 0, 1, 1], [], []>} : vector<256x256xbf16>, vector<256x128xbf16>, vector<256x128xf32> -> vector<256x128xf32>
    %c0_24 = arith.constant 0 : index
    %c0_25 = arith.constant 0 : index
    %30 = vector.load %arg8[%c0_24, %c0_25] : memref<1x128xf32, #tpu.memory_space<vmem>>, vector<1x128xf32>
    %31 = vector.broadcast %30 : vector<1x128xf32> to vector<256x128xf32>
    %32 = arith.addf %29, %31 : vector<256x128xf32>
    %cst_26 = arith.constant 0.000000e+00 : f32
    %33 = vector.broadcast %cst_26 : f32 to vector<256x128xf32>
    %34 = arith.maximumf %32, %33 : vector<256x128xf32>
    %cst_27 = arith.constant dense<0.000000e+00> : vector<8x128xf32>
    %35 = tpu.matmul %2, %34, %cst_27 {dimension_numbers = #tpu.dot_dimension_numbers<[1], [0], [0], [1], [0, 0, 1, 1], [], []>} : vector<8x256xf32>, vector<256x128xf32>, vector<8x128xf32> -> vector<8x128xf32>
    %cst_28 = arith.constant dense<0.000000e+00> : vector<8x640xf32>
    %36 = tpu.matmul %2, %1, %cst_28 {dimension_numbers = #tpu.dot_dimension_numbers<[1], [0], [0], [1], [0, 0, 1, 1], [], []>} : vector<8x256xf32>, vector<256x640xf32>, vector<8x640xf32> -> vector<8x640xf32>
    %37 = tpu.concatenate %36, %13, %24, %35 in 1 : vector<8x640xf32>, vector<8x128xf32>, vector<8x128xf32>, vector<8x128xf32> -> vector<8x1024xf32>
    %c0_29 = arith.constant 0 : index
    %c0_30 = arith.constant 0 : index
    %38 = vector.load %arg10[%c0_29, %c0_30] : memref<1x1024xf32, #tpu.memory_space<vmem>>, vector<1x1024xf32>
    %39 = vector.broadcast %38 : vector<1x1024xf32> to vector<8x1024xf32>
    %40 = arith.mulf %37, %39 : vector<8x1024xf32>
    %c0_31 = arith.constant 0 : index
    %c0_32 = arith.constant 0 : index
    %41 = vector.load %arg11[%c0_31, %c0_32] : memref<1x1024xf32, #tpu.memory_space<vmem>>, vector<1x1024xf32>
    %42 = vector.broadcast %41 : vector<1x1024xf32> to vector<8x1024xf32>
    %43 = arith.addf %40, %42 : vector<8x1024xf32>
    %44 = arith.truncf %43 : vector<8x1024xf32> to vector<8x1024xbf16>
    %c0_33 = arith.constant 0 : index
    %c0_34 = arith.constant 0 : index
    %45 = vector.load %arg12[%c0_33, %c0_34] : memref<1024x128xbf16, #tpu.memory_space<vmem>>, vector<1024x128xbf16>
    %cst_35 = arith.constant dense<0.000000e+00> : vector<8x128xf32>
    %46 = tpu.matmul %44, %45, %cst_35 {dimension_numbers = #tpu.dot_dimension_numbers<[1], [0], [0], [1], [0, 0, 1, 1], [], []>} : vector<8x1024xbf16>, vector<1024x128xbf16>, vector<8x128xf32> -> vector<8x128xf32>
    %c0_36 = arith.constant 0 : index
    %c0_37 = arith.constant 0 : index
    %47 = vector.load %arg13[%c0_36, %c0_37] : memref<1x128xf32, #tpu.memory_space<vmem>>, vector<1x128xf32>
    %48 = vector.broadcast %47 : vector<1x128xf32> to vector<8x128xf32>
    %49 = arith.addf %46, %48 : vector<8x128xf32>
    %cst_38 = arith.constant 0.000000e+00 : f32
    %50 = vector.broadcast %cst_38 : f32 to vector<8x128xf32>
    %51 = arith.maximumf %49, %50 : vector<8x128xf32>
    %52 = arith.truncf %51 : vector<8x128xf32> to vector<8x128xbf16>
    %c0_39 = arith.constant 0 : index
    %c0_40 = arith.constant 0 : index
    %53 = vector.load %arg14[%c0_39, %c0_40] : memref<128x128xbf16, #tpu.memory_space<vmem>>, vector<128x128xbf16>
    %cst_41 = arith.constant dense<0.000000e+00> : vector<8x128xf32>
    %54 = tpu.matmul %52, %53, %cst_41 {dimension_numbers = #tpu.dot_dimension_numbers<[1], [0], [0], [1], [0, 0, 1, 1], [], []>} : vector<8x128xbf16>, vector<128x128xbf16>, vector<8x128xf32> -> vector<8x128xf32>
    %c0_42 = arith.constant 0 : index
    %c0_43 = arith.constant 0 : index
    %55 = vector.load %arg15[%c0_42, %c0_43] : memref<1x128xf32, #tpu.memory_space<vmem>>, vector<1x128xf32>
    %56 = vector.broadcast %55 : vector<1x128xf32> to vector<8x128xf32>
    %57 = arith.addf %54, %56 : vector<8x128xf32>
    %cst_44 = arith.constant 5.000000e-01 : f32
    %58 = vector.broadcast %cst_44 : f32 to vector<8x128xf32>
    %59 = arith.mulf %58, %57 : vector<8x128xf32>
    %60 = math.tanh %59 : vector<8x128xf32>
    %cst_45 = arith.constant 1.000000e+00 : f32
    %61 = vector.broadcast %cst_45 : f32 to vector<8x128xf32>
    %62 = arith.addf %60, %61 : vector<8x128xf32>
    %cst_46 = arith.constant 5.000000e-01 : f32
    %63 = vector.broadcast %cst_46 : f32 to vector<8x128xf32>
    %64 = arith.mulf %63, %62 : vector<8x128xf32>
    %c0_47 = arith.constant 0 : index
    %c0_48 = arith.constant 0 : index
    %65 = vector.load %arg16[%c0_47, %c0_48] : memref<8x128xf32, #tpu.memory_space<vmem>>, vector<8x128xf32>
    tpu.vector_store %arg16[%c0_47, %c0_48], %64 {strides = array<i32>} : memref<8x128xf32, #tpu.memory_space<vmem>>, vector<8x128xf32>,
    return
  }
  func.func @transform_0(%arg0: i32) -> (i32, i32) {
    %c0_i32 = arith.constant 0 : i32
    %c0_i32_0 = arith.constant 0 : i32
    %c0_i32_1 = arith.constant 0 : i32
    return %c0_i32, %c0_i32_0 : i32, i32
  }
  func.func @transform_1(%arg0: i32) -> (i32, i32) {
    %c0_i32 = arith.constant 0 : i32
    %c0_i32_0 = arith.constant 0 : i32
    %c0_i32_1 = arith.constant 0 : i32
    return %c0_i32, %c0_i32_0 : i32, i32
  }
  func.func @transform_2(%arg0: i32) -> (i32, i32) {
    %c0_i32 = arith.constant 0 : i32
    %c0_i32_0 = arith.constant 0 : i32
    %c0_i32_1 = arith.constant 0 : i32
    return %c0_i32, %c0_i32_0 : i32, i32
  }
  func.func @transform_3(%arg0: i32) -> (i32, i32) {
    %c0_i32 = arith.constant 0 : i32
    %c0_i32_0 = arith.constant 0 : i32
    %c0_i32_1 = arith.constant 0 : i32
    return %c0_i32, %c0_i32_0 : i32, i32
  }
  func.func @transform_4(%arg0: i32) -> (i32, i32) {
    %c0_i32 = arith.constant 0 : i32
    %c0_i32_0 = arith.constant 0 : i32
    %c0_i32_1 = arith.constant 0 : i32
    return %c0_i32, %c0_i32_0 : i32, i32
  }
  func.func @transform_5(%arg0: i32) -> (i32, i32) {
    %c0_i32 = arith.constant 0 : i32
    %c0_i32_0 = arith.constant 0 : i32
    %c0_i32_1 = arith.constant 0 : i32
    return %c0_i32, %c0_i32_0 : i32, i32
  }
  func.func @transform_6(%arg0: i32) -> (i32, i32) {
    %c0_i32 = arith.constant 0 : i32
    %c0_i32_0 = arith.constant 0 : i32
    %c0_i32_1 = arith.constant 0 : i32
    return %c0_i32, %c0_i32_0 : i32, i32
  }
  func.func @transform_7(%arg0: i32) -> (i32, i32) {
    %c0_i32 = arith.constant 0 : i32
    %c0_i32_0 = arith.constant 0 : i32
    %c0_i32_1 = arith.constant 0 : i32
    return %c0_i32, %c0_i32_0 : i32, i32
  }
  func.func @transform_8(%arg0: i32) -> (i32, i32) {
    %c0_i32 = arith.constant 0 : i32
    %c0_i32_0 = arith.constant 0 : i32
    %c0_i32_1 = arith.constant 0 : i32
    return %c0_i32, %c0_i32_0 : i32, i32
  }
  func.func @transform_9(%arg0: i32) -> (i32, i32) {
    %c0_i32 = arith.constant 0 : i32
    %c0_i32_0 = arith.constant 0 : i32
    %c0_i32_1 = arith.constant 0 : i32
    return %c0_i32, %c0_i32_0 : i32, i32
  }
  func.func @transform_10(%arg0: i32) -> (i32, i32) {
    %c0_i32 = arith.constant 0 : i32
    %c0_i32_0 = arith.constant 0 : i32
    %c0_i32_1 = arith.constant 0 : i32
    return %c0_i32, %c0_i32_0 : i32, i32
  }
  func.func @transform_11(%arg0: i32) -> (i32, i32) {
    %c0_i32 = arith.constant 0 : i32
    %c0_i32_0 = arith.constant 0 : i32
    %c0_i32_1 = arith.constant 0 : i32
    return %c0_i32, %c0_i32_0 : i32, i32
  }
  func.func @transform_12(%arg0: i32) -> (i32, i32) {
    %c0_i32 = arith.constant 0 : i32
    %c0_i32_0 = arith.constant 0 : i32
    %c0_i32_1 = arith.constant 0 : i32
    return %c0_i32, %c0_i32_0 : i32, i32
  }
  func.func @transform_13(%arg0: i32) -> (i32, i32) {
    %c0_i32 = arith.constant 0 : i32
    %c0_i32_0 = arith.constant 0 : i32
    %c0_i32_1 = arith.constant 0 : i32
    return %c0_i32, %c0_i32_0 : i32, i32
  }
  func.func @transform_14(%arg0: i32) -> (i32, i32) {
    %c0_i32 = arith.constant 0 : i32
    %c0_i32_0 = arith.constant 0 : i32
    %c0_i32_1 = arith.constant 0 : i32
    return %c0_i32, %c0_i32_0 : i32, i32
  }
  func.func @transform_15(%arg0: i32) -> (i32, i32) {
    %c0_i32 = arith.constant 0 : i32
    %c0_i32_0 = arith.constant 0 : i32
    %c0_i32_1 = arith.constant 0 : i32
    return %c0_i32, %c0_i32_0 : i32, i32
  }
}

</mosaic_0001>

<llo_original>
// kernel: gcn_model_forward.1
$region0: #{gcn_model_forward.1}
  #allocation0 [shape = 'u32[]', space=smem, size = 0x4, offset = 0x4, fixed_abs, tag = 'smem constant byte address 0x4 - core index']
  #allocation1 [shape = 'u32[72,128]{1,0:T(1,128)}', space=vmem, size = 0x9000, scoped, tag = 'internal scratch']
  %s0 = inlined_call_operand.vmem [shape: bf16[256,256], index: 0, kind: input, shape index: {}]
  %s1 = inlined_call_operand.vmem [shape: f32[256,640], index: 1, kind: input, shape index: {}]
  %s2 = inlined_call_operand.vmem [shape: bf16[640,128], index: 2, kind: input, shape index: {}]
  %s3 = inlined_call_operand.vmem [shape: f32[1,128], index: 3, kind: input, shape index: {}]
  %s4 = inlined_call_operand.vmem [shape: bf16[128,128], index: 4, kind: input, shape index: {}]
  %s5 = inlined_call_operand.vmem [shape: f32[1,128], index: 5, kind: input, shape index: {}]
  %s6 = inlined_call_operand.vmem [shape: bf16[128,128], index: 6, kind: input, shape index: {}]
  %s7 = inlined_call_operand.vmem [shape: f32[1,128], index: 7, kind: input, shape index: {}]
  %s8 = inlined_call_operand.vmem [shape: f32[8,256], index: 8, kind: input, shape index: {}]
  %s9 = inlined_call_operand.vmem [shape: f32[1,1024], index: 9, kind: input, shape index: {}]
  %s10 = inlined_call_operand.vmem [shape: f32[1,1024], index: 10, kind: input, shape index: {}]
  %s11 = inlined_call_operand.vmem [shape: bf16[1024,128], index: 11, kind: input, shape index: {}]
  %s12 = inlined_call_operand.vmem [shape: f32[1,128], index: 12, kind: input, shape index: {}]
  %s13 = inlined_call_operand.vmem [shape: bf16[128,128], index: 13, kind: input, shape index: {}]
  %s14 = inlined_call_operand.vmem [shape: f32[1,128], index: 14, kind: input, shape index: {}]
  %s15 = inlined_call_operand.vmem [shape: f32[8,128], index: 15, kind: output, shape index: {}]
  %s16 = sld [smem:[#allocation0]]
  $region70: #{gcn_model_forward.1} parent=0
    _
  %s18 = ssub.s32 1, %s16
  %s19 = scalar_select 0, %s18, %s16
  // Predicated region
  $region2: #{gcn_model_forward.1} parent=0 // pred_check
    _
  $region3: #{gcn_model_forward.1} parent=0 // pred_check_branch
    %21 = sbr.rel (0) target = $region5
  $region4: #{gcn_model_forward.1} parent=0 // pred_region
    _
  $region5: #{gcn_model_forward.1} parent=0 // pred_fallthru
    _
  // Predicated region
  $region6: #{gcn_model_forward.1} parent=0 // pred_check
    _
  $region7: #{gcn_model_forward.1} parent=0 // pred_check_branch
    %23 = sbr.rel (0) target = $region9
  $region8: #{gcn_model_forward.1} parent=0 // pred_region
    _
  $region9: #{gcn_model_forward.1} parent=0 // pred_fallthru
    _
  // Predicated region
  $region10: #{gcn_model_forward.1} parent=0 // pred_check
    _
  $region11: #{gcn_model_forward.1} parent=0 // pred_check_branch
    %25 = sbr.rel (0) target = $region13
  $region12: #{gcn_model_forward.1} parent=0 // pred_region
    _
  $region13: #{gcn_model_forward.1} parent=0 // pred_fallthru
    _
  // Predicated region
  $region14: #{gcn_model_forward.1} parent=0 // pred_check
    _
  $region15: #{gcn_model_forward.1} parent=0 // pred_check_branch
    %27 = sbr.rel (0) target = $region17
  $region16: #{gcn_model_forward.1} parent=0 // pred_region
    _
  $region17: #{gcn_model_forward.1} parent=0 // pred_fallthru
    _
  // Predicated region
  $region18: #{gcn_model_forward.1} parent=0 // pred_check
    _
  $region19: #{gcn_model_forward.1} parent=0 // pred_check_branch
    %29 = sbr.rel (0) target = $region21
  $region20: #{gcn_model_forward.1} parent=0 // pred_region
    _
  $region21: #{gcn_model_forward.1} parent=0 // pred_fallthru
    _
  // Predicated region
  $region22: #{gcn_model_forward.1} parent=0 // pred_check
    _
  $region23: #{gcn_model_forward.1} parent=0 // pred_check_branch
    %31 = sbr.rel (0) target = $region25
  $region24: #{gcn_model_forward.1} parent=0 // pred_region
    _
  $region25: #{gcn_model_forward.1} parent=0 // pred_fallthru
    _
  // Predicated region
  $region26: #{gcn_model_forward.1} parent=0 // pred_check
    _
  $region27: #{gcn_model_forward.1} parent=0 // pred_check_branch
    %33 = sbr.rel (0) target = $region29
  $region28: #{gcn_model_forward.1} parent=0 // pred_region
    _
  $region29: #{gcn_model_forward.1} parent=0 // pred_fallthru
    _
  // Predicated region
  $region30: #{gcn_model_forward.1} parent=0 // pred_check
    _
  $region31: #{gcn_model_forward.1} parent=0 // pred_check_branch
    %35 = sbr.rel (0) target = $region33
  $region32: #{gcn_model_forward.1} parent=0 // pred_region
    _
  $region33: #{gcn_model_forward.1} parent=0 // pred_fallthru
    _
  // Predicated region
  $region34: #{gcn_model_forward.1} parent=0 // pred_check
    _
  $region35: #{gcn_model_forward.1} parent=0 // pred_check_branch
    %37 = sbr.rel (0) target = $region37
  $region36: #{gcn_model_forward.1} parent=0 // pred_region
    _
  $region37: #{gcn_model_forward.1} parent=0 // pred_fallthru
    _
  // Predicated region
  $region38: #{gcn_model_forward.1} parent=0 // pred_check
    _
  $region39: #{gcn_model_forward.1} parent=0 // pred_check_branch
    %39 = sbr.rel (0) target = $region41
  $region40: #{gcn_model_forward.1} parent=0 // pred_region
    _
  $region41: #{gcn_model_forward.1} parent=0 // pred_fallthru
    _
  // Predicated region
  $region42: #{gcn_model_forward.1} parent=0 // pred_check
    _
  $region43: #{gcn_model_forward.1} parent=0 // pred_check_branch
    %41 = sbr.rel (0) target = $region45
  $region44: #{gcn_model_forward.1} parent=0 // pred_region
    _
  $region45: #{gcn_model_forward.1} parent=0 // pred_fallthru
    _
  // Predicated region
  $region46: #{gcn_model_forward.1} parent=0 // pred_check
    _
  $region47: #{gcn_model_forward.1} parent=0 // pred_check_branch
    %43 = sbr.rel (0) target = $region49
  $region48: #{gcn_model_forward.1} parent=0 // pred_region
    _
  $region49: #{gcn_model_forward.1} parent=0 // pred_fallthru
    _
  // Predicated region
  $region50: #{gcn_model_forward.1} parent=0 // pred_check
    _
  $region51: #{gcn_model_forward.1} parent=0 // pred_check_branch
    %45 = sbr.rel (0) target = $region53
  $region52: #{gcn_model_forward.1} parent=0 // pred_region
    _
  $region53: #{gcn_model_forward.1} parent=0 // pred_fallthru
    _
  // Predicated region
  $region54: #{gcn_model_forward.1} parent=0 // pred_check
    _
  $region55: #{gcn_model_forward.1} parent=0 // pred_check_branch
    %47 = sbr.rel (0) target = $region57
  $region56: #{gcn_model_forward.1} parent=0 // pred_region
    _
  $region57: #{gcn_model_forward.1} parent=0 // pred_fallthru
    _
  // Predicated region
  $region58: #{gcn_model_forward.1} parent=0 // pred_check
    _
  $region59: #{gcn_model_forward.1} parent=0 // pred_check_branch
    %49 = sbr.rel (0) target = $region61
  $region60: #{gcn_model_forward.1} parent=0 // pred_region
    _
  $region61: #{gcn_model_forward.1} parent=0 // pred_fallthru
    _
  %v50 = vld [vmem:[%s0] sm:$0xff]
  %v51 = vld [vmem:[%s0 + $0x8] sm:$0xff]
  %v52 = vld [vmem:[%s0 + $0x10] sm:$0xff]
  %v53 = vld [vmem:[%s0 + $0x18] sm:$0xff]
  %v54 = vld [vmem:[%s0 + $0x20] sm:$0xff]
  %v55 = vld [vmem:[%s0 + $0x28] sm:$0xff]
  %v56 = vld [vmem:[%s0 + $0x30] sm:$0xff]
  %v57 = vld [vmem:[%s0 + $0x38] sm:$0xff]
  %v58 = vld [vmem:[%s0 + $0x40] sm:$0xff]
  %v59 = vld [vmem:[%s0 + $0x48] sm:$0xff]
  %v60 = vld [vmem:[%s0 + $0x50] sm:$0xff]
  %v61 = vld [vmem:[%s0 + $0x58] sm:$0xff]
  %v62 = vld [vmem:[%s0 + $0x60] sm:$0xff]
  %v63 = vld [vmem:[%s0 + $0x68] sm:$0xff]
  %v64 = vld [vmem:[%s0 + $0x70] sm:$0xff]
  %v65 = vld [vmem:[%s0 + $0x78] sm:$0xff]
  %v66 = vld [vmem:[%s0 + $0x80] sm:$0xff]
  %v67 = vld [vmem:[%s0 + $0x88] sm:$0xff]
  %v68 = vld [vmem:[%s0 + $0x90] sm:$0xff]
  %v69 = vld [vmem:[%s0 + $0x98] sm:$0xff]
  %v70 = vld [vmem:[%s0 + $0xa0] sm:$0xff]
  %v71 = vld [vmem:[%s0 + $0xa8] sm:$0xff]
  %v72 = vld [vmem:[%s0 + $0xb0] sm:$0xff]
  %v73 = vld [vmem:[%s0 + $0xb8] sm:$0xff]
  %v74 = vld [vmem:[%s0 + $0xc0] sm:$0xff]
  %v75 = vld [vmem:[%s0 + $0xc8] sm:$0xff]
  %v76 = vld [vmem:[%s0 + $0xd0] sm:$0xff]
  %v77 = vld [vmem:[%s0 + $0xd8] sm:$0xff]
  %v78 = vld [vmem:[%s0 + $0xe0] sm:$0xff]
  %v79 = vld [vmem:[%s0 + $0xe8] sm:$0xff]
  %v80 = vld [vmem:[%s0 + $0xf0] sm:$0xff]
  %v81 = vld [vmem:[%s0 + $0xf8] sm:$0xff]
  %v82 = vld [vmem:[%s1] sm:$0xff]
  %v83 = vld [vmem:[%s1 + $0x8] sm:$0xff]
  %v84 = vld [vmem:[%s1 + $0x10] sm:$0xff]
  %v85 = vld [vmem:[%s1 + $0x18] sm:$0xff]
  %v86 = vld [vmem:[%s1 + $0x20] sm:$0xff]
  %v87 = vld [vmem:[%s1 + $0x28] sm:$0xff]
  %v88 = vld [vmem:[%s1 + $0x30] sm:$0xff]
  %v89 = vld [vmem:[%s1 + $0x38] sm:$0xff]
  %v90 = vld [vmem:[%s1 + $0x40] sm:$0xff]
  %v91 = vld [vmem:[%s1 + $0x48] sm:$0xff]
  %v92 = vld [vmem:[%s1 + $0x50] sm:$0xff]
  %v93 = vld [vmem:[%s1 + $0x58] sm:$0xff]
  %v94 = vld [vmem:[%s1 + $0x60] sm:$0xff]
  %v95 = vld [vmem:[%s1 + $0x68] sm:$0xff]
  %v96 = vld [vmem:[%s1 + $0x70] sm:$0xff]
  %v97 = vld [vmem:[%s1 + $0x78] sm:$0xff]
  %v98 = vld [vmem:[%s1 + $0x80] sm:$0xff]
  %v99 = vld [vmem:[%s1 + $0x88] sm:$0xff]
  %v100 = vld [vmem:[%s1 + $0x90] sm:$0xff]
  %v101 = vld [vmem:[%s1 + $0x98] sm:$0xff]
  %v102 = vld [vmem:[%s1 + $0xa0] sm:$0xff]
  %v103 = vld [vmem:[%s1 + $0xa8] sm:$0xff]
  %v104 = vld [vmem:[%s1 + $0xb0] sm:$0xff]
  %v105 = vld [vmem:[%s1 + $0xb8] sm:$0xff]
  %v106 = vld [vmem:[%s1 + $0xc0] sm:$0xff]
  %v107 = vld [vmem:[%s1 + $0xc8] sm:$0xff]
  %v108 = vld [vmem:[%s1 + $0xd0] sm:$0xff]
  %v109 = vld [vmem:[%s1 + $0xd8] sm:$0xff]
  %v110 = vld [vmem:[%s1 + $0xe0] sm:$0xff]
  %v111 = vld [vmem:[%s1 + $0xe8] sm:$0xff]
  %v112 = vld [vmem:[%s1 + $0xf0] sm:$0xff]
  %v113 = vld [vmem:[%s1 + $0xf8] sm:$0xff]
  %v114 = vld [vmem:[%s1 + $0x100] sm:$0xff]
  %v115 = vld [vmem:[%s1 + $0x108] sm:$0xff]
  %v116 = vld [vmem:[%s1 + $0x110] sm:$0xff]
  %v117 = vld [vmem:[%s1 + $0x118] sm:$0xff]
  %v118 = vld [vmem:[%s1 + $0x120] sm:$0xff]
  %v119 = vld [vmem:[%s1 + $0x128] sm:$0xff]
  %v120 = vld [vmem:[%s1 + $0x130] sm:$0xff]
  %v121 = vld [vmem:[%s1 + $0x138] sm:$0xff]
  %v122 = vld [vmem:[%s1 + $0x140] sm:$0xff]
  %v123 = vld [vmem:[%s1 + $0x148] sm:$0xff]
  %v124 = vld [vmem:[%s1 + $0x150] sm:$0xff]
  %v125 = vld [vmem:[%s1 + $0x158] sm:$0xff]
  %v126 = vld [vmem:[%s1 + $0x160] sm:$0xff]
  %v127 = vld [vmem:[%s1 + $0x168] sm:$0xff]
  %v128 = vld [vmem:[%s1 + $0x170] sm:$0xff]
  %v129 = vld [vmem:[%s1 + $0x178] sm:$0xff]
  %v130 = vld [vmem:[%s1 + $0x180] sm:$0xff]
  %v131 = vld [vmem:[%s1 + $0x188] sm:$0xff]
  %v132 = vld [vmem:[%s1 + $0x190] sm:$0xff]
  %v133 = vld [vmem:[%s1 + $0x198] sm:$0xff]
  %v134 = vld [vmem:[%s1 + $0x1a0] sm:$0xff]
  %v135 = vld [vmem:[%s1 + $0x1a8] sm:$0xff]
  %v136 = vld [vmem:[%s1 + $0x1b0] sm:$0xff]
  %v137 = vld [vmem:[%s1 + $0x1b8] sm:$0xff]
  %v138 = vld [vmem:[%s1 + $0x1c0] sm:$0xff]
  %v139 = vld [vmem:[%s1 + $0x1c8] sm:$0xff]
  %v140 = vld [vmem:[%s1 + $0x1d0] sm:$0xff]
  %v141 = vld [vmem:[%s1 + $0x1d8] sm:$0xff]
  %v142 = vld [vmem:[%s1 + $0x1e0] sm:$0xff]
  %v143 = vld [vmem:[%s1 + $0x1e8] sm:$0xff]
  %v144 = vld [vmem:[%s1 + $0x1f0] sm:$0xff]
  %v145 = vld [vmem:[%s1 + $0x1f8] sm:$0xff]
  %v146 = vld [vmem:[%s1 + $0x200] sm:$0xff]
  %v147 = vld [vmem:[%s1 + $0x208] sm:$0xff]
  %v148 = vld [vmem:[%s1 + $0x210] sm:$0xff]
  %v149 = vld [vmem:[%s1 + $0x218] sm:$0xff]
  %v150 = vld [vmem:[%s1 + $0x220] sm:$0xff]
  %v151 = vld [vmem:[%s1 + $0x228] sm:$0xff]
  %v152 = vld [vmem:[%s1 + $0x230] sm:$0xff]
  %v153 = vld [vmem:[%s1 + $0x238] sm:$0xff]
  %v154 = vld [vmem:[%s1 + $0x240] sm:$0xff]
  %v155 = vld [vmem:[%s1 + $0x248] sm:$0xff]
  %v156 = vld [vmem:[%s1 + $0x250] sm:$0xff]
  %v157 = vld [vmem:[%s1 + $0x258] sm:$0xff]
  %v158 = vld [vmem:[%s1 + $0x260] sm:$0xff]
  %v159 = vld [vmem:[%s1 + $0x268] sm:$0xff]
  %v160 = vld [vmem:[%s1 + $0x270] sm:$0xff]
  %v161 = vld [vmem:[%s1 + $0x278] sm:$0xff]
  %v162 = vld [vmem:[%s1 + $0x280] sm:$0xff]
  %v163 = vld [vmem:[%s1 + $0x288] sm:$0xff]
  %v164 = vld [vmem:[%s1 + $0x290] sm:$0xff]
  %v165 = vld [vmem:[%s1 + $0x298] sm:$0xff]
  %v166 = vld [vmem:[%s1 + $0x2a0] sm:$0xff]
  %v167 = vld [vmem:[%s1 + $0x2a8] sm:$0xff]
  %v168 = vld [vmem:[%s1 + $0x2b0] sm:$0xff]
  %v169 = vld [vmem:[%s1 + $0x2b8] sm:$0xff]
  %v170 = vld [vmem:[%s1 + $0x2c0] sm:$0xff]
  %v171 = vld [vmem:[%s1 + $0x2c8] sm:$0xff]
  %v172 = vld [vmem:[%s1 + $0x2d0] sm:$0xff]
  %v173 = vld [vmem:[%s1 + $0x2d8] sm:$0xff]
  %v174 = vld [vmem:[%s1 + $0x2e0] sm:$0xff]
  %v175 = vld [vmem:[%s1 + $0x2e8] sm:$0xff]
  %v176 = vld [vmem:[%s1 + $0x2f0] sm:$0xff]
  %v177 = vld [vmem:[%s1 + $0x2f8] sm:$0xff]
  %v178 = vld [vmem:[%s1 + $0x300] sm:$0xff]
  %v179 = vld [vmem:[%s1 + $0x308] sm:$0xff]
  %v180 = vld [vmem:[%s1 + $0x310] sm:$0xff]
  %v181 = vld [vmem:[%s1 + $0x318] sm:$0xff]
  %v182 = vld [vmem:[%s1 + $0x320] sm:$0xff]
  %v183 = vld [vmem:[%s1 + $0x328] sm:$0xff]
  %v184 = vld [vmem:[%s1 + $0x330] sm:$0xff]
  %v185 = vld [vmem:[%s1 + $0x338] sm:$0xff]
  %v186 = vld [vmem:[%s1 + $0x340] sm:$0xff]
  %v187 = vld [vmem:[%s1 + $0x348] sm:$0xff]
  %v188 = vld [vmem:[%s1 + $0x350] sm:$0xff]
  %v189 = vld [vmem:[%s1 + $0x358] sm:$0xff]
  %v190 = vld [vmem:[%s1 + $0x360] sm:$0xff]
  %v191 = vld [vmem:[%s1 + $0x368] sm:$0xff]
  %v192 = vld [vmem:[%s1 + $0x370] sm:$0xff]
  %v193 = vld [vmem:[%s1 + $0x378] sm:$0xff]
  %v194 = vld [vmem:[%s1 + $0x380] sm:$0xff]
  %v195 = vld [vmem:[%s1 + $0x388] sm:$0xff]
  %v196 = vld [vmem:[%s1 + $0x390] sm:$0xff]
  %v197 = vld [vmem:[%s1 + $0x398] sm:$0xff]
  %v198 = vld [vmem:[%s1 + $0x3a0] sm:$0xff]
  %v199 = vld [vmem:[%s1 + $0x3a8] sm:$0xff]
  %v200 = vld [vmem:[%s1 + $0x3b0] sm:$0xff]
  %v201 = vld [vmem:[%s1 + $0x3b8] sm:$0xff]
  %v202 = vld [vmem:[%s1 + $0x3c0] sm:$0xff]
  %v203 = vld [vmem:[%s1 + $0x3c8] sm:$0xff]
  %v204 = vld [vmem:[%s1 + $0x3d0] sm:$0xff]
  %v205 = vld [vmem:[%s1 + $0x3d8] sm:$0xff]
  %v206 = vld [vmem:[%s1 + $0x3e0] sm:$0xff]
  %v207 = vld [vmem:[%s1 + $0x3e8] sm:$0xff]
  %v208 = vld [vmem:[%s1 + $0x3f0] sm:$0xff]
  %v209 = vld [vmem:[%s1 + $0x3f8] sm:$0xff]
  %v210 = vld [vmem:[%s1 + $0x400] sm:$0xff]
  %v211 = vld [vmem:[%s1 + $0x408] sm:$0xff]
  %v212 = vld [vmem:[%s1 + $0x410] sm:$0xff]
  %v213 = vld [vmem:[%s1 + $0x418] sm:$0xff]
  %v214 = vld [vmem:[%s1 + $0x420] sm:$0xff]
  %v215 = vld [vmem:[%s1 + $0x428] sm:$0xff]
  %v216 = vld [vmem:[%s1 + $0x430] sm:$0xff]
  %v217 = vld [vmem:[%s1 + $0x438] sm:$0xff]
  %v218 = vld [vmem:[%s1 + $0x440] sm:$0xff]
  %v219 = vld [vmem:[%s1 + $0x448] sm:$0xff]
  %v220 = vld [vmem:[%s1 + $0x450] sm:$0xff]
  %v221 = vld [vmem:[%s1 + $0x458] sm:$0xff]
  %v222 = vld [vmem:[%s1 + $0x460] sm:$0xff]
  %v223 = vld [vmem:[%s1 + $0x468] sm:$0xff]
  %v224 = vld [vmem:[%s1 + $0x470] sm:$0xff]
  %v225 = vld [vmem:[%s1 + $0x478] sm:$0xff]
  %v226 = vld [vmem:[%s1 + $0x480] sm:$0xff]
  %v227 = vld [vmem:[%s1 + $0x488] sm:$0xff]
  %v228 = vld [vmem:[%s1 + $0x490] sm:$0xff]
  %v229 = vld [vmem:[%s1 + $0x498] sm:$0xff]
  %v230 = vld [vmem:[%s1 + $0x4a0] sm:$0xff]
  %v231 = vld [vmem:[%s1 + $0x4a8] sm:$0xff]
  %v232 = vld [vmem:[%s1 + $0x4b0] sm:$0xff]
  %v233 = vld [vmem:[%s1 + $0x4b8] sm:$0xff]
  %v234 = vld [vmem:[%s1 + $0x4c0] sm:$0xff]
  %v235 = vld [vmem:[%s1 + $0x4c8] sm:$0xff]
  %v236 = vld [vmem:[%s1 + $0x4d0] sm:$0xff]
  %v237 = vld [vmem:[%s1 + $0x4d8] sm:$0xff]
  %v238 = vld [vmem:[%s1 + $0x4e0] sm:$0xff]
  %v239 = vld [vmem:[%s1 + $0x4e8] sm:$0xff]
  %v240 = vld [vmem:[%s1 + $0x4f0] sm:$0xff]
  %v241 = vld [vmem:[%s1 + $0x4f8] sm:$0xff]
  %v242 = vld [vmem:[%s8] sm:$0xff]
  %v243 = vld [vmem:[%s8 + $0x8] sm:$0xff]
  %v244 = vpack.c.bf16 %v87, %v82
  %v245 = vpack.c.bf16 %v88, %v83
  %v246 = vpack.c.bf16 %v89, %v84
  %v247 = vpack.c.bf16 %v90, %v85
  %v248 = vpack.c.bf16 %v91, %v86
  %v249 = vpack.c.bf16 %v97, %v92
  %v250 = vpack.c.bf16 %v98, %v93
  %v251 = vpack.c.bf16 %v99, %v94
  %v252 = vpack.c.bf16 %v100, %v95
  %v253 = vpack.c.bf16 %v101, %v96
  %v254 = vpack.c.bf16 %v107, %v102
  %v255 = vpack.c.bf16 %v108, %v103
  %v256 = vpack.c.bf16 %v109, %v104
  %v257 = vpack.c.bf16 %v110, %v105
  %v258 = vpack.c.bf16 %v111, %v106
  %v259 = vpack.c.bf16 %v117, %v112
  %v260 = vpack.c.bf16 %v118, %v113
  %v261 = vpack.c.bf16 %v119, %v114
  %v262 = vpack.c.bf16 %v120, %v115
  %v263 = vpack.c.bf16 %v121, %v116
  %v264 = vpack.c.bf16 %v127, %v122
  %v265 = vpack.c.bf16 %v128, %v123
  %v266 = vpack.c.bf16 %v129, %v124
  %v267 = vpack.c.bf16 %v130, %v125
  %v268 = vpack.c.bf16 %v131, %v126
  %v269 = vpack.c.bf16 %v137, %v132
  %v270 = vpack.c.bf16 %v138, %v133
  %v271 = vpack.c.bf16 %v139, %v134
  %v272 = vpack.c.bf16 %v140, %v135
  %v273 = vpack.c.bf16 %v141, %v136
  %v274 = vpack.c.bf16 %v147, %v142
  %v275 = vpack.c.bf16 %v148, %v143
  %v276 = vpack.c.bf16 %v149, %v144
  %v277 = vpack.c.bf16 %v150, %v145
  %v278 = vpack.c.bf16 %v151, %v146
  %v279 = vpack.c.bf16 %v157, %v152
  %v280 = vpack.c.bf16 %v158, %v153
  %v281 = vpack.c.bf16 %v159, %v154
  %v282 = vpack.c.bf16 %v160, %v155
  %v283 = vpack.c.bf16 %v161, %v156
  %v284 = vpack.c.bf16 %v167, %v162
  %v285 = vpack.c.bf16 %v168, %v163
  %v286 = vpack.c.bf16 %v169, %v164
  %v287 = vpack.c.bf16 %v170, %v165
  %v288 = vpack.c.bf16 %v171, %v166
  %v289 = vpack.c.bf16 %v177, %v172
  %v290 = vpack.c.bf16 %v178, %v173
  %v291 = vpack.c.bf16 %v179, %v174
  %v292 = vpack.c.bf16 %v180, %v175
  %v293 = vpack.c.bf16 %v181, %v176
  %v294 = vpack.c.bf16 %v187, %v182
  %v295 = vpack.c.bf16 %v188, %v183
  %v296 = vpack.c.bf16 %v189, %v184
  %v297 = vpack.c.bf16 %v190, %v185
  %v298 = vpack.c.bf16 %v191, %v186
  %v299 = vpack.c.bf16 %v197, %v192
  %v300 = vpack.c.bf16 %v198, %v193
  %v301 = vpack.c.bf16 %v199, %v194
  %v302 = vpack.c.bf16 %v200, %v195
  %v303 = vpack.c.bf16 %v201, %v196
  %v304 = vpack.c.bf16 %v207, %v202
  %v305 = vpack.c.bf16 %v208, %v203
  %v306 = vpack.c.bf16 %v209, %v204
  %v307 = vpack.c.bf16 %v210, %v205
  %v308 = vpack.c.bf16 %v211, %v206
  %v309 = vpack.c.bf16 %v217, %v212
  %v310 = vpack.c.bf16 %v218, %v213
  %v311 = vpack.c.bf16 %v219, %v214
  %v312 = vpack.c.bf16 %v220, %v215
  %v313 = vpack.c.bf16 %v221, %v216
  %v314 = vpack.c.bf16 %v227, %v222
  %v315 = vpack.c.bf16 %v228, %v223
  %v316 = vpack.c.bf16 %v229, %v224
  %v317 = vpack.c.bf16 %v230, %v225
  %v318 = vpack.c.bf16 %v231, %v226
  %v319 = vpack.c.bf16 %v237, %v232
  %v320 = vpack.c.bf16 %v238, %v233
  %v321 = vpack.c.bf16 %v239, %v234
  %v322 = vpack.c.bf16 %v240, %v235
  %v323 = vpack.c.bf16 %v241, %v236
  %v324 = vld [vmem:[%s2] sm:$0xf]
  %v325 = vld [vmem:[%s2 + $0x4] sm:$0xf]
  %v326 = vld [vmem:[%s2 + $0x8] sm:$0xf]
  %v327 = vld [vmem:[%s2 + $0xc] sm:$0xf]
  %v328 = vld [vmem:[%s2 + $0x10] sm:$0xf]
  %v329 = vld [vmem:[%s2 + $0x14] sm:$0xf]
  %v330 = vld [vmem:[%s2 + $0x18] sm:$0xf]
  %v331 = vld [vmem:[%s2 + $0x1c] sm:$0xf]
  %v332 = vld [vmem:[%s2 + $0x20] sm:$0xf]
  %v333 = vld [vmem:[%s2 + $0x24] sm:$0xf]
  %v334 = vld [vmem:[%s2 + $0x28] sm:$0xf]
  %v335 = vld [vmem:[%s2 + $0x2c] sm:$0xf]
  %v336 = vld [vmem:[%s2 + $0x30] sm:$0xf]
  %v337 = vld [vmem:[%s2 + $0x34] sm:$0xf]
  %v338 = vld [vmem:[%s2 + $0x38] sm:$0xf]
  %v339 = vld [vmem:[%s2 + $0x3c] sm:$0xf]
  %v340 = vld [vmem:[%s2 + $0x40] sm:$0xf]
  %v341 = vld [vmem:[%s2 + $0x44] sm:$0xf]
  %v342 = vld [vmem:[%s2 + $0x48] sm:$0xf]
  %v343 = vld [vmem:[%s2 + $0x4c] sm:$0xf]
  %v344 = vld [vmem:[%s2 + $0x50] sm:$0xf]
  %v345 = vld [vmem:[%s2 + $0x54] sm:$0xf]
  %v346 = vld [vmem:[%s2 + $0x58] sm:$0xf]
  %v347 = vld [vmem:[%s2 + $0x5c] sm:$0xf]
  %v348 = vld [vmem:[%s2 + $0x60] sm:$0xf]
  %v349 = vld [vmem:[%s2 + $0x64] sm:$0xf]
  %v350 = vld [vmem:[%s2 + $0x68] sm:$0xf]
  %v351 = vld [vmem:[%s2 + $0x6c] sm:$0xf]
  %v352 = vld [vmem:[%s2 + $0x70] sm:$0xf]
  %v353 = vld [vmem:[%s2 + $0x74] sm:$0xf]
  %v354 = vld [vmem:[%s2 + $0x78] sm:$0xf]
  %v355 = vld [vmem:[%s2 + $0x7c] sm:$0xf]
  %v356 = vld [vmem:[%s2 + $0x80] sm:$0xf]
  %v357 = vld [vmem:[%s2 + $0x84] sm:$0xf]
  %v358 = vld [vmem:[%s2 + $0x88] sm:$0xf]
  %v359 = vld [vmem:[%s2 + $0x8c] sm:$0xf]
  %v360 = vld [vmem:[%s2 + $0x90] sm:$0xf]
  %v361 = vld [vmem:[%s2 + $0x94] sm:$0xf]
  %v362 = vld [vmem:[%s2 + $0x98] sm:$0xf]
  %v363 = vld [vmem:[%s2 + $0x9c] sm:$0xf]
  %v364 = vld [vmem:[%s2 + $0xa0] sm:$0xf]
  %v365 = vld [vmem:[%s2 + $0xa4] sm:$0xf]
  %v366 = vld [vmem:[%s2 + $0xa8] sm:$0xf]
  %v367 = vld [vmem:[%s2 + $0xac] sm:$0xf]
  %v368 = vld [vmem:[%s2 + $0xb0] sm:$0xf]
  %v369 = vld [vmem:[%s2 + $0xb4] sm:$0xf]
  %v370 = vld [vmem:[%s2 + $0xb8] sm:$0xf]
  %v371 = vld [vmem:[%s2 + $0xbc] sm:$0xf]
  %v372 = vld [vmem:[%s2 + $0xc0] sm:$0xf]
  %v373 = vld [vmem:[%s2 + $0xc4] sm:$0xf]
  %v374 = vld [vmem:[%s2 + $0xc8] sm:$0xf]
  %v375 = vld [vmem:[%s2 + $0xcc] sm:$0xf]
  %v376 = vld [vmem:[%s2 + $0xd0] sm:$0xf]
  %v377 = vld [vmem:[%s2 + $0xd4] sm:$0xf]
  %v378 = vld [vmem:[%s2 + $0xd8] sm:$0xf]
  %v379 = vld [vmem:[%s2 + $0xdc] sm:$0xf]
  %v380 = vld [vmem:[%s2 + $0xe0] sm:$0xf]
  %v381 = vld [vmem:[%s2 + $0xe4] sm:$0xf]
  %v382 = vld [vmem:[%s2 + $0xe8] sm:$0xf]
  %v383 = vld [vmem:[%s2 + $0xec] sm:$0xf]
  %v384 = vld [vmem:[%s2 + $0xf0] sm:$0xf]
  %v385 = vld [vmem:[%s2 + $0xf4] sm:$0xf]
  %v386 = vld [vmem:[%s2 + $0xf8] sm:$0xf]
  %v387 = vld [vmem:[%s2 + $0xfc] sm:$0xf]
  %v388 = vld [vmem:[%s2 + $0x100] sm:$0xf]
  %v389 = vld [vmem:[%s2 + $0x104] sm:$0xf]
  %v390 = vld [vmem:[%s2 + $0x108] sm:$0xf]
  %v391 = vld [vmem:[%s2 + $0x10c] sm:$0xf]
  %v392 = vld [vmem:[%s2 + $0x110] sm:$0xf]
  %v393 = vld [vmem:[%s2 + $0x114] sm:$0xf]
  %v394 = vld [vmem:[%s2 + $0x118] sm:$0xf]
  %v395 = vld [vmem:[%s2 + $0x11c] sm:$0xf]
  %v396 = vld [vmem:[%s2 + $0x120] sm:$0xf]
  %v397 = vld [vmem:[%s2 + $0x124] sm:$0xf]
  %v398 = vld [vmem:[%s2 + $0x128] sm:$0xf]
  %v399 = vld [vmem:[%s2 + $0x12c] sm:$0xf]
  %v400 = vld [vmem:[%s2 + $0x130] sm:$0xf]
  %v401 = vld [vmem:[%s2 + $0x134] sm:$0xf]
  %v402 = vld [vmem:[%s2 + $0x138] sm:$0xf]
  %v403 = vld [vmem:[%s2 + $0x13c] sm:$0xf]
  %v484 = vunpack.c.l.b16 %v324
  %v485 = vunpack.c.l.b16 %v325
  %v486 = vunpack.c.l.b16 %v326
  %v487 = vunpack.c.l.b16 %v327
  %v488 = vunpack.c.l.b16 %v328
  %v489 = vunpack.c.l.b16 %v329
  %v490 = vunpack.c.l.b16 %v330
  %v491 = vunpack.c.l.b16 %v331
  %v492 = vunpack.c.l.b16 %v332
  %v493 = vunpack.c.l.b16 %v333
  %v494 = vunpack.c.l.b16 %v334
  %v495 = vunpack.c.l.b16 %v335
  %v496 = vunpack.c.l.b16 %v336
  %v497 = vunpack.c.l.b16 %v337
  %v498 = vunpack.c.l.b16 %v338
  %v499 = vunpack.c.l.b16 %v339
  %v500 = vunpack.c.l.b16 %v340
  %v501 = vunpack.c.l.b16 %v341
  %v502 = vunpack.c.l.b16 %v342
  %v503 = vunpack.c.l.b16 %v343
  %v504 = vunpack.c.l.b16 %v344
  %v505 = vunpack.c.l.b16 %v345
  %v506 = vunpack.c.l.b16 %v346
  %v507 = vunpack.c.l.b16 %v347
  %v508 = vunpack.c.l.b16 %v348
  %v509 = vunpack.c.l.b16 %v349
  %v510 = vunpack.c.l.b16 %v350
  %v511 = vunpack.c.l.b16 %v351
  %v512 = vunpack.c.l.b16 %v352
  %v513 = vunpack.c.l.b16 %v353
  %v514 = vunpack.c.l.b16 %v354
  %v515 = vunpack.c.l.b16 %v355
  %v516 = vunpack.c.l.b16 %v356
  %v517 = vunpack.c.l.b16 %v357
  %v518 = vunpack.c.l.b16 %v358
  %v519 = vunpack.c.l.b16 %v359
  %v520 = vunpack.c.l.b16 %v360
  %v521 = vunpack.c.l.b16 %v361
  %v522 = vunpack.c.l.b16 %v362
  %v523 = vunpack.c.l.b16 %v363
  %v524 = vunpack.c.l.b16 %v364
  %v525 = vunpack.c.l.b16 %v365
  %v526 = vunpack.c.l.b16 %v366
  %v527 = vunpack.c.l.b16 %v367
  %v528 = vunpack.c.l.b16 %v368
  %v529 = vunpack.c.l.b16 %v369
  %v530 = vunpack.c.l.b16 %v370
  %v531 = vunpack.c.l.b16 %v371
  %v532 = vunpack.c.l.b16 %v372
  %v533 = vunpack.c.l.b16 %v373
  %v534 = vunpack.c.l.b16 %v374
  %v535 = vunpack.c.l.b16 %v375
  %v536 = vunpack.c.l.b16 %v376
  %v537 = vunpack.c.l.b16 %v377
  %v538 = vunpack.c.l.b16 %v378
  %v539 = vunpack.c.l.b16 %v379
  %v540 = vunpack.c.l.b16 %v380
  %v541 = vunpack.c.l.b16 %v381
  %v542 = vunpack.c.l.b16 %v382
  %v543 = vunpack.c.l.b16 %v383
  %v544 = vunpack.c.l.b16 %v384
  %v545 = vunpack.c.l.b16 %v385
  %v546 = vunpack.c.l.b16 %v386
  %v547 = vunpack.c.l.b16 %v387
  %v548 = vunpack.c.l.b16 %v388
  %v549 = vunpack.c.l.b16 %v389
  %v550 = vunpack.c.l.b16 %v390
  %v551 = vunpack.c.l.b16 %v391
  %v552 = vunpack.c.l.b16 %v392
  %v553 = vunpack.c.l.b16 %v393
  %v554 = vunpack.c.l.b16 %v394
  %v555 = vunpack.c.l.b16 %v395
  %v556 = vunpack.c.l.b16 %v396
  %v557 = vunpack.c.l.b16 %v397
  %v558 = vunpack.c.l.b16 %v398
  %v559 = vunpack.c.l.b16 %v399
  %v560 = vunpack.c.l.b16 %v400
  %v561 = vunpack.c.l.b16 %v401
  %v562 = vunpack.c.l.b16 %v402
  %v563 = vunpack.c.l.b16 %v403
  %v564 = vpack.c.b16 %v485, %v484
  %v565 = vpack.c.b16 %v487, %v486
  %v566 = vpack.c.b16 %v489, %v488
  %v567 = vpack.c.b16 %v491, %v490
  %v568 = vpack.c.b16 %v493, %v492
  %v569 = vpack.c.b16 %v495, %v494
  %v570 = vpack.c.b16 %v497, %v496
  %v571 = vpack.c.b16 %v499, %v498
  %v572 = vpack.c.b16 %v501, %v500
  %v573 = vpack.c.b16 %v503, %v502
  %v574 = vpack.c.b16 %v505, %v504
  %v575 = vpack.c.b16 %v507, %v506
  %v576 = vpack.c.b16 %v509, %v508
  %v577 = vpack.c.b16 %v511, %v510
  %v578 = vpack.c.b16 %v513, %v512
  %v579 = vpack.c.b16 %v515, %v514
  %v580 = vpack.c.b16 %v517, %v516
  %v581 = vpack.c.b16 %v519, %v518
  %v582 = vpack.c.b16 %v521, %v520
  %v583 = vpack.c.b16 %v523, %v522
  %v584 = vpack.c.b16 %v525, %v524
  %v585 = vpack.c.b16 %v527, %v526
  %v586 = vpack.c.b16 %v529, %v528
  %v587 = vpack.c.b16 %v531, %v530
  %v588 = vpack.c.b16 %v533, %v532
  %v589 = vpack.c.b16 %v535, %v534
  %v590 = vpack.c.b16 %v537, %v536
  %v591 = vpack.c.b16 %v539, %v538
  %v592 = vpack.c.b16 %v541, %v540
  %v593 = vpack.c.b16 %v543, %v542
  %v594 = vpack.c.b16 %v545, %v544
  %v595 = vpack.c.b16 %v547, %v546
  %v596 = vpack.c.b16 %v549, %v548
  %v597 = vpack.c.b16 %v551, %v550
  %v598 = vpack.c.b16 %v553, %v552
  %v599 = vpack.c.b16 %v555, %v554
  %v600 = vpack.c.b16 %v557, %v556
  %v601 = vpack.c.b16 %v559, %v558
  %v602 = vpack.c.b16 %v561, %v560
  %v603 = vpack.c.b16 %v563, %v562
  %644 = vmatpush.bf16.msra.mxu0 %v571
  %645 = vmatpush.bf16.msra.mxu0 %v570
  %646 = vmatpush.bf16.msra.mxu0 %v569
  %647 = vmatpush.bf16.msra.mxu0 %v568
  %648 = vmatpush.bf16.msra.mxu0 %v567
  %649 = vmatpush.bf16.msra.mxu0 %v566
  %650 = vmatpush.bf16.msra.mxu0 %v565
  %651 = vmatpush.bf16.msra.mxu0 %v564
  %652 = vmatmul.bf16.gmra.mxu0 %v244
  %v653 = vpop.f32.mrf.mxu0
  %v654 = vadd.f32 0.0, %v653
  %v655 = vpop.f32.mrf.mxu0
  %v656 = vadd.f32 0.0, %v655
  %657 = vmatmul.bf16.gmra.mxu0 %v249
  %v658 = vpop.f32.mrf.mxu0
  %v659 = vadd.f32 0.0, %v658
  %v660 = vpop.f32.mrf.mxu0
  %v661 = vadd.f32 0.0, %v660
  %662 = vmatmul.bf16.gmra.mxu0 %v254
  %v663 = vpop.f32.mrf.mxu0
  %v664 = vadd.f32 0.0, %v663
  %v665 = vpop.f32.mrf.mxu0
  %v666 = vadd.f32 0.0, %v665
  %667 = vmatmul.bf16.gmra.mxu0 %v259
  %v668 = vpop.f32.mrf.mxu0
  %v669 = vadd.f32 0.0, %v668
  %v670 = vpop.f32.mrf.mxu0
  %v671 = vadd.f32 0.0, %v670
  %672 = vmatmul.bf16.gmra.mxu0 %v264
  %v673 = vpop.f32.mrf.mxu0
  %v674 = vadd.f32 0.0, %v673
  %v675 = vpop.f32.mrf.mxu0
  %v676 = vadd.f32 0.0, %v675
  %677 = vmatmul.bf16.gmra.mxu0 %v269
  %v678 = vpop.f32.mrf.mxu0
  %v679 = vadd.f32 0.0, %v678
  %v680 = vpop.f32.mrf.mxu0
  %v681 = vadd.f32 0.0, %v680
  %682 = vmatmul.bf16.gmra.mxu0 %v274
  %v683 = vpop.f32.mrf.mxu0
  %v684 = vadd.f32 0.0, %v683
  %v685 = vpop.f32.mrf.mxu0
  %v686 = vadd.f32 0.0, %v685
  %687 = vmatmul.bf16.gmra.mxu0 %v279
  %v688 = vpop.f32.mrf.mxu0
  %v689 = vadd.f32 0.0, %v688
  %v690 = vpop.f32.mrf.mxu0
  %v691 = vadd.f32 0.0, %v690
  %692 = vmatmul.bf16.gmra.mxu0 %v284
  %v693 = vpop.f32.mrf.mxu0
  %v694 = vadd.f32 0.0, %v693
  %v695 = vpop.f32.mrf.mxu0
  %v696 = vadd.f32 0.0, %v695
  %697 = vmatmul.bf16.gmra.mxu0 %v289
  %v698 = vpop.f32.mrf.mxu0
  %v699 = vadd.f32 0.0, %v698
  %v700 = vpop.f32.mrf.mxu0
  %v701 = vadd.f32 0.0, %v700
  %702 = vmatmul.bf16.gmra.mxu0 %v294
  %v703 = vpop.f32.mrf.mxu0
  %v704 = vadd.f32 0.0, %v703
  %v705 = vpop.f32.mrf.mxu0
  %v706 = vadd.f32 0.0, %v705
  %707 = vmatmul.bf16.gmra.mxu0 %v299
  %v708 = vpop.f32.mrf.mxu0
  %v709 = vadd.f32 0.0, %v708
  %v710 = vpop.f32.mrf.mxu0
  %v711 = vadd.f32 0.0, %v710
  %712 = vmatmul.bf16.gmra.mxu0 %v304
  %v713 = vpop.f32.mrf.mxu0
  %v714 = vadd.f32 0.0, %v713
  %v715 = vpop.f32.mrf.mxu0
  %v716 = vadd.f32 0.0, %v715
  %717 = vmatmul.bf16.gmra.mxu0 %v309
  %v718 = vpop.f32.mrf.mxu0
  %v719 = vadd.f32 0.0, %v718
  %v720 = vpop.f32.mrf.mxu0
  %v721 = vadd.f32 0.0, %v720
  %722 = vmatmul.bf16.gmra.mxu0 %v314
  %v723 = vpop.f32.mrf.mxu0
  %v724 = vadd.f32 0.0, %v723
  %v725 = vpop.f32.mrf.mxu0
  %v726 = vadd.f32 0.0, %v725
  %727 = vmatmul.bf16.gmra.mxu0 %v319
  %v728 = vpop.f32.mrf.mxu0
  %v729 = vadd.f32 0.0, %v728
  %v730 = vpop.f32.mrf.mxu0
  %v731 = vadd.f32 0.0, %v730
  %732 = vdwg.mxu0
  %733 = vmatpush.bf16.msra.mxu0 %v579
  %734 = vmatpush.bf16.msra.mxu0 %v578
  %735 = vmatpush.bf16.msra.mxu0 %v577
  %736 = vmatpush.bf16.msra.mxu0 %v576
  %737 = vmatpush.bf16.msra.mxu0 %v575
  %738 = vmatpush.bf16.msra.mxu0 %v574
  %739 = vmatpush.bf16.msra.mxu0 %v573
  %740 = vmatpush.bf16.msra.mxu0 %v572
  %741 = vmatmul.bf16.gmra.mxu0 %v245
  %v742 = vpop.f32.mrf.mxu0
  %v743 = vadd.f32 %v654, %v742
  %v744 = vpop.f32.mrf.mxu0
  %v745 = vadd.f32 %v656, %v744
  %746 = vmatmul.bf16.gmra.mxu0 %v250
  %v747 = vpop.f32.mrf.mxu0
  %v748 = vadd.f32 %v659, %v747
  %v749 = vpop.f32.mrf.mxu0
  %v750 = vadd.f32 %v661, %v749
  %751 = vmatmul.bf16.gmra.mxu0 %v255
  %v752 = vpop.f32.mrf.mxu0
  %v753 = vadd.f32 %v664, %v752
  %v754 = vpop.f32.mrf.mxu0
  %v755 = vadd.f32 %v666, %v754
  %756 = vmatmul.bf16.gmra.mxu0 %v260
  %v757 = vpop.f32.mrf.mxu0
  %v758 = vadd.f32 %v669, %v757
  %v759 = vpop.f32.mrf.mxu0
  %v760 = vadd.f32 %v671, %v759
  %761 = vmatmul.bf16.gmra.mxu0 %v265
  %v762 = vpop.f32.mrf.mxu0
  %v763 = vadd.f32 %v674, %v762
  %v764 = vpop.f32.mrf.mxu0
  %v765 = vadd.f32 %v676, %v764
  %766 = vmatmul.bf16.gmra.mxu0 %v270
  %v767 = vpop.f32.mrf.mxu0
  %v768 = vadd.f32 %v679, %v767
  %v769 = vpop.f32.mrf.mxu0
  %v770 = vadd.f32 %v681, %v769
  %771 = vmatmul.bf16.gmra.mxu0 %v275
  %v772 = vpop.f32.mrf.mxu0
  %v773 = vadd.f32 %v684, %v772
  %v774 = vpop.f32.mrf.mxu0
  %v775 = vadd.f32 %v686, %v774
  %776 = vmatmul.bf16.gmra.mxu0 %v280
  %v777 = vpop.f32.mrf.mxu0
  %v778 = vadd.f32 %v689, %v777
  %v779 = vpop.f32.mrf.mxu0
  %v780 = vadd.f32 %v691, %v779
  %781 = vmatmul.bf16.gmra.mxu0 %v285
  %v782 = vpop.f32.mrf.mxu0
  %v783 = vadd.f32 %v694, %v782
  %v784 = vpop.f32.mrf.mxu0
  %v785 = vadd.f32 %v696, %v784
  %786 = vmatmul.bf16.gmra.mxu0 %v290
  %v787 = vpop.f32.mrf.mxu0
  %v788 = vadd.f32 %v699, %v787
  %v789 = vpop.f32.mrf.mxu0
  %v790 = vadd.f32 %v701, %v789
  %791 = vmatmul.bf16.gmra.mxu0 %v295
  %v792 = vpop.f32.mrf.mxu0
  %v793 = vadd.f32 %v704, %v792
  %v794 = vpop.f32.mrf.mxu0
  %v795 = vadd.f32 %v706, %v794
  %796 = vmatmul.bf16.gmra.mxu0 %v300
  %v797 = vpop.f32.mrf.mxu0
  %v798 = vadd.f32 %v709, %v797
  %v799 = vpop.f32.mrf.mxu0
  %v800 = vadd.f32 %v711, %v799
  %801 = vmatmul.bf16.gmra.mxu0 %v305
  %v802 = vpop.f32.mrf.mxu0
  %v803 = vadd.f32 %v714, %v802
  %v804 = vpop.f32.mrf.mxu0
  %v805 = vadd.f32 %v716, %v804
  %806 = vmatmul.bf16.gmra.mxu0 %v310
  %v807 = vpop.f32.mrf.mxu0
  %v808 = vadd.f32 %v719, %v807
  %v809 = vpop.f32.mrf.mxu0
  %v810 = vadd.f32 %v721, %v809
  %811 = vmatmul.bf16.gmra.mxu0 %v315
  %v812 = vpop.f32.mrf.mxu0
  %v813 = vadd.f32 %v724, %v812
  %v814 = vpop.f32.mrf.mxu0
  %v815 = vadd.f32 %v726, %v814
  %816 = vmatmul.bf16.gmra.mxu0 %v320
  %v817 = vpop.f32.mrf.mxu0
  %v818 = vadd.f32 %v729, %v817
  %v819 = vpop.f32.mrf.mxu0
  %v820 = vadd.f32 %v731, %v819
  %821 = vdwg.mxu0
  %822 = vmatpush.bf16.msra.mxu0 %v587
  %823 = vmatpush.bf16.msra.mxu0 %v586
  %824 = vmatpush.bf16.msra.mxu0 %v585
  %825 = vmatpush.bf16.msra.mxu0 %v584
  %826 = vmatpush.bf16.msra.mxu0 %v583
  %827 = vmatpush.bf16.msra.mxu0 %v582
  %828 = vmatpush.bf16.msra.mxu0 %v581
  %829 = vmatpush.bf16.msra.mxu0 %v580
  %830 = vmatmul.bf16.gmra.mxu0 %v246
  %v831 = vpop.f32.mrf.mxu0
  %v832 = vadd.f32 %v743, %v831
  %v833 = vpop.f32.mrf.mxu0
  %v834 = vadd.f32 %v745, %v833
  %835 = vmatmul.bf16.gmra.mxu0 %v251
  %v836 = vpop.f32.mrf.mxu0
  %v837 = vadd.f32 %v748, %v836
  %v838 = vpop.f32.mrf.mxu0
  %v839 = vadd.f32 %v750, %v838
  %840 = vmatmul.bf16.gmra.mxu0 %v256
  %v841 = vpop.f32.mrf.mxu0
  %v842 = vadd.f32 %v753, %v841
  %v843 = vpop.f32.mrf.mxu0
  %v844 = vadd.f32 %v755, %v843
  %845 = vmatmul.bf16.gmra.mxu0 %v261
  %v846 = vpop.f32.mrf.mxu0
  %v847 = vadd.f32 %v758, %v846
  %v848 = vpop.f32.mrf.mxu0
  %v849 = vadd.f32 %v760, %v848
  %850 = vmatmul.bf16.gmra.mxu0 %v266
  %v851 = vpop.f32.mrf.mxu0
  %v852 = vadd.f32 %v763, %v851
  %v853 = vpop.f32.mrf.mxu0
  %v854 = vadd.f32 %v765, %v853
  %855 = vmatmul.bf16.gmra.mxu0 %v271
  %v856 = vpop.f32.mrf.mxu0
  %v857 = vadd.f32 %v768, %v856
  %v858 = vpop.f32.mrf.mxu0
  %v859 = vadd.f32 %v770, %v858
  %860 = vmatmul.bf16.gmra.mxu0 %v276
  %v861 = vpop.f32.mrf.mxu0
  %v862 = vadd.f32 %v773, %v861
  %v863 = vpop.f32.mrf.mxu0
  %v864 = vadd.f32 %v775, %v863
  %865 = vmatmul.bf16.gmra.mxu0 %v281
  %v866 = vpop.f32.mrf.mxu0
  %v867 = vadd.f32 %v778, %v866
  %v868 = vpop.f32.mrf.mxu0
  %v869 = vadd.f32 %v780, %v868
  %870 = vmatmul.bf16.gmra.mxu0 %v286
  %v871 = vpop.f32.mrf.mxu0
  %v872 = vadd.f32 %v783, %v871
  %v873 = vpop.f32.mrf.mxu0
  %v874 = vadd.f32 %v785, %v873
  %875 = vmatmul.bf16.gmra.mxu0 %v291
  %v876 = vpop.f32.mrf.mxu0
  %v877 = vadd.f32 %v788, %v876
  %v878 = vpop.f32.mrf.mxu0
  %v879 = vadd.f32 %v790, %v878
  %880 = vmatmul.bf16.gmra.mxu0 %v296
  %v881 = vpop.f32.mrf.mxu0
  %v882 = vadd.f32 %v793, %v881
  %v883 = vpop.f32.mrf.mxu0
  %v884 = vadd.f32 %v795, %v883
  %885 = vmatmul.bf16.gmra.mxu0 %v301
  %v886 = vpop.f32.mrf.mxu0
  %v887 = vadd.f32 %v798, %v886
  %v888 = vpop.f32.mrf.mxu0
  %v889 = vadd.f32 %v800, %v888
  %890 = vmatmul.bf16.gmra.mxu0 %v306
  %v891 = vpop.f32.mrf.mxu0
  %v892 = vadd.f32 %v803, %v891
  %v893 = vpop.f32.mrf.mxu0
  %v894 = vadd.f32 %v805, %v893
  %895 = vmatmul.bf16.gmra.mxu0 %v311
  %v896 = vpop.f32.mrf.mxu0
  %v897 = vadd.f32 %v808, %v896
  %v898 = vpop.f32.mrf.mxu0
  %v899 = vadd.f32 %v810, %v898
  %900 = vmatmul.bf16.gmra.mxu0 %v316
  %v901 = vpop.f32.mrf.mxu0
  %v902 = vadd.f32 %v813, %v901
  %v903 = vpop.f32.mrf.mxu0
  %v904 = vadd.f32 %v815, %v903
  %905 = vmatmul.bf16.gmra.mxu0 %v321
  %v906 = vpop.f32.mrf.mxu0
  %v907 = vadd.f32 %v818, %v906
  %v908 = vpop.f32.mrf.mxu0
  %v909 = vadd.f32 %v820, %v908
  %910 = vdwg.mxu0
  %911 = vmatpush.bf16.msra.mxu0 %v595
  %912 = vmatpush.bf16.msra.mxu0 %v594
  %913 = vmatpush.bf16.msra.mxu0 %v593
  %914 = vmatpush.bf16.msra.mxu0 %v592
  %915 = vmatpush.bf16.msra.mxu0 %v591
  %916 = vmatpush.bf16.msra.mxu0 %v590
  %917 = vmatpush.bf16.msra.mxu0 %v589
  %918 = vmatpush.bf16.msra.mxu0 %v588
  %919 = vmatmul.bf16.gmra.mxu0 %v247
  %v920 = vpop.f32.mrf.mxu0
  %v921 = vadd.f32 %v832, %v920
  %v922 = vpop.f32.mrf.mxu0
  %v923 = vadd.f32 %v834, %v922
  %924 = vmatmul.bf16.gmra.mxu0 %v252
  %v925 = vpop.f32.mrf.mxu0
  %v926 = vadd.f32 %v837, %v925
  %v927 = vpop.f32.mrf.mxu0
  %v928 = vadd.f32 %v839, %v927
  %929 = vmatmul.bf16.gmra.mxu0 %v257
  %v930 = vpop.f32.mrf.mxu0
  %v931 = vadd.f32 %v842, %v930
  %v932 = vpop.f32.mrf.mxu0
  %v933 = vadd.f32 %v844, %v932
  %934 = vmatmul.bf16.gmra.mxu0 %v262
  %v935 = vpop.f32.mrf.mxu0
  %v936 = vadd.f32 %v847, %v935
  %v937 = vpop.f32.mrf.mxu0
  %v938 = vadd.f32 %v849, %v937
  %939 = vmatmul.bf16.gmra.mxu0 %v267
  %v940 = vpop.f32.mrf.mxu0
  %v941 = vadd.f32 %v852, %v940
  %v942 = vpop.f32.mrf.mxu0
  %v943 = vadd.f32 %v854, %v942
  %944 = vmatmul.bf16.gmra.mxu0 %v272
  %v945 = vpop.f32.mrf.mxu0
  %v946 = vadd.f32 %v857, %v945
  %v947 = vpop.f32.mrf.mxu0
  %v948 = vadd.f32 %v859, %v947
  %949 = vmatmul.bf16.gmra.mxu0 %v277
  %v950 = vpop.f32.mrf.mxu0
  %v951 = vadd.f32 %v862, %v950
  %v952 = vpop.f32.mrf.mxu0
  %v953 = vadd.f32 %v864, %v952
  %954 = vmatmul.bf16.gmra.mxu0 %v282
  %v955 = vpop.f32.mrf.mxu0
  %v956 = vadd.f32 %v867, %v955
  %v957 = vpop.f32.mrf.mxu0
  %v958 = vadd.f32 %v869, %v957
  %959 = vmatmul.bf16.gmra.mxu0 %v287
  %v960 = vpop.f32.mrf.mxu0
  %v961 = vadd.f32 %v872, %v960
  %v962 = vpop.f32.mrf.mxu0
  %v963 = vadd.f32 %v874, %v962
  %964 = vmatmul.bf16.gmra.mxu0 %v292
  %v965 = vpop.f32.mrf.mxu0
  %v966 = vadd.f32 %v877, %v965
  %v967 = vpop.f32.mrf.mxu0
  %v968 = vadd.f32 %v879, %v967
  %969 = vmatmul.bf16.gmra.mxu0 %v297
  %v970 = vpop.f32.mrf.mxu0
  %v971 = vadd.f32 %v882, %v970
  %v972 = vpop.f32.mrf.mxu0
  %v973 = vadd.f32 %v884, %v972
  %974 = vmatmul.bf16.gmra.mxu0 %v302
  %v975 = vpop.f32.mrf.mxu0
  %v976 = vadd.f32 %v887, %v975
  %v977 = vpop.f32.mrf.mxu0
  %v978 = vadd.f32 %v889, %v977
  %979 = vmatmul.bf16.gmra.mxu0 %v307
  %v980 = vpop.f32.mrf.mxu0
  %v981 = vadd.f32 %v892, %v980
  %v982 = vpop.f32.mrf.mxu0
  %v983 = vadd.f32 %v894, %v982
  %984 = vmatmul.bf16.gmra.mxu0 %v312
  %v985 = vpop.f32.mrf.mxu0
  %v986 = vadd.f32 %v897, %v985
  %v987 = vpop.f32.mrf.mxu0
  %v988 = vadd.f32 %v899, %v987
  %989 = vmatmul.bf16.gmra.mxu0 %v317
  %v990 = vpop.f32.mrf.mxu0
  %v991 = vadd.f32 %v902, %v990
  %v992 = vpop.f32.mrf.mxu0
  %v993 = vadd.f32 %v904, %v992
  %994 = vmatmul.bf16.gmra.mxu0 %v322
  %v995 = vpop.f32.mrf.mxu0
  %v996 = vadd.f32 %v907, %v995
  %v997 = vpop.f32.mrf.mxu0
  %v998 = vadd.f32 %v909, %v997
  %999 = vdwg.mxu0
  %1000 = vmatpush.bf16.msra.mxu0 %v603
  %1001 = vmatpush.bf16.msra.mxu0 %v602
  %1002 = vmatpush.bf16.msra.mxu0 %v601
  %1003 = vmatpush.bf16.msra.mxu0 %v600
  %1004 = vmatpush.bf16.msra.mxu0 %v599
  %1005 = vmatpush.bf16.msra.mxu0 %v598
  %1006 = vmatpush.bf16.msra.mxu0 %v597
  %1007 = vmatpush.bf16.msra.mxu0 %v596
  %1008 = vmatmul.bf16.gmra.mxu0 %v248
  %v1009 = vpop.f32.mrf.mxu0
  %v1010 = vadd.f32 %v921, %v1009
  %v1011 = vpop.f32.mrf.mxu0
  %v1012 = vadd.f32 %v923, %v1011
  %1013 = vmatmul.bf16.gmra.mxu0 %v253
  %v1014 = vpop.f32.mrf.mxu0
  %v1015 = vadd.f32 %v926, %v1014
  %v1016 = vpop.f32.mrf.mxu0
  %v1017 = vadd.f32 %v928, %v1016
  %1018 = vmatmul.bf16.gmra.mxu0 %v258
  %v1019 = vpop.f32.mrf.mxu0
  %v1020 = vadd.f32 %v931, %v1019
  %v1021 = vpop.f32.mrf.mxu0
  %v1022 = vadd.f32 %v933, %v1021
  %1023 = vmatmul.bf16.gmra.mxu0 %v263
  %v1024 = vpop.f32.mrf.mxu0
  %v1025 = vadd.f32 %v936, %v1024
  %v1026 = vpop.f32.mrf.mxu0
  %v1027 = vadd.f32 %v938, %v1026
  %1028 = vmatmul.bf16.gmra.mxu0 %v268
  %v1029 = vpop.f32.mrf.mxu0
  %v1030 = vadd.f32 %v941, %v1029
  %v1031 = vpop.f32.mrf.mxu0
  %v1032 = vadd.f32 %v943, %v1031
  %1033 = vmatmul.bf16.gmra.mxu0 %v273
  %v1034 = vpop.f32.mrf.mxu0
  %v1035 = vadd.f32 %v946, %v1034
  %v1036 = vpop.f32.mrf.mxu0
  %v1037 = vadd.f32 %v948, %v1036
  %1038 = vmatmul.bf16.gmra.mxu0 %v278
  %v1039 = vpop.f32.mrf.mxu0
  %v1040 = vadd.f32 %v951, %v1039
  %v1041 = vpop.f32.mrf.mxu0
  %v1042 = vadd.f32 %v953, %v1041
  %1043 = vmatmul.bf16.gmra.mxu0 %v283
  %v1044 = vpop.f32.mrf.mxu0
  %v1045 = vadd.f32 %v956, %v1044
  %v1046 = vpop.f32.mrf.mxu0
  %v1047 = vadd.f32 %v958, %v1046
  %1048 = vmatmul.bf16.gmra.mxu0 %v288
  %v1049 = vpop.f32.mrf.mxu0
  %v1050 = vadd.f32 %v961, %v1049
  %v1051 = vpop.f32.mrf.mxu0
  %v1052 = vadd.f32 %v963, %v1051
  %1053 = vmatmul.bf16.gmra.mxu0 %v293
  %v1054 = vpop.f32.mrf.mxu0
  %v1055 = vadd.f32 %v966, %v1054
  %v1056 = vpop.f32.mrf.mxu0
  %v1057 = vadd.f32 %v968, %v1056
  %1058 = vmatmul.bf16.gmra.mxu0 %v298
  %v1059 = vpop.f32.mrf.mxu0
  %v1060 = vadd.f32 %v971, %v1059
  %v1061 = vpop.f32.mrf.mxu0
  %v1062 = vadd.f32 %v973, %v1061
  %1063 = vmatmul.bf16.gmra.mxu0 %v303
  %v1064 = vpop.f32.mrf.mxu0
  %v1065 = vadd.f32 %v976, %v1064
  %v1066 = vpop.f32.mrf.mxu0
  %v1067 = vadd.f32 %v978, %v1066
  %1068 = vmatmul.bf16.gmra.mxu0 %v308
  %v1069 = vpop.f32.mrf.mxu0
  %v1070 = vadd.f32 %v981, %v1069
  %v1071 = vpop.f32.mrf.mxu0
  %v1072 = vadd.f32 %v983, %v1071
  %1073 = vmatmul.bf16.gmra.mxu0 %v313
  %v1074 = vpop.f32.mrf.mxu0
  %v1075 = vadd.f32 %v986, %v1074
  %v1076 = vpop.f32.mrf.mxu0
  %v1077 = vadd.f32 %v988, %v1076
  %1078 = vmatmul.bf16.gmra.mxu0 %v318
  %v1079 = vpop.f32.mrf.mxu0
  %v1080 = vadd.f32 %v991, %v1079
  %v1081 = vpop.f32.mrf.mxu0
  %v1082 = vadd.f32 %v993, %v1081
  %1083 = vmatmul.bf16.gmra.mxu0 %v323
  %v1084 = vpop.f32.mrf.mxu0
  %v1085 = vadd.f32 %v996, %v1084
  %v1086 = vpop.f32.mrf.mxu0
  %v1087 = vadd.f32 %v998, %v1086
  %1088 = vdwg.mxu0
  %v1089 = vpack.c.bf16 %v1012, %v1010
  %v1090 = vpack.c.bf16 %v1017, %v1015
  %v1091 = vpack.c.bf16 %v1022, %v1020
  %v1092 = vpack.c.bf16 %v1027, %v1025
  %v1093 = vpack.c.bf16 %v1032, %v1030
  %v1094 = vpack.c.bf16 %v1037, %v1035
  %v1095 = vpack.c.bf16 %v1042, %v1040
  %v1096 = vpack.c.bf16 %v1047, %v1045
  %v1097 = vpack.c.bf16 %v1052, %v1050
  %v1098 = vpack.c.bf16 %v1057, %v1055
  %v1099 = vpack.c.bf16 %v1062, %v1060
  %v1100 = vpack.c.bf16 %v1067, %v1065
  %v1101 = vpack.c.bf16 %v1072, %v1070
  %v1102 = vpack.c.bf16 %v1077, %v1075
  %v1103 = vpack.c.bf16 %v1082, %v1080
  %v1104 = vpack.c.bf16 %v1087, %v1085
  %v1105 = vld [vmem:[%s3] sm:$0x1]
  %v1107 = vperm.slane %v1105, 0
  %v1141 = vunpack.c.l.b16 %v50
  %v1142 = vunpack.c.h.b16 %v50
  %v1143 = vunpack.c.l.b16 %v51
  %v1144 = vunpack.c.h.b16 %v51
  %v1145 = vunpack.c.l.b16 %v52
  %v1146 = vunpack.c.h.b16 %v52
  %v1147 = vunpack.c.l.b16 %v53
  %v1148 = vunpack.c.h.b16 %v53
  %v1149 = vunpack.c.l.b16 %v54
  %v1150 = vunpack.c.h.b16 %v54
  %v1151 = vunpack.c.l.b16 %v55
  %v1152 = vunpack.c.h.b16 %v55
  %v1153 = vunpack.c.l.b16 %v56
  %v1154 = vunpack.c.h.b16 %v56
  %v1155 = vunpack.c.l.b16 %v57
  %v1156 = vunpack.c.h.b16 %v57
  %v1157 = vunpack.c.l.b16 %v58
  %v1158 = vunpack.c.h.b16 %v58
  %v1159 = vunpack.c.l.b16 %v59
  %v1160 = vunpack.c.h.b16 %v59
  %v1161 = vunpack.c.l.b16 %v60
  %v1162 = vunpack.c.h.b16 %v60
  %v1163 = vunpack.c.l.b16 %v61
  %v1164 = vunpack.c.h.b16 %v61
  %v1165 = vunpack.c.l.b16 %v62
  %v1166 = vunpack.c.h.b16 %v62
  %v1167 = vunpack.c.l.b16 %v63
  %v1168 = vunpack.c.h.b16 %v63
  %v1169 = vunpack.c.l.b16 %v64
  %v1170 = vunpack.c.h.b16 %v64
  %v1171 = vunpack.c.l.b16 %v65
  %v1172 = vunpack.c.h.b16 %v65
  %v1173 = vunpack.c.l.b16 %v66
  %v1174 = vunpack.c.h.b16 %v66
  %v1175 = vunpack.c.l.b16 %v67
  %v1176 = vunpack.c.h.b16 %v67
  %v1177 = vunpack.c.l.b16 %v68
  %v1178 = vunpack.c.h.b16 %v68
  %v1179 = vunpack.c.l.b16 %v69
  %v1180 = vunpack.c.h.b16 %v69
  %v1181 = vunpack.c.l.b16 %v70
  %v1182 = vunpack.c.h.b16 %v70
  %v1183 = vunpack.c.l.b16 %v71
  %v1184 = vunpack.c.h.b16 %v71
  %v1185 = vunpack.c.l.b16 %v72
  %v1186 = vunpack.c.h.b16 %v72
  %v1187 = vunpack.c.l.b16 %v73
  %v1188 = vunpack.c.h.b16 %v73
  %v1189 = vunpack.c.l.b16 %v74
  %v1190 = vunpack.c.h.b16 %v74
  %v1191 = vunpack.c.l.b16 %v75
  %v1192 = vunpack.c.h.b16 %v75
  %v1193 = vunpack.c.l.b16 %v76
  %v1194 = vunpack.c.h.b16 %v76
  %v1195 = vunpack.c.l.b16 %v77
  %v1196 = vunpack.c.h.b16 %v77
  %v1197 = vunpack.c.l.b16 %v78
  %v1198 = vunpack.c.h.b16 %v78
  %v1199 = vunpack.c.l.b16 %v79
  %v1200 = vunpack.c.h.b16 %v79
  %v1201 = vunpack.c.l.b16 %v80
  %v1202 = vunpack.c.h.b16 %v80
  %v1203 = vunpack.c.l.b16 %v81
  %v1204 = vunpack.c.h.b16 %v81
  %v1205 = vpack.c.b16 %v1143, %v1141
  %v1206 = vpack.c.b16 %v1144, %v1142
  %v1207 = vpack.c.b16 %v1147, %v1145
  %v1208 = vpack.c.b16 %v1148, %v1146
  %v1209 = vpack.c.b16 %v1151, %v1149
  %v1210 = vpack.c.b16 %v1152, %v1150
  %v1211 = vpack.c.b16 %v1155, %v1153
  %v1212 = vpack.c.b16 %v1156, %v1154
  %v1213 = vpack.c.b16 %v1159, %v1157
  %v1214 = vpack.c.b16 %v1160, %v1158
  %v1215 = vpack.c.b16 %v1163, %v1161
  %v1216 = vpack.c.b16 %v1164, %v1162
  %v1217 = vpack.c.b16 %v1167, %v1165
  %v1218 = vpack.c.b16 %v1168, %v1166
  %v1219 = vpack.c.b16 %v1171, %v1169
  %v1220 = vpack.c.b16 %v1172, %v1170
  %v1221 = vpack.c.b16 %v1175, %v1173
  %v1222 = vpack.c.b16 %v1176, %v1174
  %v1223 = vpack.c.b16 %v1179, %v1177
  %v1224 = vpack.c.b16 %v1180, %v1178
  %v1225 = vpack.c.b16 %v1183, %v1181
  %v1226 = vpack.c.b16 %v1184, %v1182
  %v1227 = vpack.c.b16 %v1187, %v1185
  %v1228 = vpack.c.b16 %v1188, %v1186
  %v1229 = vpack.c.b16 %v1191, %v1189
  %v1230 = vpack.c.b16 %v1192, %v1190
  %v1231 = vpack.c.b16 %v1195, %v1193
  %v1232 = vpack.c.b16 %v1196, %v1194
  %v1233 = vpack.c.b16 %v1199, %v1197
  %v1234 = vpack.c.b16 %v1200, %v1198
  %v1235 = vpack.c.b16 %v1203, %v1201
  %v1236 = vpack.c.b16 %v1204, %v1202
  %1269 = vmatpush.bf16.msra.mxu0 %v1096
  %1270 = vmatpush.bf16.msra.mxu0 %v1095
  %1271 = vmatpush.bf16.msra.mxu0 %v1094
  %1272 = vmatpush.bf16.msra.mxu0 %v1093
  %1273 = vmatpush.bf16.msra.mxu0 %v1092
  %1274 = vmatpush.bf16.msra.mxu0 %v1091
  %1275 = vmatpush.bf16.msra.mxu0 %v1090
  %1276 = vmatpush.bf16.msra.mxu0 %v1089
  %1277 = vmatmul.bf16.gmra.mxu0 %v1205
  %v1278 = vpop.f32.mrf.mxu0
  %v1279 = vadd.f32 %v1107, %v1278
  %v1280 = vpop.f32.mrf.mxu0
  %v1281 = vadd.f32 %v1107, %v1280
  %1282 = vmatmul.bf16.gmra.mxu0 %v1207
  %v1283 = vpop.f32.mrf.mxu0
  %v1284 = vadd.f32 %v1107, %v1283
  %v1285 = vpop.f32.mrf.mxu0
  %v1286 = vadd.f32 %v1107, %v1285
  %1287 = vmatmul.bf16.gmra.mxu0 %v1209
  %v1288 = vpop.f32.mrf.mxu0
  %v1289 = vadd.f32 %v1107, %v1288
  %v1290 = vpop.f32.mrf.mxu0
  %v1291 = vadd.f32 %v1107, %v1290
  %1292 = vmatmul.bf16.gmra.mxu0 %v1211
  %v1293 = vpop.f32.mrf.mxu0
  %v1294 = vadd.f32 %v1107, %v1293
  %v1295 = vpop.f32.mrf.mxu0
  %v1296 = vadd.f32 %v1107, %v1295
  %1297 = vmatmul.bf16.gmra.mxu0 %v1213
  %v1298 = vpop.f32.mrf.mxu0
  %v1299 = vadd.f32 %v1107, %v1298
  %v1300 = vpop.f32.mrf.mxu0
  %v1301 = vadd.f32 %v1107, %v1300
  %1302 = vmatmul.bf16.gmra.mxu0 %v1215
  %v1303 = vpop.f32.mrf.mxu0
  %v1304 = vadd.f32 %v1107, %v1303
  %v1305 = vpop.f32.mrf.mxu0
  %v1306 = vadd.f32 %v1107, %v1305
  %1307 = vmatmul.bf16.gmra.mxu0 %v1217
  %v1308 = vpop.f32.mrf.mxu0
  %v1309 = vadd.f32 %v1107, %v1308
  %v1310 = vpop.f32.mrf.mxu0
  %v1311 = vadd.f32 %v1107, %v1310
  %1312 = vmatmul.bf16.gmra.mxu0 %v1219
  %v1313 = vpop.f32.mrf.mxu0
  %v1314 = vadd.f32 %v1107, %v1313
  %v1315 = vpop.f32.mrf.mxu0
  %v1316 = vadd.f32 %v1107, %v1315
  %1317 = vmatmul.bf16.gmra.mxu0 %v1221
  %v1318 = vpop.f32.mrf.mxu0
  %v1319 = vadd.f32 %v1107, %v1318
  %v1320 = vpop.f32.mrf.mxu0
  %v1321 = vadd.f32 %v1107, %v1320
  %1322 = vmatmul.bf16.gmra.mxu0 %v1223
  %v1323 = vpop.f32.mrf.mxu0
  %v1324 = vadd.f32 %v1107, %v1323
  %v1325 = vpop.f32.mrf.mxu0
  %v1326 = vadd.f32 %v1107, %v1325
  %1327 = vmatmul.bf16.gmra.mxu0 %v1225
  %v1328 = vpop.f32.mrf.mxu0
  %v1329 = vadd.f32 %v1107, %v1328
  %v1330 = vpop.f32.mrf.mxu0
  %v1331 = vadd.f32 %v1107, %v1330
  %1332 = vmatmul.bf16.gmra.mxu0 %v1227
  %v1333 = vpop.f32.mrf.mxu0
  %v1334 = vadd.f32 %v1107, %v1333
  %v1335 = vpop.f32.mrf.mxu0
  %v1336 = vadd.f32 %v1107, %v1335
  %1337 = vmatmul.bf16.gmra.mxu0 %v1229
  %v1338 = vpop.f32.mrf.mxu0
  %v1339 = vadd.f32 %v1107, %v1338
  %v1340 = vpop.f32.mrf.mxu0
  %v1341 = vadd.f32 %v1107, %v1340
  %1342 = vmatmul.bf16.gmra.mxu0 %v1231
  %v1343 = vpop.f32.mrf.mxu0
  %v1344 = vadd.f32 %v1107, %v1343
  %v1345 = vpop.f32.mrf.mxu0
  %v1346 = vadd.f32 %v1107, %v1345
  %1347 = vmatmul.bf16.gmra.mxu0 %v1233
  %v1348 = vpop.f32.mrf.mxu0
  %v1349 = vadd.f32 %v1107, %v1348
  %v1350 = vpop.f32.mrf.mxu0
  %v1351 = vadd.f32 %v1107, %v1350
  %1352 = vmatmul.bf16.gmra.mxu0 %v1235
  %v1353 = vpop.f32.mrf.mxu0
  %v1354 = vadd.f32 %v1107, %v1353
  %v1355 = vpop.f32.mrf.mxu0
  %v1356 = vadd.f32 %v1107, %v1355
  %1357 = vdwg.mxu0
  %1358 = vmatpush.bf16.msra.mxu0 %v1104
  %1359 = vmatpush.bf16.msra.mxu0 %v1103
  %1360 = vmatpush.bf16.msra.mxu0 %v1102
  %1361 = vmatpush.bf16.msra.mxu0 %v1101
  %1362 = vmatpush.bf16.msra.mxu0 %v1100
  %1363 = vmatpush.bf16.msra.mxu0 %v1099
  %1364 = vmatpush.bf16.msra.mxu0 %v1098
  %1365 = vmatpush.bf16.msra.mxu0 %v1097
  %1366 = vmatmul.bf16.gmra.mxu0 %v1206
  %v1367 = vpop.f32.mrf.mxu0
  %v1368 = vadd.f32 %v1279, %v1367
  %v1369 = vpop.f32.mrf.mxu0
  %v1370 = vadd.f32 %v1281, %v1369
  %1371 = vmatmul.bf16.gmra.mxu0 %v1208
  %v1372 = vpop.f32.mrf.mxu0
  %v1373 = vadd.f32 %v1284, %v1372
  %v1374 = vpop.f32.mrf.mxu0
  %v1375 = vadd.f32 %v1286, %v1374
  %1376 = vmatmul.bf16.gmra.mxu0 %v1210
  %v1377 = vpop.f32.mrf.mxu0
  %v1378 = vadd.f32 %v1289, %v1377
  %v1379 = vpop.f32.mrf.mxu0
  %v1380 = vadd.f32 %v1291, %v1379
  %1381 = vmatmul.bf16.gmra.mxu0 %v1212
  %v1382 = vpop.f32.mrf.mxu0
  %v1383 = vadd.f32 %v1294, %v1382
  %v1384 = vpop.f32.mrf.mxu0
  %v1385 = vadd.f32 %v1296, %v1384
  %1386 = vmatmul.bf16.gmra.mxu0 %v1214
  %v1387 = vpop.f32.mrf.mxu0
  %v1388 = vadd.f32 %v1299, %v1387
  %v1389 = vpop.f32.mrf.mxu0
  %v1390 = vadd.f32 %v1301, %v1389
  %1391 = vmatmul.bf16.gmra.mxu0 %v1216
  %v1392 = vpop.f32.mrf.mxu0
  %v1393 = vadd.f32 %v1304, %v1392
  %v1394 = vpop.f32.mrf.mxu0
  %v1395 = vadd.f32 %v1306, %v1394
  %1396 = vmatmul.bf16.gmra.mxu0 %v1218
  %v1397 = vpop.f32.mrf.mxu0
  %v1398 = vadd.f32 %v1309, %v1397
  %v1399 = vpop.f32.mrf.mxu0
  %v1400 = vadd.f32 %v1311, %v1399
  %1401 = vmatmul.bf16.gmra.mxu0 %v1220
  %v1402 = vpop.f32.mrf.mxu0
  %v1403 = vadd.f32 %v1314, %v1402
  %v1404 = vpop.f32.mrf.mxu0
  %v1405 = vadd.f32 %v1316, %v1404
  %1406 = vmatmul.bf16.gmra.mxu0 %v1222
  %v1407 = vpop.f32.mrf.mxu0
  %v1408 = vadd.f32 %v1319, %v1407
  %v1409 = vpop.f32.mrf.mxu0
  %v1410 = vadd.f32 %v1321, %v1409
  %1411 = vmatmul.bf16.gmra.mxu0 %v1224
  %v1412 = vpop.f32.mrf.mxu0
  %v1413 = vadd.f32 %v1324, %v1412
  %v1414 = vpop.f32.mrf.mxu0
  %v1415 = vadd.f32 %v1326, %v1414
  %1416 = vmatmul.bf16.gmra.mxu0 %v1226
  %v1417 = vpop.f32.mrf.mxu0
  %v1418 = vadd.f32 %v1329, %v1417
  %v1419 = vpop.f32.mrf.mxu0
  %v1420 = vadd.f32 %v1331, %v1419
  %1421 = vmatmul.bf16.gmra.mxu0 %v1228
  %v1422 = vpop.f32.mrf.mxu0
  %v1423 = vadd.f32 %v1334, %v1422
  %v1424 = vpop.f32.mrf.mxu0
  %v1425 = vadd.f32 %v1336, %v1424
  %1426 = vmatmul.bf16.gmra.mxu0 %v1230
  %v1427 = vpop.f32.mrf.mxu0
  %v1428 = vadd.f32 %v1339, %v1427
  %v1429 = vpop.f32.mrf.mxu0
  %v1430 = vadd.f32 %v1341, %v1429
  %1431 = vmatmul.bf16.gmra.mxu0 %v1232
  %v1432 = vpop.f32.mrf.mxu0
  %v1433 = vadd.f32 %v1344, %v1432
  %v1434 = vpop.f32.mrf.mxu0
  %v1435 = vadd.f32 %v1346, %v1434
  %1436 = vmatmul.bf16.gmra.mxu0 %v1234
  %v1437 = vpop.f32.mrf.mxu0
  %v1438 = vadd.f32 %v1349, %v1437
  %v1439 = vpop.f32.mrf.mxu0
  %v1440 = vadd.f32 %v1351, %v1439
  %1441 = vmatmul.bf16.gmra.mxu0 %v1236
  %v1442 = vpop.f32.mrf.mxu0
  %v1443 = vadd.f32 %v1354, %v1442
  %v1444 = vpop.f32.mrf.mxu0
  %v1445 = vadd.f32 %v1356, %v1444
  %1446 = vdwg.mxu0
  %v1447 = vmax.f32 %v1368, 0.0
  %v1448 = vmax.f32 %v1370, 0.0
  %v1449 = vmax.f32 %v1373, 0.0
  %v1450 = vmax.f32 %v1375, 0.0
  %v1451 = vmax.f32 %v1378, 0.0
  %v1452 = vmax.f32 %v1380, 0.0
  %v1453 = vmax.f32 %v1383, 0.0
  %v1454 = vmax.f32 %v1385, 0.0
  %v1455 = vmax.f32 %v1388, 0.0
  %v1456 = vmax.f32 %v1390, 0.0
  %v1457 = vmax.f32 %v1393, 0.0
  %v1458 = vmax.f32 %v1395, 0.0
  %v1459 = vmax.f32 %v1398, 0.0
  %v1460 = vmax.f32 %v1400, 0.0
  %v1461 = vmax.f32 %v1403, 0.0
  %v1462 = vmax.f32 %v1405, 0.0
  %v1463 = vmax.f32 %v1408, 0.0
  %v1464 = vmax.f32 %v1410, 0.0
  %v1465 = vmax.f32 %v1413, 0.0
  %v1466 = vmax.f32 %v1415, 0.0
  %v1467 = vmax.f32 %v1418, 0.0
  %v1468 = vmax.f32 %v1420, 0.0
  %v1469 = vmax.f32 %v1423, 0.0
  %v1470 = vmax.f32 %v1425, 0.0
  %v1471 = vmax.f32 %v1428, 0.0
  %v1472 = vmax.f32 %v1430, 0.0
  %v1473 = vmax.f32 %v1433, 0.0
  %v1474 = vmax.f32 %v1435, 0.0
  %v1475 = vmax.f32 %v1438, 0.0
  %v1476 = vmax.f32 %v1440, 0.0
  %v1477 = vmax.f32 %v1443, 0.0
  %v1478 = vmax.f32 %v1445, 0.0
  %1479 = vmatpush.msra.mxu0 %v1462
  %1480 = vmatpush.msra.mxu0 %v1461
  %1481 = vmatpush.msra.mxu0 %v1460
  %1482 = vmatpush.msra.mxu0 %v1459
  %1483 = vmatpush.msra.mxu0 %v1458
  %1484 = vmatpush.msra.mxu0 %v1457
  %1485 = vmatpush.msra.mxu0 %v1456
  %1486 = vmatpush.msra.mxu0 %v1455
  %1487 = vmatpush.msra.mxu0 %v1454
  %1488 = vmatpush.msra.mxu0 %v1453
  %1489 = vmatpush.msra.mxu0 %v1452
  %1490 = vmatpush.msra.mxu0 %v1451
  %1491 = vmatpush.msra.mxu0 %v1450
  %1492 = vmatpush.msra.mxu0 %v1449
  %1493 = vmatpush.msra.mxu0 %v1448
  %1494 = vmatpush.msra.mxu0 %v1447
  %1495 = vmatmul.f32.gmra.mxu0 %v242
  %v1496 = vpop.f32.mrf.mxu0
  %v1497 = vadd.f32 0.0, %v1496
  %1498 = vdwg.mxu0
  %1499 = vmatpush.msra.mxu0 %v1478
  %1500 = vmatpush.msra.mxu0 %v1477
  %1501 = vmatpush.msra.mxu0 %v1476
  %1502 = vmatpush.msra.mxu0 %v1475
  %1503 = vmatpush.msra.mxu0 %v1474
  %1504 = vmatpush.msra.mxu0 %v1473
  %1505 = vmatpush.msra.mxu0 %v1472
  %1506 = vmatpush.msra.mxu0 %v1471
  %1507 = vmatpush.msra.mxu0 %v1470
  %1508 = vmatpush.msra.mxu0 %v1469
  %1509 = vmatpush.msra.mxu0 %v1468
  %1510 = vmatpush.msra.mxu0 %v1467
  %1511 = vmatpush.msra.mxu0 %v1466
  %1512 = vmatpush.msra.mxu0 %v1465
  %1513 = vmatpush.msra.mxu0 %v1464
  %1514 = vmatpush.msra.mxu0 %v1463
  %1515 = vmatmul.f32.gmra.mxu0 %v243
  %v1516 = vpop.f32.mrf.mxu0
  %v1517 = vadd.f32 %v1497, %v1516
  %1518 = vdwg.mxu0
  %v1519 = vpack.c.bf16 %v1448, %v1447
  %v1520 = vpack.c.bf16 %v1450, %v1449
  %v1521 = vpack.c.bf16 %v1452, %v1451
  %v1522 = vpack.c.bf16 %v1454, %v1453
  %v1523 = vpack.c.bf16 %v1456, %v1455
  %v1524 = vpack.c.bf16 %v1458, %v1457
  %v1525 = vpack.c.bf16 %v1460, %v1459
  %v1526 = vpack.c.bf16 %v1462, %v1461
  %v1527 = vpack.c.bf16 %v1464, %v1463
  %v1528 = vpack.c.bf16 %v1466, %v1465
  %v1529 = vpack.c.bf16 %v1468, %v1467
  %v1530 = vpack.c.bf16 %v1470, %v1469
  %v1531 = vpack.c.bf16 %v1472, %v1471
  %v1532 = vpack.c.bf16 %v1474, %v1473
  %v1533 = vpack.c.bf16 %v1476, %v1475
  %v1534 = vpack.c.bf16 %v1478, %v1477
  %v1535 = vld [vmem:[%s4] sm:$0xf]
  %v1536 = vld [vmem:[%s4 + $0x4] sm:$0xf]
  %v1537 = vld [vmem:[%s4 + $0x8] sm:$0xf]
  %v1538 = vld [vmem:[%s4 + $0xc] sm:$0xf]
  %v1539 = vld [vmem:[%s4 + $0x10] sm:$0xf]
  %v1540 = vld [vmem:[%s4 + $0x14] sm:$0xf]
  %v1541 = vld [vmem:[%s4 + $0x18] sm:$0xf]
  %v1542 = vld [vmem:[%s4 + $0x1c] sm:$0xf]
  %v1543 = vld [vmem:[%s4 + $0x20] sm:$0xf]
  %v1544 = vld [vmem:[%s4 + $0x24] sm:$0xf]
  %v1545 = vld [vmem:[%s4 + $0x28] sm:$0xf]
  %v1546 = vld [vmem:[%s4 + $0x2c] sm:$0xf]
  %v1547 = vld [vmem:[%s4 + $0x30] sm:$0xf]
  %v1548 = vld [vmem:[%s4 + $0x34] sm:$0xf]
  %v1549 = vld [vmem:[%s4 + $0x38] sm:$0xf]
  %v1550 = vld [vmem:[%s4 + $0x3c] sm:$0xf]
  %v1567 = vunpack.c.l.b16 %v1535
  %v1568 = vunpack.c.l.b16 %v1536
  %v1569 = vunpack.c.l.b16 %v1537
  %v1570 = vunpack.c.l.b16 %v1538
  %v1571 = vunpack.c.l.b16 %v1539
  %v1572 = vunpack.c.l.b16 %v1540
  %v1573 = vunpack.c.l.b16 %v1541
  %v1574 = vunpack.c.l.b16 %v1542
  %v1575 = vunpack.c.l.b16 %v1543
  %v1576 = vunpack.c.l.b16 %v1544
  %v1577 = vunpack.c.l.b16 %v1545
  %v1578 = vunpack.c.l.b16 %v1546
  %v1579 = vunpack.c.l.b16 %v1547
  %v1580 = vunpack.c.l.b16 %v1548
  %v1581 = vunpack.c.l.b16 %v1549
  %v1582 = vunpack.c.l.b16 %v1550
  %v1583 = vpack.c.b16 %v1568, %v1567
  %v1584 = vpack.c.b16 %v1570, %v1569
  %v1585 = vpack.c.b16 %v1572, %v1571
  %v1586 = vpack.c.b16 %v1574, %v1573
  %v1587 = vpack.c.b16 %v1576, %v1575
  %v1588 = vpack.c.b16 %v1578, %v1577
  %v1589 = vpack.c.b16 %v1580, %v1579
  %v1590 = vpack.c.b16 %v1582, %v1581
  %1599 = vmatpush.bf16.msra.mxu0 %v1590
  %1600 = vmatpush.bf16.msra.mxu0 %v1589
  %1601 = vmatpush.bf16.msra.mxu0 %v1588
  %1602 = vmatpush.bf16.msra.mxu0 %v1587
  %1603 = vmatpush.bf16.msra.mxu0 %v1586
  %1604 = vmatpush.bf16.msra.mxu0 %v1585
  %1605 = vmatpush.bf16.msra.mxu0 %v1584
  %1606 = vmatpush.bf16.msra.mxu0 %v1583
  %1607 = vmatmul.bf16.gmra.mxu0 %v1519
  %v1608 = vpop.f32.mrf.mxu0
  %v1609 = vadd.f32 0.0, %v1608
  %v1610 = vpop.f32.mrf.mxu0
  %v1611 = vadd.f32 0.0, %v1610
  %1612 = vmatmul.bf16.gmra.mxu0 %v1520
  %v1613 = vpop.f32.mrf.mxu0
  %v1614 = vadd.f32 0.0, %v1613
  %v1615 = vpop.f32.mrf.mxu0
  %v1616 = vadd.f32 0.0, %v1615
  %1617 = vmatmul.bf16.gmra.mxu0 %v1521
  %v1618 = vpop.f32.mrf.mxu0
  %v1619 = vadd.f32 0.0, %v1618
  %v1620 = vpop.f32.mrf.mxu0
  %v1621 = vadd.f32 0.0, %v1620
  %1622 = vmatmul.bf16.gmra.mxu0 %v1522
  %v1623 = vpop.f32.mrf.mxu0
  %v1624 = vadd.f32 0.0, %v1623
  %v1625 = vpop.f32.mrf.mxu0
  %v1626 = vadd.f32 0.0, %v1625
  %1627 = vmatmul.bf16.gmra.mxu0 %v1523
  %v1628 = vpop.f32.mrf.mxu0
  %v1629 = vadd.f32 0.0, %v1628
  %v1630 = vpop.f32.mrf.mxu0
  %v1631 = vadd.f32 0.0, %v1630
  %1632 = vmatmul.bf16.gmra.mxu0 %v1524
  %v1633 = vpop.f32.mrf.mxu0
  %v1634 = vadd.f32 0.0, %v1633
  %v1635 = vpop.f32.mrf.mxu0
  %v1636 = vadd.f32 0.0, %v1635
  %1637 = vmatmul.bf16.gmra.mxu0 %v1525
  %v1638 = vpop.f32.mrf.mxu0
  %v1639 = vadd.f32 0.0, %v1638
  %v1640 = vpop.f32.mrf.mxu0
  %v1641 = vadd.f32 0.0, %v1640
  %1642 = vmatmul.bf16.gmra.mxu0 %v1526
  %v1643 = vpop.f32.mrf.mxu0
  %v1644 = vadd.f32 0.0, %v1643
  %v1645 = vpop.f32.mrf.mxu0
  %v1646 = vadd.f32 0.0, %v1645
  %1647 = vmatmul.bf16.gmra.mxu0 %v1527
  %v1648 = vpop.f32.mrf.mxu0
  %v1649 = vadd.f32 0.0, %v1648
  %v1650 = vpop.f32.mrf.mxu0
  %v1651 = vadd.f32 0.0, %v1650
  %1652 = vmatmul.bf16.gmra.mxu0 %v1528
  %v1653 = vpop.f32.mrf.mxu0
  %v1654 = vadd.f32 0.0, %v1653
  %v1655 = vpop.f32.mrf.mxu0
  %v1656 = vadd.f32 0.0, %v1655
  %1657 = vmatmul.bf16.gmra.mxu0 %v1529
  %v1658 = vpop.f32.mrf.mxu0
  %v1659 = vadd.f32 0.0, %v1658
  %v1660 = vpop.f32.mrf.mxu0
  %v1661 = vadd.f32 0.0, %v1660
  %1662 = vmatmul.bf16.gmra.mxu0 %v1530
  %v1663 = vpop.f32.mrf.mxu0
  %v1664 = vadd.f32 0.0, %v1663
  %v1665 = vpop.f32.mrf.mxu0
  %v1666 = vadd.f32 0.0, %v1665
  %1667 = vmatmul.bf16.gmra.mxu0 %v1531
  %v1668 = vpop.f32.mrf.mxu0
  %v1669 = vadd.f32 0.0, %v1668
  %v1670 = vpop.f32.mrf.mxu0
  %v1671 = vadd.f32 0.0, %v1670
  %1672 = vmatmul.bf16.gmra.mxu0 %v1532
  %v1673 = vpop.f32.mrf.mxu0
  %v1674 = vadd.f32 0.0, %v1673
  %v1675 = vpop.f32.mrf.mxu0
  %v1676 = vadd.f32 0.0, %v1675
  %1677 = vmatmul.bf16.gmra.mxu0 %v1533
  %v1678 = vpop.f32.mrf.mxu0
  %v1679 = vadd.f32 0.0, %v1678
  %v1680 = vpop.f32.mrf.mxu0
  %v1681 = vadd.f32 0.0, %v1680
  %1682 = vmatmul.bf16.gmra.mxu0 %v1534
  %v1683 = vpop.f32.mrf.mxu0
  %v1684 = vadd.f32 0.0, %v1683
  %v1685 = vpop.f32.mrf.mxu0
  %v1686 = vadd.f32 0.0, %v1685
  %1687 = vdwg.mxu0
  %v1688 = vpack.c.bf16 %v1611, %v1609
  %v1689 = vpack.c.bf16 %v1616, %v1614
  %v1690 = vpack.c.bf16 %v1621, %v1619
  %v1691 = vpack.c.bf16 %v1626, %v1624
  %v1692 = vpack.c.bf16 %v1631, %v1629
  %v1693 = vpack.c.bf16 %v1636, %v1634
  %v1694 = vpack.c.bf16 %v1641, %v1639
  %v1695 = vpack.c.bf16 %v1646, %v1644
  %v1696 = vpack.c.bf16 %v1651, %v1649
  %v1697 = vpack.c.bf16 %v1656, %v1654
  %v1698 = vpack.c.bf16 %v1661, %v1659
  %v1699 = vpack.c.bf16 %v1666, %v1664
  %v1700 = vpack.c.bf16 %v1671, %v1669
  %v1701 = vpack.c.bf16 %v1676, %v1674
  %v1702 = vpack.c.bf16 %v1681, %v1679
  %v1703 = vpack.c.bf16 %v1686, %v1684
  %v1704 = vld [vmem:[%s5] sm:$0x1]
  %v1706 = vperm.slane %v1704, 0
  %1708 = vmatpush.bf16.msra.mxu0 %v1695
  %1709 = vmatpush.bf16.msra.mxu0 %v1694
  %1710 = vmatpush.bf16.msra.mxu0 %v1693
  %1711 = vmatpush.bf16.msra.mxu0 %v1692
  %1712 = vmatpush.bf16.msra.mxu0 %v1691
  %1713 = vmatpush.bf16.msra.mxu0 %v1690
  %1714 = vmatpush.bf16.msra.mxu0 %v1689
  %1715 = vmatpush.bf16.msra.mxu0 %v1688
  %1716 = vmatmul.bf16.gmra.mxu0 %v1205
  %v1717 = vpop.f32.mrf.mxu0
  %v1718 = vadd.f32 %v1706, %v1717
  %v1719 = vpop.f32.mrf.mxu0
  %v1720 = vadd.f32 %v1706, %v1719
  %1721 = vmatmul.bf16.gmra.mxu0 %v1207
  %v1722 = vpop.f32.mrf.mxu0
  %v1723 = vadd.f32 %v1706, %v1722
  %v1724 = vpop.f32.mrf.mxu0
  %v1725 = vadd.f32 %v1706, %v1724
  %1726 = vmatmul.bf16.gmra.mxu0 %v1209
  %v1727 = vpop.f32.mrf.mxu0
  %v1728 = vadd.f32 %v1706, %v1727
  %v1729 = vpop.f32.mrf.mxu0
  %v1730 = vadd.f32 %v1706, %v1729
  %1731 = vmatmul.bf16.gmra.mxu0 %v1211
  %v1732 = vpop.f32.mrf.mxu0
  %v1733 = vadd.f32 %v1706, %v1732
  %v1734 = vpop.f32.mrf.mxu0
  %v1735 = vadd.f32 %v1706, %v1734
  %1736 = vmatmul.bf16.gmra.mxu0 %v1213
  %v1737 = vpop.f32.mrf.mxu0
  %v1738 = vadd.f32 %v1706, %v1737
  %v1739 = vpop.f32.mrf.mxu0
  %v1740 = vadd.f32 %v1706, %v1739
  %1741 = vmatmul.bf16.gmra.mxu0 %v1215
  %v1742 = vpop.f32.mrf.mxu0
  %v1743 = vadd.f32 %v1706, %v1742
  %v1744 = vpop.f32.mrf.mxu0
  %v1745 = vadd.f32 %v1706, %v1744
  %1746 = vmatmul.bf16.gmra.mxu0 %v1217
  %v1747 = vpop.f32.mrf.mxu0
  %v1748 = vadd.f32 %v1706, %v1747
  %v1749 = vpop.f32.mrf.mxu0
  %v1750 = vadd.f32 %v1706, %v1749
  %1751 = vmatmul.bf16.gmra.mxu0 %v1219
  %v1752 = vpop.f32.mrf.mxu0
  %v1753 = vadd.f32 %v1706, %v1752
  %v1754 = vpop.f32.mrf.mxu0
  %v1755 = vadd.f32 %v1706, %v1754
  %1756 = vmatmul.bf16.gmra.mxu0 %v1221
  %v1757 = vpop.f32.mrf.mxu0
  %v1758 = vadd.f32 %v1706, %v1757
  %v1759 = vpop.f32.mrf.mxu0
  %v1760 = vadd.f32 %v1706, %v1759
  %1761 = vmatmul.bf16.gmra.mxu0 %v1223
  %v1762 = vpop.f32.mrf.mxu0
  %v1763 = vadd.f32 %v1706, %v1762
  %v1764 = vpop.f32.mrf.mxu0
  %v1765 = vadd.f32 %v1706, %v1764
  %1766 = vmatmul.bf16.gmra.mxu0 %v1225
  %v1767 = vpop.f32.mrf.mxu0
  %v1768 = vadd.f32 %v1706, %v1767
  %v1769 = vpop.f32.mrf.mxu0
  %v1770 = vadd.f32 %v1706, %v1769
  %1771 = vmatmul.bf16.gmra.mxu0 %v1227
  %v1772 = vpop.f32.mrf.mxu0
  %v1773 = vadd.f32 %v1706, %v1772
  %v1774 = vpop.f32.mrf.mxu0
  %v1775 = vadd.f32 %v1706, %v1774
  %1776 = vmatmul.bf16.gmra.mxu0 %v1229
  %v1777 = vpop.f32.mrf.mxu0
  %v1778 = vadd.f32 %v1706, %v1777
  %v1779 = vpop.f32.mrf.mxu0
  %v1780 = vadd.f32 %v1706, %v1779
  %1781 = vmatmul.bf16.gmra.mxu0 %v1231
  %v1782 = vpop.f32.mrf.mxu0
  %v1783 = vadd.f32 %v1706, %v1782
  %v1784 = vpop.f32.mrf.mxu0
  %v1785 = vadd.f32 %v1706, %v1784
  %1786 = vmatmul.bf16.gmra.mxu0 %v1233
  %v1787 = vpop.f32.mrf.mxu0
  %v1788 = vadd.f32 %v1706, %v1787
  %v1789 = vpop.f32.mrf.mxu0
  %v1790 = vadd.f32 %v1706, %v1789
  %1791 = vmatmul.bf16.gmra.mxu0 %v1235
  %v1792 = vpop.f32.mrf.mxu0
  %v1793 = vadd.f32 %v1706, %v1792
  %v1794 = vpop.f32.mrf.mxu0
  %v1795 = vadd.f32 %v1706, %v1794
  %1796 = vdwg.mxu0
  %1797 = vmatpush.bf16.msra.mxu0 %v1703
  %1798 = vmatpush.bf16.msra.mxu0 %v1702
  %1799 = vmatpush.bf16.msra.mxu0 %v1701
  %1800 = vmatpush.bf16.msra.mxu0 %v1700
  %1801 = vmatpush.bf16.msra.mxu0 %v1699
  %1802 = vmatpush.bf16.msra.mxu0 %v1698
  %1803 = vmatpush.bf16.msra.mxu0 %v1697
  %1804 = vmatpush.bf16.msra.mxu0 %v1696
  %1805 = vmatmul.bf16.gmra.mxu0 %v1206
  %v1806 = vpop.f32.mrf.mxu0
  %v1807 = vadd.f32 %v1718, %v1806
  %v1808 = vpop.f32.mrf.mxu0
  %v1809 = vadd.f32 %v1720, %v1808
  %1810 = vmatmul.bf16.gmra.mxu0 %v1208
  %v1811 = vpop.f32.mrf.mxu0
  %v1812 = vadd.f32 %v1723, %v1811
  %v1813 = vpop.f32.mrf.mxu0
  %v1814 = vadd.f32 %v1725, %v1813
  %1815 = vmatmul.bf16.gmra.mxu0 %v1210
  %v1816 = vpop.f32.mrf.mxu0
  %v1817 = vadd.f32 %v1728, %v1816
  %v1818 = vpop.f32.mrf.mxu0
  %v1819 = vadd.f32 %v1730, %v1818
  %1820 = vmatmul.bf16.gmra.mxu0 %v1212
  %v1821 = vpop.f32.mrf.mxu0
  %v1822 = vadd.f32 %v1733, %v1821
  %v1823 = vpop.f32.mrf.mxu0
  %v1824 = vadd.f32 %v1735, %v1823
  %1825 = vmatmul.bf16.gmra.mxu0 %v1214
  %v1826 = vpop.f32.mrf.mxu0
  %v1827 = vadd.f32 %v1738, %v1826
  %v1828 = vpop.f32.mrf.mxu0
  %v1829 = vadd.f32 %v1740, %v1828
  %1830 = vmatmul.bf16.gmra.mxu0 %v1216
  %v1831 = vpop.f32.mrf.mxu0
  %v1832 = vadd.f32 %v1743, %v1831
  %v1833 = vpop.f32.mrf.mxu0
  %v1834 = vadd.f32 %v1745, %v1833
  %1835 = vmatmul.bf16.gmra.mxu0 %v1218
  %v1836 = vpop.f32.mrf.mxu0
  %v1837 = vadd.f32 %v1748, %v1836
  %v1838 = vpop.f32.mrf.mxu0
  %v1839 = vadd.f32 %v1750, %v1838
  %1840 = vmatmul.bf16.gmra.mxu0 %v1220
  %v1841 = vpop.f32.mrf.mxu0
  %v1842 = vadd.f32 %v1753, %v1841
  %v1843 = vpop.f32.mrf.mxu0
  %v1844 = vadd.f32 %v1755, %v1843
  %1845 = vmatmul.bf16.gmra.mxu0 %v1222
  %v1846 = vpop.f32.mrf.mxu0
  %v1847 = vadd.f32 %v1758, %v1846
  %v1848 = vpop.f32.mrf.mxu0
  %v1849 = vadd.f32 %v1760, %v1848
  %1850 = vmatmul.bf16.gmra.mxu0 %v1224
  %v1851 = vpop.f32.mrf.mxu0
  %v1852 = vadd.f32 %v1763, %v1851
  %v1853 = vpop.f32.mrf.mxu0
  %v1854 = vadd.f32 %v1765, %v1853
  %1855 = vmatmul.bf16.gmra.mxu0 %v1226
  %v1856 = vpop.f32.mrf.mxu0
  %v1857 = vadd.f32 %v1768, %v1856
  %v1858 = vpop.f32.mrf.mxu0
  %v1859 = vadd.f32 %v1770, %v1858
  %1860 = vmatmul.bf16.gmra.mxu0 %v1228
  %v1861 = vpop.f32.mrf.mxu0
  %v1862 = vadd.f32 %v1773, %v1861
  %v1863 = vpop.f32.mrf.mxu0
  %v1864 = vadd.f32 %v1775, %v1863
  %1865 = vmatmul.bf16.gmra.mxu0 %v1230
  %v1866 = vpop.f32.mrf.mxu0
  %v1867 = vadd.f32 %v1778, %v1866
  %v1868 = vpop.f32.mrf.mxu0
  %v1869 = vadd.f32 %v1780, %v1868
  %1870 = vmatmul.bf16.gmra.mxu0 %v1232
  %v1871 = vpop.f32.mrf.mxu0
  %v1872 = vadd.f32 %v1783, %v1871
  %v1873 = vpop.f32.mrf.mxu0
  %v1874 = vadd.f32 %v1785, %v1873
  %1875 = vmatmul.bf16.gmra.mxu0 %v1234
  %v1876 = vpop.f32.mrf.mxu0
  %v1877 = vadd.f32 %v1788, %v1876
  %v1878 = vpop.f32.mrf.mxu0
  %v1879 = vadd.f32 %v1790, %v1878
  %1880 = vmatmul.bf16.gmra.mxu0 %v1236
  %v1881 = vpop.f32.mrf.mxu0
  %v1882 = vadd.f32 %v1793, %v1881
  %v1883 = vpop.f32.mrf.mxu0
  %v1884 = vadd.f32 %v1795, %v1883
  %1885 = vdwg.mxu0
  %v1886 = vmax.f32 %v1807, 0.0
  %v1887 = vmax.f32 %v1809, 0.0
  %v1888 = vmax.f32 %v1812, 0.0
  %v1889 = vmax.f32 %v1814, 0.0
  %v1890 = vmax.f32 %v1817, 0.0
  %v1891 = vmax.f32 %v1819, 0.0
  %v1892 = vmax.f32 %v1822, 0.0
  %v1893 = vmax.f32 %v1824, 0.0
  %v1894 = vmax.f32 %v1827, 0.0
  %v1895 = vmax.f32 %v1829, 0.0
  %v1896 = vmax.f32 %v1832, 0.0
  %v1897 = vmax.f32 %v1834, 0.0
  %v1898 = vmax.f32 %v1837, 0.0
  %v1899 = vmax.f32 %v1839, 0.0
  %v1900 = vmax.f32 %v1842, 0.0
  %v1901 = vmax.f32 %v1844, 0.0
  %v1902 = vmax.f32 %v1847, 0.0
  %v1903 = vmax.f32 %v1849, 0.0
  %v1904 = vmax.f32 %v1852, 0.0
  %v1905 = vmax.f32 %v1854, 0.0
  %v1906 = vmax.f32 %v1857, 0.0
  %v1907 = vmax.f32 %v1859, 0.0
  %v1908 = vmax.f32 %v1862, 0.0
  %v1909 = vmax.f32 %v1864, 0.0
  %v1910 = vmax.f32 %v1867, 0.0
  %v1911 = vmax.f32 %v1869, 0.0
  %v1912 = vmax.f32 %v1872, 0.0
  %v1913 = vmax.f32 %v1874, 0.0
  %v1914 = vmax.f32 %v1877, 0.0
  %v1915 = vmax.f32 %v1879, 0.0
  %v1916 = vmax.f32 %v1882, 0.0
  %v1917 = vmax.f32 %v1884, 0.0
  %1918 = vmatpush.msra.mxu0 %v1901
  %1919 = vmatpush.msra.mxu0 %v1900
  %1920 = vmatpush.msra.mxu0 %v1899
  %1921 = vmatpush.msra.mxu0 %v1898
  %1922 = vmatpush.msra.mxu0 %v1897
  %1923 = vmatpush.msra.mxu0 %v1896
  %1924 = vmatpush.msra.mxu0 %v1895
  %1925 = vmatpush.msra.mxu0 %v1894
  %1926 = vmatpush.msra.mxu0 %v1893
  %1927 = vmatpush.msra.mxu0 %v1892
  %1928 = vmatpush.msra.mxu0 %v1891
  %1929 = vmatpush.msra.mxu0 %v1890
  %1930 = vmatpush.msra.mxu0 %v1889
  %1931 = vmatpush.msra.mxu0 %v1888
  %1932 = vmatpush.msra.mxu0 %v1887
  %1933 = vmatpush.msra.mxu0 %v1886
  %1934 = vmatmul.f32.gmra.mxu0 %v242
  %v1935 = vpop.f32.mrf.mxu0
  %v1936 = vadd.f32 0.0, %v1935
  %1937 = vdwg.mxu0
  %1938 = vmatpush.msra.mxu0 %v1917
  %1939 = vmatpush.msra.mxu0 %v1916
  %1940 = vmatpush.msra.mxu0 %v1915
  %1941 = vmatpush.msra.mxu0 %v1914
  %1942 = vmatpush.msra.mxu0 %v1913
  %1943 = vmatpush.msra.mxu0 %v1912
  %1944 = vmatpush.msra.mxu0 %v1911
  %1945 = vmatpush.msra.mxu0 %v1910
  %1946 = vmatpush.msra.mxu0 %v1909
  %1947 = vmatpush.msra.mxu0 %v1908
  %1948 = vmatpush.msra.mxu0 %v1907
  %1949 = vmatpush.msra.mxu0 %v1906
  %1950 = vmatpush.msra.mxu0 %v1905
  %1951 = vmatpush.msra.mxu0 %v1904
  %1952 = vmatpush.msra.mxu0 %v1903
  %1953 = vmatpush.msra.mxu0 %v1902
  %1954 = vmatmul.f32.gmra.mxu0 %v243
  %v1955 = vpop.f32.mrf.mxu0
  %v1956 = vadd.f32 %v1936, %v1955
  %1957 = vdwg.mxu0
  %v1958 = vpack.c.bf16 %v1887, %v1886
  %v1959 = vpack.c.bf16 %v1889, %v1888
  %v1960 = vpack.c.bf16 %v1891, %v1890
  %v1961 = vpack.c.bf16 %v1893, %v1892
  %v1962 = vpack.c.bf16 %v1895, %v1894
  %v1963 = vpack.c.bf16 %v1897, %v1896
  %v1964 = vpack.c.bf16 %v1899, %v1898
  %v1965 = vpack.c.bf16 %v1901, %v1900
  %v1966 = vpack.c.bf16 %v1903, %v1902
  %v1967 = vpack.c.bf16 %v1905, %v1904
  %v1968 = vpack.c.bf16 %v1907, %v1906
  %v1969 = vpack.c.bf16 %v1909, %v1908
  %v1970 = vpack.c.bf16 %v1911, %v1910
  %v1971 = vpack.c.bf16 %v1913, %v1912
  %v1972 = vpack.c.bf16 %v1915, %v1914
  %v1973 = vpack.c.bf16 %v1917, %v1916
  %v1974 = vld [vmem:[%s6] sm:$0xf]
  %v1975 = vld [vmem:[%s6 + $0x4] sm:$0xf]
  %v1976 = vld [vmem:[%s6 + $0x8] sm:$0xf]
  %v1977 = vld [vmem:[%s6 + $0xc] sm:$0xf]
  %v1978 = vld [vmem:[%s6 + $0x10] sm:$0xf]
  %v1979 = vld [vmem:[%s6 + $0x14] sm:$0xf]
  %v1980 = vld [vmem:[%s6 + $0x18] sm:$0xf]
  %v1981 = vld [vmem:[%s6 + $0x1c] sm:$0xf]
  %v1982 = vld [vmem:[%s6 + $0x20] sm:$0xf]
  %v1983 = vld [vmem:[%s6 + $0x24] sm:$0xf]
  %v1984 = vld [vmem:[%s6 + $0x28] sm:$0xf]
  %v1985 = vld [vmem:[%s6 + $0x2c] sm:$0xf]
  %v1986 = vld [vmem:[%s6 + $0x30] sm:$0xf]
  %v1987 = vld [vmem:[%s6 + $0x34] sm:$0xf]
  %v1988 = vld [vmem:[%s6 + $0x38] sm:$0xf]
  %v1989 = vld [vmem:[%s6 + $0x3c] sm:$0xf]
  %v2006 = vunpack.c.l.b16 %v1974
  %v2007 = vunpack.c.l.b16 %v1975
  %v2008 = vunpack.c.l.b16 %v1976
  %v2009 = vunpack.c.l.b16 %v1977
  %v2010 = vunpack.c.l.b16 %v1978
  %v2011 = vunpack.c.l.b16 %v1979
  %v2012 = vunpack.c.l.b16 %v1980
  %v2013 = vunpack.c.l.b16 %v1981
  %v2014 = vunpack.c.l.b16 %v1982
  %v2015 = vunpack.c.l.b16 %v1983
  %v2016 = vunpack.c.l.b16 %v1984
  %v2017 = vunpack.c.l.b16 %v1985
  %v2018 = vunpack.c.l.b16 %v1986
  %v2019 = vunpack.c.l.b16 %v1987
  %v2020 = vunpack.c.l.b16 %v1988
  %v2021 = vunpack.c.l.b16 %v1989
  %v2022 = vpack.c.b16 %v2007, %v2006
  %v2023 = vpack.c.b16 %v2009, %v2008
  %v2024 = vpack.c.b16 %v2011, %v2010
  %v2025 = vpack.c.b16 %v2013, %v2012
  %v2026 = vpack.c.b16 %v2015, %v2014
  %v2027 = vpack.c.b16 %v2017, %v2016
  %v2028 = vpack.c.b16 %v2019, %v2018
  %v2029 = vpack.c.b16 %v2021, %v2020
  %2038 = vmatpush.bf16.msra.mxu0 %v2029
  %2039 = vmatpush.bf16.msra.mxu0 %v2028
  %2040 = vmatpush.bf16.msra.mxu0 %v2027
  %2041 = vmatpush.bf16.msra.mxu0 %v2026
  %2042 = vmatpush.bf16.msra.mxu0 %v2025
  %2043 = vmatpush.bf16.msra.mxu0 %v2024
  %2044 = vmatpush.bf16.msra.mxu0 %v2023
  %2045 = vmatpush.bf16.msra.mxu0 %v2022
  %2046 = vmatmul.bf16.gmra.mxu0 %v1958
  %v2047 = vpop.f32.mrf.mxu0
  %v2048 = vadd.f32 0.0, %v2047
  %v2049 = vpop.f32.mrf.mxu0
  %v2050 = vadd.f32 0.0, %v2049
  %2051 = vmatmul.bf16.gmra.mxu0 %v1959
  %v2052 = vpop.f32.mrf.mxu0
  %v2053 = vadd.f32 0.0, %v2052
  %v2054 = vpop.f32.mrf.mxu0
  %v2055 = vadd.f32 0.0, %v2054
  %2056 = vmatmul.bf16.gmra.mxu0 %v1960
  %v2057 = vpop.f32.mrf.mxu0
  %v2058 = vadd.f32 0.0, %v2057
  %v2059 = vpop.f32.mrf.mxu0
  %v2060 = vadd.f32 0.0, %v2059
  %2061 = vmatmul.bf16.gmra.mxu0 %v1961
  %v2062 = vpop.f32.mrf.mxu0
  %v2063 = vadd.f32 0.0, %v2062
  %v2064 = vpop.f32.mrf.mxu0
  %v2065 = vadd.f32 0.0, %v2064
  %2066 = vmatmul.bf16.gmra.mxu0 %v1962
  %v2067 = vpop.f32.mrf.mxu0
  %v2068 = vadd.f32 0.0, %v2067
  %v2069 = vpop.f32.mrf.mxu0
  %v2070 = vadd.f32 0.0, %v2069
  %2071 = vmatmul.bf16.gmra.mxu0 %v1963
  %v2072 = vpop.f32.mrf.mxu0
  %v2073 = vadd.f32 0.0, %v2072
  %v2074 = vpop.f32.mrf.mxu0
  %v2075 = vadd.f32 0.0, %v2074
  %2076 = vmatmul.bf16.gmra.mxu0 %v1964
  %v2077 = vpop.f32.mrf.mxu0
  %v2078 = vadd.f32 0.0, %v2077
  %v2079 = vpop.f32.mrf.mxu0
  %v2080 = vadd.f32 0.0, %v2079
  %2081 = vmatmul.bf16.gmra.mxu0 %v1965
  %v2082 = vpop.f32.mrf.mxu0
  %v2083 = vadd.f32 0.0, %v2082
  %v2084 = vpop.f32.mrf.mxu0
  %v2085 = vadd.f32 0.0, %v2084
  %2086 = vmatmul.bf16.gmra.mxu0 %v1966
  %v2087 = vpop.f32.mrf.mxu0
  %v2088 = vadd.f32 0.0, %v2087
  %v2089 = vpop.f32.mrf.mxu0
  %v2090 = vadd.f32 0.0, %v2089
  %2091 = vmatmul.bf16.gmra.mxu0 %v1967
  %v2092 = vpop.f32.mrf.mxu0
  %v2093 = vadd.f32 0.0, %v2092
  %v2094 = vpop.f32.mrf.mxu0
  %v2095 = vadd.f32 0.0, %v2094
  %2096 = vmatmul.bf16.gmra.mxu0 %v1968
  %v2097 = vpop.f32.mrf.mxu0
  %v2098 = vadd.f32 0.0, %v2097
  %v2099 = vpop.f32.mrf.mxu0
  %v2100 = vadd.f32 0.0, %v2099
  %2101 = vmatmul.bf16.gmra.mxu0 %v1969
  %v2102 = vpop.f32.mrf.mxu0
  %v2103 = vadd.f32 0.0, %v2102
  %v2104 = vpop.f32.mrf.mxu0
  %v2105 = vadd.f32 0.0, %v2104
  %2106 = vmatmul.bf16.gmra.mxu0 %v1970
  %v2107 = vpop.f32.mrf.mxu0
  %v2108 = vadd.f32 0.0, %v2107
  %v2109 = vpop.f32.mrf.mxu0
  %v2110 = vadd.f32 0.0, %v2109
  %2111 = vmatmul.bf16.gmra.mxu0 %v1971
  %v2112 = vpop.f32.mrf.mxu0
  %v2113 = vadd.f32 0.0, %v2112
  %v2114 = vpop.f32.mrf.mxu0
  %v2115 = vadd.f32 0.0, %v2114
  %2116 = vmatmul.bf16.gmra.mxu0 %v1972
  %v2117 = vpop.f32.mrf.mxu0
  %v2118 = vadd.f32 0.0, %v2117
  %v2119 = vpop.f32.mrf.mxu0
  %v2120 = vadd.f32 0.0, %v2119
  %2121 = vmatmul.bf16.gmra.mxu0 %v1973
  %v2122 = vpop.f32.mrf.mxu0
  %v2123 = vadd.f32 0.0, %v2122
  %v2124 = vpop.f32.mrf.mxu0
  %v2125 = vadd.f32 0.0, %v2124
  %2126 = vdwg.mxu0
  %v2127 = vpack.c.bf16 %v2050, %v2048
  %v2128 = vpack.c.bf16 %v2055, %v2053
  %v2129 = vpack.c.bf16 %v2060, %v2058
  %v2130 = vpack.c.bf16 %v2065, %v2063
  %v2131 = vpack.c.bf16 %v2070, %v2068
  %v2132 = vpack.c.bf16 %v2075, %v2073
  %v2133 = vpack.c.bf16 %v2080, %v2078
  %v2134 = vpack.c.bf16 %v2085, %v2083
  %v2135 = vpack.c.bf16 %v2090, %v2088
  %v2136 = vpack.c.bf16 %v2095, %v2093
  %v2137 = vpack.c.bf16 %v2100, %v2098
  %v2138 = vpack.c.bf16 %v2105, %v2103
  %v2139 = vpack.c.bf16 %v2110, %v2108
  %v2140 = vpack.c.bf16 %v2115, %v2113
  %v2141 = vpack.c.bf16 %v2120, %v2118
  %v2142 = vpack.c.bf16 %v2125, %v2123
  %v2143 = vld [vmem:[%s7] sm:$0x1]
  %v2145 = vperm.slane %v2143, 0
  %2147 = vmatpush.bf16.msra.mxu0 %v2134
  %2148 = vmatpush.bf16.msra.mxu0 %v2133
  %2149 = vmatpush.bf16.msra.mxu0 %v2132
  %2150 = vmatpush.bf16.msra.mxu0 %v2131
  %2151 = vmatpush.bf16.msra.mxu0 %v2130
  %2152 = vmatpush.bf16.msra.mxu0 %v2129
  %2153 = vmatpush.bf16.msra.mxu0 %v2128
  %2154 = vmatpush.bf16.msra.mxu0 %v2127
  %2155 = vmatmul.bf16.gmra.mxu0 %v1205
  %v2156 = vpop.f32.mrf.mxu0
  %v2157 = vadd.f32 %v2145, %v2156
  %v2158 = vpop.f32.mrf.mxu0
  %v2159 = vadd.f32 %v2145, %v2158
  %2160 = vmatmul.bf16.gmra.mxu0 %v1207
  %v2161 = vpop.f32.mrf.mxu0
  %v2162 = vadd.f32 %v2145, %v2161
  %v2163 = vpop.f32.mrf.mxu0
  %v2164 = vadd.f32 %v2145, %v2163
  %2165 = vmatmul.bf16.gmra.mxu0 %v1209
  %v2166 = vpop.f32.mrf.mxu0
  %v2167 = vadd.f32 %v2145, %v2166
  %v2168 = vpop.f32.mrf.mxu0
  %v2169 = vadd.f32 %v2145, %v2168
  %2170 = vmatmul.bf16.gmra.mxu0 %v1211
  %v2171 = vpop.f32.mrf.mxu0
  %v2172 = vadd.f32 %v2145, %v2171
  %v2173 = vpop.f32.mrf.mxu0
  %v2174 = vadd.f32 %v2145, %v2173
  %2175 = vmatmul.bf16.gmra.mxu0 %v1213
  %v2176 = vpop.f32.mrf.mxu0
  %v2177 = vadd.f32 %v2145, %v2176
  %v2178 = vpop.f32.mrf.mxu0
  %v2179 = vadd.f32 %v2145, %v2178
  %2180 = vmatmul.bf16.gmra.mxu0 %v1215
  %v2181 = vpop.f32.mrf.mxu0
  %v2182 = vadd.f32 %v2145, %v2181
  %v2183 = vpop.f32.mrf.mxu0
  %v2184 = vadd.f32 %v2145, %v2183
  %2185 = vmatmul.bf16.gmra.mxu0 %v1217
  %v2186 = vpop.f32.mrf.mxu0
  %v2187 = vadd.f32 %v2145, %v2186
  %v2188 = vpop.f32.mrf.mxu0
  %v2189 = vadd.f32 %v2145, %v2188
  %2190 = vmatmul.bf16.gmra.mxu0 %v1219
  %v2191 = vpop.f32.mrf.mxu0
  %v2192 = vadd.f32 %v2145, %v2191
  %v2193 = vpop.f32.mrf.mxu0
  %v2194 = vadd.f32 %v2145, %v2193
  %2195 = vmatmul.bf16.gmra.mxu0 %v1221
  %v2196 = vpop.f32.mrf.mxu0
  %v2197 = vadd.f32 %v2145, %v2196
  %v2198 = vpop.f32.mrf.mxu0
  %v2199 = vadd.f32 %v2145, %v2198
  %2200 = vmatmul.bf16.gmra.mxu0 %v1223
  %v2201 = vpop.f32.mrf.mxu0
  %v2202 = vadd.f32 %v2145, %v2201
  %v2203 = vpop.f32.mrf.mxu0
  %v2204 = vadd.f32 %v2145, %v2203
  %2205 = vmatmul.bf16.gmra.mxu0 %v1225
  %v2206 = vpop.f32.mrf.mxu0
  %v2207 = vadd.f32 %v2145, %v2206
  %v2208 = vpop.f32.mrf.mxu0
  %v2209 = vadd.f32 %v2145, %v2208
  %2210 = vmatmul.bf16.gmra.mxu0 %v1227
  %v2211 = vpop.f32.mrf.mxu0
  %v2212 = vadd.f32 %v2145, %v2211
  %v2213 = vpop.f32.mrf.mxu0
  %v2214 = vadd.f32 %v2145, %v2213
  %2215 = vmatmul.bf16.gmra.mxu0 %v1229
  %v2216 = vpop.f32.mrf.mxu0
  %v2217 = vadd.f32 %v2145, %v2216
  %v2218 = vpop.f32.mrf.mxu0
  %v2219 = vadd.f32 %v2145, %v2218
  %2220 = vmatmul.bf16.gmra.mxu0 %v1231
  %v2221 = vpop.f32.mrf.mxu0
  %v2222 = vadd.f32 %v2145, %v2221
  %v2223 = vpop.f32.mrf.mxu0
  %v2224 = vadd.f32 %v2145, %v2223
  %2225 = vmatmul.bf16.gmra.mxu0 %v1233
  %v2226 = vpop.f32.mrf.mxu0
  %v2227 = vadd.f32 %v2145, %v2226
  %v2228 = vpop.f32.mrf.mxu0
  %v2229 = vadd.f32 %v2145, %v2228
  %2230 = vmatmul.bf16.gmra.mxu0 %v1235
  %v2231 = vpop.f32.mrf.mxu0
  %v2232 = vadd.f32 %v2145, %v2231
  %v2233 = vpop.f32.mrf.mxu0
  %v2234 = vadd.f32 %v2145, %v2233
  %2235 = vdwg.mxu0
  %2236 = vmatpush.bf16.msra.mxu0 %v2142
  %2237 = vmatpush.bf16.msra.mxu0 %v2141
  %2238 = vmatpush.bf16.msra.mxu0 %v2140
  %2239 = vmatpush.bf16.msra.mxu0 %v2139
  %2240 = vmatpush.bf16.msra.mxu0 %v2138
  %2241 = vmatpush.bf16.msra.mxu0 %v2137
  %2242 = vmatpush.bf16.msra.mxu0 %v2136
  %2243 = vmatpush.bf16.msra.mxu0 %v2135
  %2244 = vmatmul.bf16.gmra.mxu0 %v1206
  %v2245 = vpop.f32.mrf.mxu0
  %v2246 = vadd.f32 %v2157, %v2245
  %v2247 = vpop.f32.mrf.mxu0
  %v2248 = vadd.f32 %v2159, %v2247
  %2249 = vmatmul.bf16.gmra.mxu0 %v1208
  %v2250 = vpop.f32.mrf.mxu0
  %v2251 = vadd.f32 %v2162, %v2250
  %v2252 = vpop.f32.mrf.mxu0
  %v2253 = vadd.f32 %v2164, %v2252
  %2254 = vmatmul.bf16.gmra.mxu0 %v1210
  %v2255 = vpop.f32.mrf.mxu0
  %v2256 = vadd.f32 %v2167, %v2255
  %v2257 = vpop.f32.mrf.mxu0
  %v2258 = vadd.f32 %v2169, %v2257
  %2259 = vmatmul.bf16.gmra.mxu0 %v1212
  %v2260 = vpop.f32.mrf.mxu0
  %v2261 = vadd.f32 %v2172, %v2260
  %v2262 = vpop.f32.mrf.mxu0
  %v2263 = vadd.f32 %v2174, %v2262
  %2264 = vmatmul.bf16.gmra.mxu0 %v1214
  %v2265 = vpop.f32.mrf.mxu0
  %v2266 = vadd.f32 %v2177, %v2265
  %v2267 = vpop.f32.mrf.mxu0
  %v2268 = vadd.f32 %v2179, %v2267
  %2269 = vmatmul.bf16.gmra.mxu0 %v1216
  %v2270 = vpop.f32.mrf.mxu0
  %v2271 = vadd.f32 %v2182, %v2270
  %v2272 = vpop.f32.mrf.mxu0
  %v2273 = vadd.f32 %v2184, %v2272
  %2274 = vmatmul.bf16.gmra.mxu0 %v1218
  %v2275 = vpop.f32.mrf.mxu0
  %v2276 = vadd.f32 %v2187, %v2275
  %v2277 = vpop.f32.mrf.mxu0
  %v2278 = vadd.f32 %v2189, %v2277
  %2279 = vmatmul.bf16.gmra.mxu0 %v1220
  %v2280 = vpop.f32.mrf.mxu0
  %v2281 = vadd.f32 %v2192, %v2280
  %v2282 = vpop.f32.mrf.mxu0
  %v2283 = vadd.f32 %v2194, %v2282
  %2284 = vmatmul.bf16.gmra.mxu0 %v1222
  %v2285 = vpop.f32.mrf.mxu0
  %v2286 = vadd.f32 %v2197, %v2285
  %v2287 = vpop.f32.mrf.mxu0
  %v2288 = vadd.f32 %v2199, %v2287
  %2289 = vmatmul.bf16.gmra.mxu0 %v1224
  %v2290 = vpop.f32.mrf.mxu0
  %v2291 = vadd.f32 %v2202, %v2290
  %v2292 = vpop.f32.mrf.mxu0
  %v2293 = vadd.f32 %v2204, %v2292
  %2294 = vmatmul.bf16.gmra.mxu0 %v1226
  %v2295 = vpop.f32.mrf.mxu0
  %v2296 = vadd.f32 %v2207, %v2295
  %v2297 = vpop.f32.mrf.mxu0
  %v2298 = vadd.f32 %v2209, %v2297
  %2299 = vmatmul.bf16.gmra.mxu0 %v1228
  %v2300 = vpop.f32.mrf.mxu0
  %v2301 = vadd.f32 %v2212, %v2300
  %v2302 = vpop.f32.mrf.mxu0
  %v2303 = vadd.f32 %v2214, %v2302
  %2304 = vmatmul.bf16.gmra.mxu0 %v1230
  %v2305 = vpop.f32.mrf.mxu0
  %v2306 = vadd.f32 %v2217, %v2305
  %v2307 = vpop.f32.mrf.mxu0
  %v2308 = vadd.f32 %v2219, %v2307
  %2309 = vmatmul.bf16.gmra.mxu0 %v1232
  %v2310 = vpop.f32.mrf.mxu0
  %v2311 = vadd.f32 %v2222, %v2310
  %v2312 = vpop.f32.mrf.mxu0
  %v2313 = vadd.f32 %v2224, %v2312
  %2314 = vmatmul.bf16.gmra.mxu0 %v1234
  %v2315 = vpop.f32.mrf.mxu0
  %v2316 = vadd.f32 %v2227, %v2315
  %v2317 = vpop.f32.mrf.mxu0
  %v2318 = vadd.f32 %v2229, %v2317
  %2319 = vmatmul.bf16.gmra.mxu0 %v1236
  %v2320 = vpop.f32.mrf.mxu0
  %v2321 = vadd.f32 %v2232, %v2320
  %v2322 = vpop.f32.mrf.mxu0
  %v2323 = vadd.f32 %v2234, %v2322
  %2324 = vdwg.mxu0
  %v2325 = vmax.f32 %v2246, 0.0
  %v2326 = vmax.f32 %v2248, 0.0
  %v2327 = vmax.f32 %v2251, 0.0
  %v2328 = vmax.f32 %v2253, 0.0
  %v2329 = vmax.f32 %v2256, 0.0
  %v2330 = vmax.f32 %v2258, 0.0
  %v2331 = vmax.f32 %v2261, 0.0
  %v2332 = vmax.f32 %v2263, 0.0
  %v2333 = vmax.f32 %v2266, 0.0
  %v2334 = vmax.f32 %v2268, 0.0
  %v2335 = vmax.f32 %v2271, 0.0
  %v2336 = vmax.f32 %v2273, 0.0
  %v2337 = vmax.f32 %v2276, 0.0
  %v2338 = vmax.f32 %v2278, 0.0
  %v2339 = vmax.f32 %v2281, 0.0
  %v2340 = vmax.f32 %v2283, 0.0
  %v2341 = vmax.f32 %v2286, 0.0
  %v2342 = vmax.f32 %v2288, 0.0
  %v2343 = vmax.f32 %v2291, 0.0
  %v2344 = vmax.f32 %v2293, 0.0
  %v2345 = vmax.f32 %v2296, 0.0
  %v2346 = vmax.f32 %v2298, 0.0
  %v2347 = vmax.f32 %v2301, 0.0
  %v2348 = vmax.f32 %v2303, 0.0
  %v2349 = vmax.f32 %v2306, 0.0
  %v2350 = vmax.f32 %v2308, 0.0
  %v2351 = vmax.f32 %v2311, 0.0
  %v2352 = vmax.f32 %v2313, 0.0
  %v2353 = vmax.f32 %v2316, 0.0
  %v2354 = vmax.f32 %v2318, 0.0
  %v2355 = vmax.f32 %v2321, 0.0
  %v2356 = vmax.f32 %v2323, 0.0
  %2357 = vmatpush.msra.mxu0 %v2340
  %2358 = vmatpush.msra.mxu0 %v2339
  %2359 = vmatpush.msra.mxu0 %v2338
  %2360 = vmatpush.msra.mxu0 %v2337
  %2361 = vmatpush.msra.mxu0 %v2336
  %2362 = vmatpush.msra.mxu0 %v2335
  %2363 = vmatpush.msra.mxu0 %v2334
  %2364 = vmatpush.msra.mxu0 %v2333
  %2365 = vmatpush.msra.mxu0 %v2332
  %2366 = vmatpush.msra.mxu0 %v2331
  %2367 = vmatpush.msra.mxu0 %v2330
  %2368 = vmatpush.msra.mxu0 %v2329
  %2369 = vmatpush.msra.mxu0 %v2328
  %2370 = vmatpush.msra.mxu0 %v2327
  %2371 = vmatpush.msra.mxu0 %v2326
  %2372 = vmatpush.msra.mxu0 %v2325
  %2373 = vmatmul.f32.gmra.mxu0 %v242
  %v2374 = vpop.f32.mrf.mxu0
  %v2375 = vadd.f32 0.0, %v2374
  %2376 = vdwg.mxu0
  %2377 = vmatpush.msra.mxu0 %v2356
  %2378 = vmatpush.msra.mxu0 %v2355
  %2379 = vmatpush.msra.mxu0 %v2354
  %2380 = vmatpush.msra.mxu0 %v2353
  %2381 = vmatpush.msra.mxu0 %v2352
  %2382 = vmatpush.msra.mxu0 %v2351
  %2383 = vmatpush.msra.mxu0 %v2350
  %2384 = vmatpush.msra.mxu0 %v2349
  %2385 = vmatpush.msra.mxu0 %v2348
  %2386 = vmatpush.msra.mxu0 %v2347
  %2387 = vmatpush.msra.mxu0 %v2346
  %2388 = vmatpush.msra.mxu0 %v2345
  %2389 = vmatpush.msra.mxu0 %v2344
  %2390 = vmatpush.msra.mxu0 %v2343
  %2391 = vmatpush.msra.mxu0 %v2342
  %2392 = vmatpush.msra.mxu0 %v2341
  %2393 = vmatmul.f32.gmra.mxu0 %v243
  %v2394 = vpop.f32.mrf.mxu0
  %v2395 = vadd.f32 %v2375, %v2394
  %2396 = vdwg.mxu0
  %2397 = vmatpush.msra.mxu0 %v157
  %2398 = vmatpush.msra.mxu0 %v152
  %2399 = vmatpush.msra.mxu0 %v147
  %2400 = vmatpush.msra.mxu0 %v142
  %2401 = vmatpush.msra.mxu0 %v137
  %2402 = vmatpush.msra.mxu0 %v132
  %2403 = vmatpush.msra.mxu0 %v127
  %2404 = vmatpush.msra.mxu0 %v122
  %2405 = vmatpush.msra.mxu0 %v117
  %2406 = vmatpush.msra.mxu0 %v112
  %2407 = vmatpush.msra.mxu0 %v107
  %2408 = vmatpush.msra.mxu0 %v102
  %2409 = vmatpush.msra.mxu0 %v97
  %2410 = vmatpush.msra.mxu0 %v92
  %2411 = vmatpush.msra.mxu0 %v87
  %2412 = vmatpush.msra.mxu0 %v82
  %2413 = vmatmul.f32.gmra.mxu0 %v242
  %v2414 = vpop.f32.mrf.mxu0
  %v2415 = vadd.f32 0.0, %v2414
  %2416 = vdwg.mxu0
  %2417 = vmatpush.msra.mxu0 %v237
  %2418 = vmatpush.msra.mxu0 %v232
  %2419 = vmatpush.msra.mxu0 %v227
  %2420 = vmatpush.msra.mxu0 %v222
  %2421 = vmatpush.msra.mxu0 %v217
  %2422 = vmatpush.msra.mxu0 %v212
  %2423 = vmatpush.msra.mxu0 %v207
  %2424 = vmatpush.msra.mxu0 %v202
  %2425 = vmatpush.msra.mxu0 %v197
  %2426 = vmatpush.msra.mxu0 %v192
  %2427 = vmatpush.msra.mxu0 %v187
  %2428 = vmatpush.msra.mxu0 %v182
  %2429 = vmatpush.msra.mxu0 %v177
  %2430 = vmatpush.msra.mxu0 %v172
  %2431 = vmatpush.msra.mxu0 %v167
  %2432 = vmatpush.msra.mxu0 %v162
  %2433 = vmatmul.f32.gmra.mxu0 %v243
  %v2434 = vpop.f32.mrf.mxu0
  %v2435 = vadd.f32 %v2415, %v2434
  %2436 = vdwg.mxu0
  %2437 = vmatpush.msra.mxu0 %v158
  %2438 = vmatpush.msra.mxu0 %v153
  %2439 = vmatpush.msra.mxu0 %v148
  %2440 = vmatpush.msra.mxu0 %v143
  %2441 = vmatpush.msra.mxu0 %v138
  %2442 = vmatpush.msra.mxu0 %v133
  %2443 = vmatpush.msra.mxu0 %v128
  %2444 = vmatpush.msra.mxu0 %v123
  %2445 = vmatpush.msra.mxu0 %v118
  %2446 = vmatpush.msra.mxu0 %v113
  %2447 = vmatpush.msra.mxu0 %v108
  %2448 = vmatpush.msra.mxu0 %v103
  %2449 = vmatpush.msra.mxu0 %v98
  %2450 = vmatpush.msra.mxu0 %v93
  %2451 = vmatpush.msra.mxu0 %v88
  %2452 = vmatpush.msra.mxu0 %v83
  %2453 = vmatmul.f32.gmra.mxu0 %v242
  %v2454 = vpop.f32.mrf.mxu0
  %v2455 = vadd.f32 0.0, %v2454
  %2456 = vdwg.mxu0
  %2457 = vmatpush.msra.mxu0 %v238
  %2458 = vmatpush.msra.mxu0 %v233
  %2459 = vmatpush.msra.mxu0 %v228
  %2460 = vmatpush.msra.mxu0 %v223
  %2461 = vmatpush.msra.mxu0 %v218
  %2462 = vmatpush.msra.mxu0 %v213
  %2463 = vmatpush.msra.mxu0 %v208
  %2464 = vmatpush.msra.mxu0 %v203
  %2465 = vmatpush.msra.mxu0 %v198
  %2466 = vmatpush.msra.mxu0 %v193
  %2467 = vmatpush.msra.mxu0 %v188
  %2468 = vmatpush.msra.mxu0 %v183
  %2469 = vmatpush.msra.mxu0 %v178
  %2470 = vmatpush.msra.mxu0 %v173
  %2471 = vmatpush.msra.mxu0 %v168
  %2472 = vmatpush.msra.mxu0 %v163
  %2473 = vmatmul.f32.gmra.mxu0 %v243
  %v2474 = vpop.f32.mrf.mxu0
  %v2475 = vadd.f32 %v2455, %v2474
  %2476 = vdwg.mxu0
  %2477 = vmatpush.msra.mxu0 %v159
  %2478 = vmatpush.msra.mxu0 %v154
  %2479 = vmatpush.msra.mxu0 %v149
  %2480 = vmatpush.msra.mxu0 %v144
  %2481 = vmatpush.msra.mxu0 %v139
  %2482 = vmatpush.msra.mxu0 %v134
  %2483 = vmatpush.msra.mxu0 %v129
  %2484 = vmatpush.msra.mxu0 %v124
  %2485 = vmatpush.msra.mxu0 %v119
  %2486 = vmatpush.msra.mxu0 %v114
  %2487 = vmatpush.msra.mxu0 %v109
  %2488 = vmatpush.msra.mxu0 %v104
  %2489 = vmatpush.msra.mxu0 %v99
  %2490 = vmatpush.msra.mxu0 %v94
  %2491 = vmatpush.msra.mxu0 %v89
  %2492 = vmatpush.msra.mxu0 %v84
  %2493 = vmatmul.f32.gmra.mxu0 %v242
  %v2494 = vpop.f32.mrf.mxu0
  %v2495 = vadd.f32 0.0, %v2494
  %2496 = vdwg.mxu0
  %2497 = vmatpush.msra.mxu0 %v239
  %2498 = vmatpush.msra.mxu0 %v234
  %2499 = vmatpush.msra.mxu0 %v229
  %2500 = vmatpush.msra.mxu0 %v224
  %2501 = vmatpush.msra.mxu0 %v219
  %2502 = vmatpush.msra.mxu0 %v214
  %2503 = vmatpush.msra.mxu0 %v209
  %2504 = vmatpush.msra.mxu0 %v204
  %2505 = vmatpush.msra.mxu0 %v199
  %2506 = vmatpush.msra.mxu0 %v194
  %2507 = vmatpush.msra.mxu0 %v189
  %2508 = vmatpush.msra.mxu0 %v184
  %2509 = vmatpush.msra.mxu0 %v179
  %2510 = vmatpush.msra.mxu0 %v174
  %2511 = vmatpush.msra.mxu0 %v169
  %2512 = vmatpush.msra.mxu0 %v164
  %2513 = vmatmul.f32.gmra.mxu0 %v243
  %v2514 = vpop.f32.mrf.mxu0
  %v2515 = vadd.f32 %v2495, %v2514
  %2516 = vdwg.mxu0
  %2517 = vmatpush.msra.mxu0 %v160
  %2518 = vmatpush.msra.mxu0 %v155
  %2519 = vmatpush.msra.mxu0 %v150
  %2520 = vmatpush.msra.mxu0 %v145
  %2521 = vmatpush.msra.mxu0 %v140
  %2522 = vmatpush.msra.mxu0 %v135
  %2523 = vmatpush.msra.mxu0 %v130
  %2524 = vmatpush.msra.mxu0 %v125
  %2525 = vmatpush.msra.mxu0 %v120
  %2526 = vmatpush.msra.mxu0 %v115
  %2527 = vmatpush.msra.mxu0 %v110
  %2528 = vmatpush.msra.mxu0 %v105
  %2529 = vmatpush.msra.mxu0 %v100
  %2530 = vmatpush.msra.mxu0 %v95
  %2531 = vmatpush.msra.mxu0 %v90
  %2532 = vmatpush.msra.mxu0 %v85
  %2533 = vmatmul.f32.gmra.mxu0 %v242
  %v2534 = vpop.f32.mrf.mxu0
  %v2535 = vadd.f32 0.0, %v2534
  %2536 = vdwg.mxu0
  %2537 = vmatpush.msra.mxu0 %v240
  %2538 = vmatpush.msra.mxu0 %v235
  %2539 = vmatpush.msra.mxu0 %v230
  %2540 = vmatpush.msra.mxu0 %v225
  %2541 = vmatpush.msra.mxu0 %v220
  %2542 = vmatpush.msra.mxu0 %v215
  %2543 = vmatpush.msra.mxu0 %v210
  %2544 = vmatpush.msra.mxu0 %v205
  %2545 = vmatpush.msra.mxu0 %v200
  %2546 = vmatpush.msra.mxu0 %v195
  %2547 = vmatpush.msra.mxu0 %v190
  %2548 = vmatpush.msra.mxu0 %v185
  %2549 = vmatpush.msra.mxu0 %v180
  %2550 = vmatpush.msra.mxu0 %v175
  %2551 = vmatpush.msra.mxu0 %v170
  %2552 = vmatpush.msra.mxu0 %v165
  %2553 = vmatmul.f32.gmra.mxu0 %v243
  %v2554 = vpop.f32.mrf.mxu0
  %v2555 = vadd.f32 %v2535, %v2554
  %2556 = vdwg.mxu0
  %2557 = vmatpush.msra.mxu0 %v161
  %2558 = vmatpush.msra.mxu0 %v156
  %2559 = vmatpush.msra.mxu0 %v151
  %2560 = vmatpush.msra.mxu0 %v146
  %2561 = vmatpush.msra.mxu0 %v141
  %2562 = vmatpush.msra.mxu0 %v136
  %2563 = vmatpush.msra.mxu0 %v131
  %2564 = vmatpush.msra.mxu0 %v126
  %2565 = vmatpush.msra.mxu0 %v121
  %2566 = vmatpush.msra.mxu0 %v116
  %2567 = vmatpush.msra.mxu0 %v111
  %2568 = vmatpush.msra.mxu0 %v106
  %2569 = vmatpush.msra.mxu0 %v101
  %2570 = vmatpush.msra.mxu0 %v96
  %2571 = vmatpush.msra.mxu0 %v91
  %2572 = vmatpush.msra.mxu0 %v86
  %2573 = vmatmul.f32.gmra.mxu0 %v242
  %v2574 = vpop.f32.mrf.mxu0
  %v2575 = vadd.f32 0.0, %v2574
  %2576 = vdwg.mxu0
  %2577 = vmatpush.msra.mxu0 %v241
  %2578 = vmatpush.msra.mxu0 %v236
  %2579 = vmatpush.msra.mxu0 %v231
  %2580 = vmatpush.msra.mxu0 %v226
  %2581 = vmatpush.msra.mxu0 %v221
  %2582 = vmatpush.msra.mxu0 %v216
  %2583 = vmatpush.msra.mxu0 %v211
  %2584 = vmatpush.msra.mxu0 %v206
  %2585 = vmatpush.msra.mxu0 %v201
  %2586 = vmatpush.msra.mxu0 %v196
  %2587 = vmatpush.msra.mxu0 %v191
  %2588 = vmatpush.msra.mxu0 %v186
  %2589 = vmatpush.msra.mxu0 %v181
  %2590 = vmatpush.msra.mxu0 %v176
  %2591 = vmatpush.msra.mxu0 %v171
  %2592 = vmatpush.msra.mxu0 %v166
  %2593 = vmatmul.f32.gmra.mxu0 %v243
  %v2594 = vpop.f32.mrf.mxu0
  %v2595 = vadd.f32 %v2575, %v2594
  %2596 = vdwg.mxu0
  %v2597 = vld [vmem:[%s9] sm:$0xff]
  %v2599 = vperm.slane %v2597, 0
  %v2600 = vperm.slane %v2597, 1
  %v2601 = vperm.slane %v2597, 2
  %v2602 = vperm.slane %v2597, 3
  %v2603 = vperm.slane %v2597, 4
  %v2604 = vperm.slane %v2597, 5
  %v2605 = vperm.slane %v2597, 6
  %v2606 = vperm.slane %v2597, 7
  %v2615 = vmul.f32 %v2435, %v2599
  %v2616 = vmul.f32 %v2475, %v2600
  %v2617 = vmul.f32 %v2515, %v2601
  %v2618 = vmul.f32 %v2555, %v2602
  %v2619 = vmul.f32 %v2595, %v2603
  %v2620 = vmul.f32 %v1517, %v2604
  %v2621 = vmul.f32 %v1956, %v2605
  %v2622 = vmul.f32 %v2395, %v2606
  %v2623 = vld [vmem:[%s10] sm:$0xff]
  %v2625 = vperm.slane %v2623, 0
  %v2626 = vperm.slane %v2623, 1
  %v2627 = vperm.slane %v2623, 2
  %v2628 = vperm.slane %v2623, 3
  %v2629 = vperm.slane %v2623, 4
  %v2630 = vperm.slane %v2623, 5
  %v2631 = vperm.slane %v2623, 6
  %v2632 = vperm.slane %v2623, 7
  %v2641 = vadd.f32 %v2615, %v2625
  %v2642 = vadd.f32 %v2616, %v2626
  %v2643 = vadd.f32 %v2617, %v2627
  %v2644 = vadd.f32 %v2618, %v2628
  %v2645 = vadd.f32 %v2619, %v2629
  %v2646 = vadd.f32 %v2620, %v2630
  %v2647 = vadd.f32 %v2621, %v2631
  %v2648 = vadd.f32 %v2622, %v2632
  %v2649 = vpack.c.bf16 %v2641, %v2641
  %v2650 = vpack.c.bf16 %v2642, %v2642
  %v2651 = vpack.c.bf16 %v2643, %v2643
  %v2652 = vpack.c.bf16 %v2644, %v2644
  %v2653 = vpack.c.bf16 %v2645, %v2645
  %v2654 = vpack.c.bf16 %v2646, %v2646
  %v2655 = vpack.c.bf16 %v2647, %v2647
  %v2656 = vpack.c.bf16 %v2648, %v2648
  %v2657 = vld [vmem:[%s11] sm:$0xf]
  %v2658 = vld [vmem:[%s11 + $0x4] sm:$0xf]
  %v2659 = vld [vmem:[%s11 + $0x8] sm:$0xf]
  %v2660 = vld [vmem:[%s11 + $0xc] sm:$0xf]
  %v2661 = vld [vmem:[%s11 + $0x10] sm:$0xf]
  %v2662 = vld [vmem:[%s11 + $0x14] sm:$0xf]
  %v2663 = vld [vmem:[%s11 + $0x18] sm:$0xf]
  %v2664 = vld [vmem:[%s11 + $0x1c] sm:$0xf]
  %v2665 = vld [vmem:[%s11 + $0x20] sm:$0xf]
  %v2666 = vld [vmem:[%s11 + $0x24] sm:$0xf]
  %v2667 = vld [vmem:[%s11 + $0x28] sm:$0xf]
  %v2668 = vld [vmem:[%s11 + $0x2c] sm:$0xf]
  %v2669 = vld [vmem:[%s11 + $0x30] sm:$0xf]
  %v2670 = vld [vmem:[%s11 + $0x34] sm:$0xf]
  %v2671 = vld [vmem:[%s11 + $0x38] sm:$0xf]
  %v2672 = vld [vmem:[%s11 + $0x3c] sm:$0xf]
  %v2673 = vld [vmem:[%s11 + $0x40] sm:$0xf]
  %v2674 = vld [vmem:[%s11 + $0x44] sm:$0xf]
  %v2675 = vld [vmem:[%s11 + $0x48] sm:$0xf]
  %v2676 = vld [vmem:[%s11 + $0x4c] sm:$0xf]
  %v2677 = vld [vmem:[%s11 + $0x50] sm:$0xf]
  %v2678 = vld [vmem:[%s11 + $0x54] sm:$0xf]
  %v2679 = vld [vmem:[%s11 + $0x58] sm:$0xf]
  %v2680 = vld [vmem:[%s11 + $0x5c] sm:$0xf]
  %v2681 = vld [vmem:[%s11 + $0x60] sm:$0xf]
  %v2682 = vld [vmem:[%s11 + $0x64] sm:$0xf]
  %v2683 = vld [vmem:[%s11 + $0x68] sm:$0xf]
  %v2684 = vld [vmem:[%s11 + $0x6c] sm:$0xf]
  %v2685 = vld [vmem:[%s11 + $0x70] sm:$0xf]
  %v2686 = vld [vmem:[%s11 + $0x74] sm:$0xf]
  %v2687 = vld [vmem:[%s11 + $0x78] sm:$0xf]
  %v2688 = vld [vmem:[%s11 + $0x7c] sm:$0xf]
  %v2689 = vld [vmem:[%s11 + $0x80] sm:$0xf]
  %v2690 = vld [vmem:[%s11 + $0x84] sm:$0xf]
  %v2691 = vld [vmem:[%s11 + $0x88] sm:$0xf]
  %v2692 = vld [vmem:[%s11 + $0x8c] sm:$0xf]
  %v2693 = vld [vmem:[%s11 + $0x90] sm:$0xf]
  %v2694 = vld [vmem:[%s11 + $0x94] sm:$0xf]
  %v2695 = vld [vmem:[%s11 + $0x98] sm:$0xf]
  %v2696 = vld [vmem:[%s11 + $0x9c] sm:$0xf]
  %v2697 = vld [vmem:[%s11 + $0xa0] sm:$0xf]
  %v2698 = vld [vmem:[%s11 + $0xa4] sm:$0xf]
  %v2699 = vld [vmem:[%s11 + $0xa8] sm:$0xf]
  %v2700 = vld [vmem:[%s11 + $0xac] sm:$0xf]
  %v2701 = vld [vmem:[%s11 + $0xb0] sm:$0xf]
  %v2702 = vld [vmem:[%s11 + $0xb4] sm:$0xf]
  %v2703 = vld [vmem:[%s11 + $0xb8] sm:$0xf]
  %v2704 = vld [vmem:[%s11 + $0xbc] sm:$0xf]
  %v2705 = vld [vmem:[%s11 + $0xc0] sm:$0xf]
  %v2706 = vld [vmem:[%s11 + $0xc4] sm:$0xf]
  %v2707 = vld [vmem:[%s11 + $0xc8] sm:$0xf]
  %v2708 = vld [vmem:[%s11 + $0xcc] sm:$0xf]
  %v2709 = vld [vmem:[%s11 + $0xd0] sm:$0xf]
  %v2710 = vld [vmem:[%s11 + $0xd4] sm:$0xf]
  %v2711 = vld [vmem:[%s11 + $0xd8] sm:$0xf]
  %v2712 = vld [vmem:[%s11 + $0xdc] sm:$0xf]
  %v2713 = vld [vmem:[%s11 + $0xe0] sm:$0xf]
  %v2714 = vld [vmem:[%s11 + $0xe4] sm:$0xf]
  %v2715 = vld [vmem:[%s11 + $0xe8] sm:$0xf]
  %v2716 = vld [vmem:[%s11 + $0xec] sm:$0xf]
  %v2717 = vld [vmem:[%s11 + $0xf0] sm:$0xf]
  %v2718 = vld [vmem:[%s11 + $0xf4] sm:$0xf]
  %v2719 = vld [vmem:[%s11 + $0xf8] sm:$0xf]
  %v2720 = vld [vmem:[%s11 + $0xfc] sm:$0xf]
  %v2721 = vld [vmem:[%s11 + $0x100] sm:$0xf]
  %v2722 = vld [vmem:[%s11 + $0x104] sm:$0xf]
  %v2723 = vld [vmem:[%s11 + $0x108] sm:$0xf]
  %v2724 = vld [vmem:[%s11 + $0x10c] sm:$0xf]
  %v2725 = vld [vmem:[%s11 + $0x110] sm:$0xf]
  %v2726 = vld [vmem:[%s11 + $0x114] sm:$0xf]
  %v2727 = vld [vmem:[%s11 + $0x118] sm:$0xf]
  %v2728 = vld [vmem:[%s11 + $0x11c] sm:$0xf]
  %v2729 = vld [vmem:[%s11 + $0x120] sm:$0xf]
  %v2730 = vld [vmem:[%s11 + $0x124] sm:$0xf]
  %v2731 = vld [vmem:[%s11 + $0x128] sm:$0xf]
  %v2732 = vld [vmem:[%s11 + $0x12c] sm:$0xf]
  %v2733 = vld [vmem:[%s11 + $0x130] sm:$0xf]
  %v2734 = vld [vmem:[%s11 + $0x134] sm:$0xf]
  %v2735 = vld [vmem:[%s11 + $0x138] sm:$0xf]
  %v2736 = vld [vmem:[%s11 + $0x13c] sm:$0xf]
  %v2737 = vld [vmem:[%s11 + $0x140] sm:$0xf]
  %v2738 = vld [vmem:[%s11 + $0x144] sm:$0xf]
  %v2739 = vld [vmem:[%s11 + $0x148] sm:$0xf]
  %v2740 = vld [vmem:[%s11 + $0x14c] sm:$0xf]
  %v2741 = vld [vmem:[%s11 + $0x150] sm:$0xf]
  %v2742 = vld [vmem:[%s11 + $0x154] sm:$0xf]
  %v2743 = vld [vmem:[%s11 + $0x158] sm:$0xf]
  %v2744 = vld [vmem:[%s11 + $0x15c] sm:$0xf]
  %v2745 = vld [vmem:[%s11 + $0x160] sm:$0xf]
  %v2746 = vld [vmem:[%s11 + $0x164] sm:$0xf]
  %v2747 = vld [vmem:[%s11 + $0x168] sm:$0xf]
  %v2748 = vld [vmem:[%s11 + $0x16c] sm:$0xf]
  %v2749 = vld [vmem:[%s11 + $0x170] sm:$0xf]
  %v2750 = vld [vmem:[%s11 + $0x174] sm:$0xf]
  %v2751 = vld [vmem:[%s11 + $0x178] sm:$0xf]
  %v2752 = vld [vmem:[%s11 + $0x17c] sm:$0xf]
  %v2753 = vld [vmem:[%s11 + $0x180] sm:$0xf]
  %v2754 = vld [vmem:[%s11 + $0x184] sm:$0xf]
  %v2755 = vld [vmem:[%s11 + $0x188] sm:$0xf]
  %v2756 = vld [vmem:[%s11 + $0x18c] sm:$0xf]
  %v2757 = vld [vmem:[%s11 + $0x190] sm:$0xf]
  %v2758 = vld [vmem:[%s11 + $0x194] sm:$0xf]
  %v2759 = vld [vmem:[%s11 + $0x198] sm:$0xf]
  %v2760 = vld [vmem:[%s11 + $0x19c] sm:$0xf]
  %v2761 = vld [vmem:[%s11 + $0x1a0] sm:$0xf]
  %v2762 = vld [vmem:[%s11 + $0x1a4] sm:$0xf]
  %v2763 = vld [vmem:[%s11 + $0x1a8] sm:$0xf]
  %v2764 = vld [vmem:[%s11 + $0x1ac] sm:$0xf]
  %v2765 = vld [vmem:[%s11 + $0x1b0] sm:$0xf]
  %v2766 = vld [vmem:[%s11 + $0x1b4] sm:$0xf]
  %v2767 = vld [vmem:[%s11 + $0x1b8] sm:$0xf]
  %v2768 = vld [vmem:[%s11 + $0x1bc] sm:$0xf]
  %v2769 = vld [vmem:[%s11 + $0x1c0] sm:$0xf]
  %v2770 = vld [vmem:[%s11 + $0x1c4] sm:$0xf]
  %v2771 = vld [vmem:[%s11 + $0x1c8] sm:$0xf]
  %v2772 = vld [vmem:[%s11 + $0x1cc] sm:$0xf]
  %v2773 = vld [vmem:[%s11 + $0x1d0] sm:$0xf]
  %v2774 = vld [vmem:[%s11 + $0x1d4] sm:$0xf]
  %v2775 = vld [vmem:[%s11 + $0x1d8] sm:$0xf]
  %v2776 = vld [vmem:[%s11 + $0x1dc] sm:$0xf]
  %v2777 = vld [vmem:[%s11 + $0x1e0] sm:$0xf]
  %v2778 = vld [vmem:[%s11 + $0x1e4] sm:$0xf]
  %v2779 = vld [vmem:[%s11 + $0x1e8] sm:$0xf]
  %v2780 = vld [vmem:[%s11 + $0x1ec] sm:$0xf]
  %v2781 = vld [vmem:[%s11 + $0x1f0] sm:$0xf]
  %v2782 = vld [vmem:[%s11 + $0x1f4] sm:$0xf]
  %v2783 = vld [vmem:[%s11 + $0x1f8] sm:$0xf]
  %v2784 = vld [vmem:[%s11 + $0x1fc] sm:$0xf]
  %v2785 = vld [vmem:[%s12] sm:$0x1]
  %v2787 = vperm.slane %v2785, 0
  %v2917 = vunpack.c.l.b16 %v2657
  %v2918 = vunpack.c.l.b16 %v2658
  %v2919 = vunpack.c.l.b16 %v2659
  %v2920 = vunpack.c.l.b16 %v2660
  %v2921 = vunpack.c.l.b16 %v2661
  %v2922 = vunpack.c.l.b16 %v2662
  %v2923 = vunpack.c.l.b16 %v2663
  %v2924 = vunpack.c.l.b16 %v2664
  %v2925 = vunpack.c.l.b16 %v2665
  %v2926 = vunpack.c.l.b16 %v2666
  %v2927 = vunpack.c.l.b16 %v2667
  %v2928 = vunpack.c.l.b16 %v2668
  %v2929 = vunpack.c.l.b16 %v2669
  %v2930 = vunpack.c.l.b16 %v2670
  %v2931 = vunpack.c.l.b16 %v2671
  %v2932 = vunpack.c.l.b16 %v2672
  %v2933 = vunpack.c.l.b16 %v2673
  %v2934 = vunpack.c.l.b16 %v2674
  %v2935 = vunpack.c.l.b16 %v2675
  %v2936 = vunpack.c.l.b16 %v2676
  %v2937 = vunpack.c.l.b16 %v2677
  %v2938 = vunpack.c.l.b16 %v2678
  %v2939 = vunpack.c.l.b16 %v2679
  %v2940 = vunpack.c.l.b16 %v2680
  %v2941 = vunpack.c.l.b16 %v2681
  %v2942 = vunpack.c.l.b16 %v2682
  %v2943 = vunpack.c.l.b16 %v2683
  %v2944 = vunpack.c.l.b16 %v2684
  %v2945 = vunpack.c.l.b16 %v2685
  %v2946 = vunpack.c.l.b16 %v2686
  %v2947 = vunpack.c.l.b16 %v2687
  %v2948 = vunpack.c.l.b16 %v2688
  %v2949 = vunpack.c.l.b16 %v2689
  %v2950 = vunpack.c.l.b16 %v2690
  %v2951 = vunpack.c.l.b16 %v2691
  %v2952 = vunpack.c.l.b16 %v2692
  %v2953 = vunpack.c.l.b16 %v2693
  %v2954 = vunpack.c.l.b16 %v2694
  %v2955 = vunpack.c.l.b16 %v2695
  %v2956 = vunpack.c.l.b16 %v2696
  %v2957 = vunpack.c.l.b16 %v2697
  %v2958 = vunpack.c.l.b16 %v2698
  %v2959 = vunpack.c.l.b16 %v2699
  %v2960 = vunpack.c.l.b16 %v2700
  %v2961 = vunpack.c.l.b16 %v2701
  %v2962 = vunpack.c.l.b16 %v2702
  %v2963 = vunpack.c.l.b16 %v2703
  %v2964 = vunpack.c.l.b16 %v2704
  %v2965 = vunpack.c.l.b16 %v2705
  %v2966 = vunpack.c.l.b16 %v2706
  %v2967 = vunpack.c.l.b16 %v2707
  %v2968 = vunpack.c.l.b16 %v2708
  %v2969 = vunpack.c.l.b16 %v2709
  %v2970 = vunpack.c.l.b16 %v2710
  %v2971 = vunpack.c.l.b16 %v2711
  %v2972 = vunpack.c.l.b16 %v2712
  %v2973 = vunpack.c.l.b16 %v2713
  %v2974 = vunpack.c.l.b16 %v2714
  %v2975 = vunpack.c.l.b16 %v2715
  %v2976 = vunpack.c.l.b16 %v2716
  %v2977 = vunpack.c.l.b16 %v2717
  %v2978 = vunpack.c.l.b16 %v2718
  %v2979 = vunpack.c.l.b16 %v2719
  %v2980 = vunpack.c.l.b16 %v2720
  %v2981 = vunpack.c.l.b16 %v2721
  %v2982 = vunpack.c.l.b16 %v2722
  %v2983 = vunpack.c.l.b16 %v2723
  %v2984 = vunpack.c.l.b16 %v2724
  %v2985 = vunpack.c.l.b16 %v2725
  %v2986 = vunpack.c.l.b16 %v2726
  %v2987 = vunpack.c.l.b16 %v2727
  %v2988 = vunpack.c.l.b16 %v2728
  %v2989 = vunpack.c.l.b16 %v2729
  %v2990 = vunpack.c.l.b16 %v2730
  %v2991 = vunpack.c.l.b16 %v2731
  %v2992 = vunpack.c.l.b16 %v2732
  %v2993 = vunpack.c.l.b16 %v2733
  %v2994 = vunpack.c.l.b16 %v2734
  %v2995 = vunpack.c.l.b16 %v2735
  %v2996 = vunpack.c.l.b16 %v2736
  %v2997 = vunpack.c.l.b16 %v2737
  %v2998 = vunpack.c.l.b16 %v2738
  %v2999 = vunpack.c.l.b16 %v2739
  %v3000 = vunpack.c.l.b16 %v2740
  %v3001 = vunpack.c.l.b16 %v2741
  %v3002 = vunpack.c.l.b16 %v2742
  %v3003 = vunpack.c.l.b16 %v2743
  %v3004 = vunpack.c.l.b16 %v2744
  %v3005 = vunpack.c.l.b16 %v2745
  %v3006 = vunpack.c.l.b16 %v2746
  %v3007 = vunpack.c.l.b16 %v2747
  %v3008 = vunpack.c.l.b16 %v2748
  %v3009 = vunpack.c.l.b16 %v2749
  %v3010 = vunpack.c.l.b16 %v2750
  %v3011 = vunpack.c.l.b16 %v2751
  %v3012 = vunpack.c.l.b16 %v2752
  %v3013 = vunpack.c.l.b16 %v2753
  %v3014 = vunpack.c.l.b16 %v2754
  %v3015 = vunpack.c.l.b16 %v2755
  %v3016 = vunpack.c.l.b16 %v2756
  %v3017 = vunpack.c.l.b16 %v2757
  %v3018 = vunpack.c.l.b16 %v2758
  %v3019 = vunpack.c.l.b16 %v2759
  %v3020 = vunpack.c.l.b16 %v2760
  %v3021 = vunpack.c.l.b16 %v2761
  %v3022 = vunpack.c.l.b16 %v2762
  %v3023 = vunpack.c.l.b16 %v2763
  %v3024 = vunpack.c.l.b16 %v2764
  %v3025 = vunpack.c.l.b16 %v2765
  %v3026 = vunpack.c.l.b16 %v2766
  %v3027 = vunpack.c.l.b16 %v2767
  %v3028 = vunpack.c.l.b16 %v2768
  %v3029 = vunpack.c.l.b16 %v2769
  %v3030 = vunpack.c.l.b16 %v2770
  %v3031 = vunpack.c.l.b16 %v2771
  %v3032 = vunpack.c.l.b16 %v2772
  %v3033 = vunpack.c.l.b16 %v2773
  %v3034 = vunpack.c.l.b16 %v2774
  %v3035 = vunpack.c.l.b16 %v2775
  %v3036 = vunpack.c.l.b16 %v2776
  %v3037 = vunpack.c.l.b16 %v2777
  %v3038 = vunpack.c.l.b16 %v2778
  %v3039 = vunpack.c.l.b16 %v2779
  %v3040 = vunpack.c.l.b16 %v2780
  %v3041 = vunpack.c.l.b16 %v2781
  %v3042 = vunpack.c.l.b16 %v2782
  %v3043 = vunpack.c.l.b16 %v2783
  %v3044 = vunpack.c.l.b16 %v2784
  %v3045 = vpack.c.b16 %v2918, %v2917
  %v3046 = vpack.c.b16 %v2920, %v2919
  %v3047 = vpack.c.b16 %v2922, %v2921
  %v3048 = vpack.c.b16 %v2924, %v2923
  %v3049 = vpack.c.b16 %v2926, %v2925
  %v3050 = vpack.c.b16 %v2928, %v2927
  %v3051 = vpack.c.b16 %v2930, %v2929
  %v3052 = vpack.c.b16 %v2932, %v2931
  %v3053 = vpack.c.b16 %v2934, %v2933
  %v3054 = vpack.c.b16 %v2936, %v2935
  %v3055 = vpack.c.b16 %v2938, %v2937
  %v3056 = vpack.c.b16 %v2940, %v2939
  %v3057 = vpack.c.b16 %v2942, %v2941
  %v3058 = vpack.c.b16 %v2944, %v2943
  %v3059 = vpack.c.b16 %v2946, %v2945
  %v3060 = vpack.c.b16 %v2948, %v2947
  %v3061 = vpack.c.b16 %v2950, %v2949
  %v3062 = vpack.c.b16 %v2952, %v2951
  %v3063 = vpack.c.b16 %v2954, %v2953
  %v3064 = vpack.c.b16 %v2956, %v2955
  %v3065 = vpack.c.b16 %v2958, %v2957
  %v3066 = vpack.c.b16 %v2960, %v2959
  %v3067 = vpack.c.b16 %v2962, %v2961
  %v3068 = vpack.c.b16 %v2964, %v2963
  %v3069 = vpack.c.b16 %v2966, %v2965
  %v3070 = vpack.c.b16 %v2968, %v2967
  %v3071 = vpack.c.b16 %v2970, %v2969
  %v3072 = vpack.c.b16 %v2972, %v2971
  %v3073 = vpack.c.b16 %v2974, %v2973
  %v3074 = vpack.c.b16 %v2976, %v2975
  %v3075 = vpack.c.b16 %v2978, %v2977
  %v3076 = vpack.c.b16 %v2980, %v2979
  %v3077 = vpack.c.b16 %v2982, %v2981
  %v3078 = vpack.c.b16 %v2984, %v2983
  %v3079 = vpack.c.b16 %v2986, %v2985
  %v3080 = vpack.c.b16 %v2988, %v2987
  %v3081 = vpack.c.b16 %v2990, %v2989
  %v3082 = vpack.c.b16 %v2992, %v2991
  %v3083 = vpack.c.b16 %v2994, %v2993
  %v3084 = vpack.c.b16 %v2996, %v2995
  %v3085 = vpack.c.b16 %v2998, %v2997
  %v3086 = vpack.c.b16 %v3000, %v2999
  %v3087 = vpack.c.b16 %v3002, %v3001
  %v3088 = vpack.c.b16 %v3004, %v3003
  %v3089 = vpack.c.b16 %v3006, %v3005
  %v3090 = vpack.c.b16 %v3008, %v3007
  %v3091 = vpack.c.b16 %v3010, %v3009
  %v3092 = vpack.c.b16 %v3012, %v3011
  %v3093 = vpack.c.b16 %v3014, %v3013
  %v3094 = vpack.c.b16 %v3016, %v3015
  %v3095 = vpack.c.b16 %v3018, %v3017
  %v3096 = vpack.c.b16 %v3020, %v3019
  %v3097 = vpack.c.b16 %v3022, %v3021
  %v3098 = vpack.c.b16 %v3024, %v3023
  %v3099 = vpack.c.b16 %v3026, %v3025
  %v3100 = vpack.c.b16 %v3028, %v3027
  %v3101 = vpack.c.b16 %v3030, %v3029
  %v3102 = vpack.c.b16 %v3032, %v3031
  %v3103 = vpack.c.b16 %v3034, %v3033
  %v3104 = vpack.c.b16 %v3036, %v3035
  %v3105 = vpack.c.b16 %v3038, %v3037
  %v3106 = vpack.c.b16 %v3040, %v3039
  %v3107 = vpack.c.b16 %v3042, %v3041
  %v3108 = vpack.c.b16 %v3044, %v3043
  %3173 = vmatpush.bf16.msra.mxu0 %v3052
  %3174 = vmatpush.bf16.msra.mxu0 %v3051
  %3175 = vmatpush.bf16.msra.mxu0 %v3050
  %3176 = vmatpush.bf16.msra.mxu0 %v3049
  %3177 = vmatpush.bf16.msra.mxu0 %v3048
  %3178 = vmatpush.bf16.msra.mxu0 %v3047
  %3179 = vmatpush.bf16.msra.mxu0 %v3046
  %3180 = vmatpush.bf16.msra.mxu0 %v3045
  %3181 = vmatmul.bf16.gmra.mxu0 %v2649
  %v3182 = vpop.f32.mrf.mxu0
  %v3183 = vadd.f32 %v2787, %v3182
  %v3184 = vpop.f32.mrf.mxu0
  %3185 = vdwg.mxu0
  %3186 = vmatpush.bf16.msra.mxu0 %v3060
  %3187 = vmatpush.bf16.msra.mxu0 %v3059
  %3188 = vmatpush.bf16.msra.mxu0 %v3058
  %3189 = vmatpush.bf16.msra.mxu0 %v3057
  %3190 = vmatpush.bf16.msra.mxu0 %v3056
  %3191 = vmatpush.bf16.msra.mxu0 %v3055
  %3192 = vmatpush.bf16.msra.mxu0 %v3054
  %3193 = vmatpush.bf16.msra.mxu0 %v3053
  %3194 = vmatmul.bf16.gmra.mxu0 %v2650
  %v3195 = vpop.f32.mrf.mxu0
  %v3196 = vadd.f32 %v3183, %v3195
  %v3197 = vpop.f32.mrf.mxu0
  %3198 = vdwg.mxu0
  %3199 = vmatpush.bf16.msra.mxu0 %v3068
  %3200 = vmatpush.bf16.msra.mxu0 %v3067
  %3201 = vmatpush.bf16.msra.mxu0 %v3066
  %3202 = vmatpush.bf16.msra.mxu0 %v3065
  %3203 = vmatpush.bf16.msra.mxu0 %v3064
  %3204 = vmatpush.bf16.msra.mxu0 %v3063
  %3205 = vmatpush.bf16.msra.mxu0 %v3062
  %3206 = vmatpush.bf16.msra.mxu0 %v3061
  %3207 = vmatmul.bf16.gmra.mxu0 %v2651
  %v3208 = vpop.f32.mrf.mxu0
  %v3209 = vadd.f32 %v3196, %v3208
  %v3210 = vpop.f32.mrf.mxu0
  %3211 = vdwg.mxu0
  %3212 = vmatpush.bf16.msra.mxu0 %v3076
  %3213 = vmatpush.bf16.msra.mxu0 %v3075
  %3214 = vmatpush.bf16.msra.mxu0 %v3074
  %3215 = vmatpush.bf16.msra.mxu0 %v3073
  %3216 = vmatpush.bf16.msra.mxu0 %v3072
  %3217 = vmatpush.bf16.msra.mxu0 %v3071
  %3218 = vmatpush.bf16.msra.mxu0 %v3070
  %3219 = vmatpush.bf16.msra.mxu0 %v3069
  %3220 = vmatmul.bf16.gmra.mxu0 %v2652
  %v3221 = vpop.f32.mrf.mxu0
  %v3222 = vadd.f32 %v3209, %v3221
  %v3223 = vpop.f32.mrf.mxu0
  %3224 = vdwg.mxu0
  %3225 = vmatpush.bf16.msra.mxu0 %v3084
  %3226 = vmatpush.bf16.msra.mxu0 %v3083
  %3227 = vmatpush.bf16.msra.mxu0 %v3082
  %3228 = vmatpush.bf16.msra.mxu0 %v3081
  %3229 = vmatpush.bf16.msra.mxu0 %v3080
  %3230 = vmatpush.bf16.msra.mxu0 %v3079
  %3231 = vmatpush.bf16.msra.mxu0 %v3078
  %3232 = vmatpush.bf16.msra.mxu0 %v3077
  %3233 = vmatmul.bf16.gmra.mxu0 %v2653
  %v3234 = vpop.f32.mrf.mxu0
  %v3235 = vadd.f32 %v3222, %v3234
  %v3236 = vpop.f32.mrf.mxu0
  %3237 = vdwg.mxu0
  %3238 = vmatpush.bf16.msra.mxu0 %v3092
  %3239 = vmatpush.bf16.msra.mxu0 %v3091
  %3240 = vmatpush.bf16.msra.mxu0 %v3090
  %3241 = vmatpush.bf16.msra.mxu0 %v3089
  %3242 = vmatpush.bf16.msra.mxu0 %v3088
  %3243 = vmatpush.bf16.msra.mxu0 %v3087
  %3244 = vmatpush.bf16.msra.mxu0 %v3086
  %3245 = vmatpush.bf16.msra.mxu0 %v3085
  %3246 = vmatmul.bf16.gmra.mxu0 %v2654
  %v3247 = vpop.f32.mrf.mxu0
  %v3248 = vadd.f32 %v3235, %v3247
  %v3249 = vpop.f32.mrf.mxu0
  %3250 = vdwg.mxu0
  %3251 = vmatpush.bf16.msra.mxu0 %v3100
  %3252 = vmatpush.bf16.msra.mxu0 %v3099
  %3253 = vmatpush.bf16.msra.mxu0 %v3098
  %3254 = vmatpush.bf16.msra.mxu0 %v3097
  %3255 = vmatpush.bf16.msra.mxu0 %v3096
  %3256 = vmatpush.bf16.msra.mxu0 %v3095
  %3257 = vmatpush.bf16.msra.mxu0 %v3094
  %3258 = vmatpush.bf16.msra.mxu0 %v3093
  %3259 = vmatmul.bf16.gmra.mxu0 %v2655
  %v3260 = vpop.f32.mrf.mxu0
  %v3261 = vadd.f32 %v3248, %v3260
  %v3262 = vpop.f32.mrf.mxu0
  %3263 = vdwg.mxu0
  %3264 = vmatpush.bf16.msra.mxu0 %v3108
  %3265 = vmatpush.bf16.msra.mxu0 %v3107
  %3266 = vmatpush.bf16.msra.mxu0 %v3106
  %3267 = vmatpush.bf16.msra.mxu0 %v3105
  %3268 = vmatpush.bf16.msra.mxu0 %v3104
  %3269 = vmatpush.bf16.msra.mxu0 %v3103
  %3270 = vmatpush.bf16.msra.mxu0 %v3102
  %3271 = vmatpush.bf16.msra.mxu0 %v3101
  %3272 = vmatmul.bf16.gmra.mxu0 %v2656
  %v3273 = vpop.f32.mrf.mxu0
  %v3274 = vadd.f32 %v3261, %v3273
  %v3275 = vpop.f32.mrf.mxu0
  %3276 = vdwg.mxu0
  %v3277 = vmax.f32 %v3274, 0.0
  %v3278 = vpack.c.bf16 %v3277, %v3277
  %v3279 = vld [vmem:[%s13] sm:$0xf]
  %v3280 = vld [vmem:[%s13 + $0x4] sm:$0xf]
  %v3281 = vld [vmem:[%s13 + $0x8] sm:$0xf]
  %v3282 = vld [vmem:[%s13 + $0xc] sm:$0xf]
  %v3283 = vld [vmem:[%s13 + $0x10] sm:$0xf]
  %v3284 = vld [vmem:[%s13 + $0x14] sm:$0xf]
  %v3285 = vld [vmem:[%s13 + $0x18] sm:$0xf]
  %v3286 = vld [vmem:[%s13 + $0x1c] sm:$0xf]
  %v3287 = vld [vmem:[%s13 + $0x20] sm:$0xf]
  %v3288 = vld [vmem:[%s13 + $0x24] sm:$0xf]
  %v3289 = vld [vmem:[%s13 + $0x28] sm:$0xf]
  %v3290 = vld [vmem:[%s13 + $0x2c] sm:$0xf]
  %v3291 = vld [vmem:[%s13 + $0x30] sm:$0xf]
  %v3292 = vld [vmem:[%s13 + $0x34] sm:$0xf]
  %v3293 = vld [vmem:[%s13 + $0x38] sm:$0xf]
  %v3294 = vld [vmem:[%s13 + $0x3c] sm:$0xf]
  %v3295 = vld [vmem:[%s14] sm:$0x1]
  %v3297 = vperm.slane %v3295, 0
  %v3315 = vunpack.c.l.b16 %v3279
  %v3316 = vunpack.c.l.b16 %v3280
  %v3317 = vunpack.c.l.b16 %v3281
  %v3318 = vunpack.c.l.b16 %v3282
  %v3319 = vunpack.c.l.b16 %v3283
  %v3320 = vunpack.c.l.b16 %v3284
  %v3321 = vunpack.c.l.b16 %v3285
  %v3322 = vunpack.c.l.b16 %v3286
  %v3323 = vunpack.c.l.b16 %v3287
  %v3324 = vunpack.c.l.b16 %v3288
  %v3325 = vunpack.c.l.b16 %v3289
  %v3326 = vunpack.c.l.b16 %v3290
  %v3327 = vunpack.c.l.b16 %v3291
  %v3328 = vunpack.c.l.b16 %v3292
  %v3329 = vunpack.c.l.b16 %v3293
  %v3330 = vunpack.c.l.b16 %v3294
  %v3331 = vpack.c.b16 %v3316, %v3315
  %v3332 = vpack.c.b16 %v3318, %v3317
  %v3333 = vpack.c.b16 %v3320, %v3319
  %v3334 = vpack.c.b16 %v3322, %v3321
  %v3335 = vpack.c.b16 %v3324, %v3323
  %v3336 = vpack.c.b16 %v3326, %v3325
  %v3337 = vpack.c.b16 %v3328, %v3327
  %v3338 = vpack.c.b16 %v3330, %v3329
  %3347 = vmatpush.bf16.msra.mxu0 %v3338
  %3348 = vmatpush.bf16.msra.mxu0 %v3337
  %3349 = vmatpush.bf16.msra.mxu0 %v3336
  %3350 = vmatpush.bf16.msra.mxu0 %v3335
  %3351 = vmatpush.bf16.msra.mxu0 %v3334
  %3352 = vmatpush.bf16.msra.mxu0 %v3333
  %3353 = vmatpush.bf16.msra.mxu0 %v3332
  %3354 = vmatpush.bf16.msra.mxu0 %v3331
  %3355 = vmatmul.bf16.gmra.mxu0 %v3278
  %v3356 = vpop.f32.mrf.mxu0
  %v3357 = vadd.f32 %v3297, %v3356
  %v3358 = vpop.f32.mrf.mxu0
  %3359 = vdwg.mxu0
  %v3360 = vmul.f32 %v3357, 0.5
  %v3361 = vtanh.pop %v3360
  %v3362 = vadd.f32 %v3361, 1.0
  %v3363 = vmul.f32 %v3362, 0.5
  %3364 = vst [vmem:[%s15] sm:$0xff] %v3363
  // Predicated region
  $region62: #{gcn_model_forward.1} parent=0 // pred_check
    _
  $region63: #{gcn_model_forward.1} parent=0 // pred_check_branch
    %3366 = sbr.rel (0) target = $region65
  $region64: #{gcn_model_forward.1} parent=0 // pred_region
    _
  $region65: #{gcn_model_forward.1} parent=0 // pred_fallthru
    _
  // Predicated region
  $region66: #{gcn_model_forward.1} parent=0 // pred_check
    _
  $region67: #{gcn_model_forward.1} parent=0 // pred_check_branch
    %3368 = sbr.rel (0) target = $region69
  $region68: #{gcn_model_forward.1} parent=0 // pred_region
    _
  $region69: #{gcn_model_forward.1} parent=0 // pred_fallthru
    _

</llo_original>
